<compile_context>
chip_gen: v7x
topology: tpu7x:2x2x1
jax: 0.10.0
libtpu: 0.0.40
codegen_flags: <defaults>
</compile_context>

<pallas_src>
import jax
import jax.numpy as jnp
from jax import lax
from jax.experimental import pallas as pl
from jax.experimental.pallas import tpu as pltpu

KPAD = 128  # tag dimension padded to a full lane width inside the kernel


# ----------------------------------------------------------------------------
# Fused Pallas kernel
# ----------------------------------------------------------------------------
def decoder_kernel(x_ref, h0_ref, c0_ref,
                   wih0_ref, whh0_ref, b0_ref,
                   wih1_ref, whh1_ref, b1_ref,
                   wtag_ref, btag_ref,
                   y_ref, tag_ref, hn_ref, cn_ref):
    """ReLU + 2-layer LSTM (wavefront) + Linear + LogSoftmax(dim=1), all fused.

    x_ref    : (T*B, Din)     time-major-flattened raw input
    h0/c0    : (2, B, H)      initial states per layer
    wih0     : (Din, 4H)      layer-0 input weights  (transposed, [i,f,o,g] cols)
    whh0     : (H, 4H)        layer-0 hidden weights (transposed, [i,f,o,g] cols)
    b0       : (1, 4H)        layer-0 combined bias  (b_ih + b_hh, permuted)
    wih1     : (H, 4H)        layer-1 input weights  (transposed, permuted)
    whh1     : (H, 4H)        layer-1 hidden weights (transposed, permuted)
    b1       : (1, 4H)        layer-1 combined bias  (permuted)
    wtag     : (H, KPAD)      hidden2tag weight, zero-padded to 128 lanes
    btag     : (1, KPAD)      hidden2tag bias, zero-padded
    y_ref    : (T, B, H)      LSTM top-layer output (time-major)
    tag_ref  : (T, B, KPAD)   LogSoftmax over the sequence axis of padded logits
    hn/cn    : (2, B, H)      final states
    """
    T, B, H = y_ref.shape
    Kp = wtag_ref.shape[1]

    # ---- hoisted, loop-invariant loads / broadcasts ----
    whh0 = whh0_ref[...]                                        # (H, 4H)
    wih1 = wih1_ref[...]                                        # (H, 4H)
    whh1 = whh1_ref[...]                                        # (H, 4H)
    wtag = wtag_ref[...]                                        # (H, KPAD)
    b1 = jnp.broadcast_to(b1_ref[...], (B, 4 * H))
    btag = jnp.broadcast_to(btag_ref[...], (B, Kp))

    # ---- hoisted layer-0 input projection (ReLU + bias folded), all T ----
    xr = jnp.maximum(x_ref[...], 0.0)                           # F.relu(input)
    xp = (jnp.dot(xr, wih0_ref[...], preferred_element_type=jnp.float32)
          + b0_ref[...]).reshape(T, B, 4 * H)                   # (T, B, 4H)

    def combine(gates, c):
        # Gate order is [i, f, o, g]: one full-vreg sigmoid, contiguous slices,
        # tanh only on the contiguous tail.
        sig = jax.nn.sigmoid(gates)
        i = sig[:, 0:H]
        f = sig[:, H:2 * H]
        o = sig[:, 2 * H:3 * H]
        g = jnp.tanh(gates[:, 3 * H:4 * H])
        c_new = f * c + i * g
        h_new = o * jnp.tanh(c_new)
        return h_new, c_new

    def cell0(t, h, c):
        gates = xp[t] + jnp.dot(h, whh0, preferred_element_type=jnp.float32)
        return combine(gates, c)

    def cell1(x_in, h, c):
        # No lane-axis concat: x_in @ Wih1 depends only on the previous layer-0
        # state and pipelines off-chain; only h @ Whh1 stays on the chain.
        gates = (jnp.dot(x_in, wih1, preferred_element_type=jnp.float32)
                 + jnp.dot(h, whh1, preferred_element_type=jnp.float32) + b1)
        return combine(gates, c)

    def emit(t, h1):
        # Direct per-step stores: y slab + lane-dense (128-wide) logits slab.
        y_ref[t] = h1
        tag_ref[t] = jnp.dot(h1, wtag,
                             preferred_element_type=jnp.float32) + btag

    # ---- wavefront over time (fully unrolled: T is static & small) ----
    # Layer 1 processes step t-1 while layer 0 processes step t, so the two
    # layers' per-step matmuls are independent (critical path ~T+1 steps).
    # TODO(synk): nn.LSTM inter-layer dropout applies in training mode only;
    # eval-mode semantics (no dropout) are implemented here.
    h0l, c0l = h0_ref[0], c0_ref[0]
    h1l, c1l = h0_ref[1], c0_ref[1]

    h0l, c0l = cell0(0, h0l, c0l)                # prologue: layer 0, t = 0
    h0_prev = h0l
    for t in range(1, T):
        h0_new, c0_new = cell0(t, h0l, c0l)      # layer 0, step t
        h1l, c1l = cell1(h0_prev, h1l, c1l)      # layer 1, step t-1 (independent)
        emit(t - 1, h1l)
        h0l, c0l = h0_new, c0_new
        h0_prev = h0l
    h1l, c1l = cell1(h0_prev, h1l, c1l)          # epilogue: layer 1, t = T-1
    emit(T - 1, h1l)

    # ---- final states: plain per-row stores, no stacking ----
    hn_ref[0] = h0l
    hn_ref[1] = h1l
    cn_ref[0] = c0l
    cn_ref[1] = c1l

    # ---- LogSoftmax(dim=1): reduction over the SEQUENCE axis (axis 0 here) ----
    logits = tag_ref[...]                                       # (T, B, KPAD)
    m = jnp.max(logits, axis=0, keepdims=True)
    e = jnp.exp(logits - m)
    tag_ref[...] = logits - m - jnp.log(jnp.sum(e, axis=0, keepdims=True))


# ----------------------------------------------------------------------------
# Wrapper
# ----------------------------------------------------------------------------
@jax.jit
def decoder_rnn_forward(x, h0, c0, params):
    """Replicates DecoderRNN.forward(input, hidden) -> (output, output_tag, hidden)."""
    B, T, Din = x.shape
    H = params['w_hh_l0'].shape[1]
    K = params['w_tag'].shape[0]

    # Gate-column permutation: PyTorch order [i, f, g, o] -> kernel order [i, f, o, g].
    perm = jnp.concatenate([jnp.arange(0, H), jnp.arange(H, 2 * H),
                            jnp.arange(3 * H, 4 * H), jnp.arange(2 * H, 3 * H)])

    # Weight prep only (tiny XLA glue; no activation-sized ops before the kernel).
    wih0T = params['w_ih_l0'].T[:, perm]                        # (Din, 4H)
    whh0T = params['w_hh_l0'].T[:, perm]                        # (H, 4H)
    b0 = (params['b_ih_l0'] + params['b_hh_l0'])[perm].reshape(1, 4 * H)
    wih1T = params['w_ih_l1'].T[:, perm]                        # (H, 4H)
    whh1T = params['w_hh_l1'].T[:, perm]                        # (H, 4H)
    b1 = (params['b_ih_l1'] + params['b_hh_l1'])[perm].reshape(1, 4 * H)
    wtag = jnp.zeros((H, KPAD), jnp.float32).at[:, :K].set(params['w_tag'].T)
    btag = jnp.zeros((1, KPAD), jnp.float32).at[:, :K].set(
        params['b_tag'].reshape(1, K))

    # Time-major input for the recurrence (a ~4 KB XLA transpose, negligible).
    x_tm = jnp.transpose(x, (1, 0, 2)).reshape(T * B, Din)

    vmem = pl.BlockSpec(memory_space=pltpu.MemorySpace.VMEM)

    y_tm, tag_tm, hn, cn = pl.pallas_call(
        decoder_kernel,
        out_shape=(
            jax.ShapeDtypeStruct((T, B, H), jnp.float32),
            jax.ShapeDtypeStruct((T, B, KPAD), jnp.float32),
            jax.ShapeDtypeStruct((2, B, H), jnp.float32),
            jax.ShapeDtypeStruct((2, B, H), jnp.float32),
        ),
        in_specs=[vmem] * 11,
        out_specs=(vmem, vmem, vmem, vmem),
    )(x_tm, h0, c0, wih0T, whh0T, b0, wih1T, whh1T, b1, wtag, btag)

    # Tiny wrapper-side layout fixups (time-major -> batch-first, drop lane pad).
    output = jnp.transpose(y_tm, (1, 0, 2))                     # (B, T, H)
    output_tag = jnp.transpose(tag_tm, (1, 0, 2))[:, :, :K]     # (B, T, K)
    return output, output_tag, (hn, cn)


# ----------------------------------------------------------------------------
# Pure-JAX reference (for verification)
# ----------------------------------------------------------------------------
def reference_forward(x, h0, c0, params):
    H = params['w_hh_l0'].shape[1]
    y = jax.nn.relu(x)

    def run_layer(inp, h, c, wih, whh, bih, bhh):
        def step(carry, x_t):
            h, c = carry
            gates = x_t @ wih.T + h @ whh.T + bih + bhh
            i = jax.nn.sigmoid(gates[:, 0 * H:1 * H])
            f = jax.nn.sigmoid(gates[:, 1 * H:2 * H])
            g = jnp.tanh(gates[:, 2 * H:3 * H])
            o = jax.nn.sigmoid(gates[:, 3 * H:4 * H])
            c_new = f * c + i * g
            h_new = o * jnp.tanh(c_new)
            return (h_new, c_new), h_new

        (h_f, c_f), ys = lax.scan(step, (h, c), jnp.transpose(inp, (1, 0, 2)))
        return jnp.transpose(ys, (1, 0, 2)), h_f, c_f

    y0, h_l0, c_l0 = run_layer(y, h0[0], c0[0], params['w_ih_l0'],
                               params['w_hh_l0'], params['b_ih_l0'], params['b_hh_l0'])
    y1, h_l1, c_l1 = run_layer(y0, h0[1], c0[1], params['w_ih_l1'],
                               params['w_hh_l1'], params['b_ih_l1'], params['b_hh_l1'])

    logits = jnp.einsum('bth,kh->btk', y1, params['w_tag']) + params['b_tag']
    tag = jax.nn.log_softmax(logits, axis=1)        # LogSoftmax(dim=1) over SEQ axis
    hn = jnp.stack([h_l0, h_l1])
    cn = jnp.stack([c_l0, c_l1])
    return y1, tag, (hn, cn)


# ----------------------------------------------------------------------------
# Main
# ----------------------------------------------------------------------------
if __name__ == "__main__":
    # Shapes consistent with the module:
    #   embedding_dim=16 -> LSTM input = 2*16 = 32, hidden_dim=32,
    #   tags_num=7 -> tag_size=8, batch=4, seq=8
    B, T = 4, 8
    EMB = 16
    DIN = 2 * EMB
    H = 32
    TAG = 8

    key = jax.random.PRNGKey(0)
    keys = jax.random.split(key, 16)
    bound = 1.0 / jnp.sqrt(H)

    def u(k, shape):
        return jax.random.uniform(k, shape, jnp.float32, -bound, bound)

    params = {
        'w_ih_l0': u(keys[0], (4 * H, DIN)),
        'w_hh_l0': u(keys[1], (4 * H, H)),
        'b_ih_l0': u(keys[2], (4 * H,)),
        'b_hh_l0': u(keys[3], (4 * H,)),
        'w_ih_l1': u(keys[4], (4 * H, H)),
        'w_hh_l1': u(keys[5], (4 * H, H)),
        'b_ih_l1': u(keys[6], (4 * H,)),
        'b_hh_l1': u(keys[7], (4 * H,)),
        'w_tag':   u(keys[8], (TAG, H)),   # nn.Linear(hidden_dim, tag_size).weight
        'b_tag':   u(keys[9], (TAG,)),     # nn.Linear(...).bias
    }

    x = jax.random.normal(keys[10], (B, T, DIN), jnp.float32)
    h0 = jnp.zeros((2, B, H), jnp.float32)   # initHidden()
    c0 = jnp.zeros((2, B, H), jnp.float32)

    out, out_tag, (hn, cn) = decoder_rnn_forward(x, h0, c0, params)
    jax.block_until_ready((out, out_tag, hn, cn))

    # Verify against a pure-JAX reference.
    r_out, r_tag, (r_hn, r_cn) = reference_forward(x, h0, c0, params)
    assert jnp.allclose(out, r_out, atol=1e-4), "LSTM output mismatch"
    assert jnp.allclose(out_tag, r_tag, atol=1e-4), "tag output mismatch"
    assert jnp.allclose(hn, r_hn, atol=1e-4), "h_n mismatch"
    assert jnp.allclose(cn, r_cn, atol=1e-4), "c_n mismatch"

    print("KERNEL_OK")
</pallas_src>

<mosaic_0001>
module attributes {stable_mosaic.version = 11 : i64} {
  func.func @decoder_kernel(%arg0: memref<32x32xf32, #tpu.memory_space<vmem>>, %arg1: memref<2x4x32xf32, #tpu.memory_space<vmem>>, %arg2: memref<2x4x32xf32, #tpu.memory_space<vmem>>, %arg3: memref<32x128xf32, #tpu.memory_space<vmem>>, %arg4: memref<32x128xf32, #tpu.memory_space<vmem>>, %arg5: memref<1x128xf32, #tpu.memory_space<vmem>>, %arg6: memref<32x128xf32, #tpu.memory_space<vmem>>, %arg7: memref<32x128xf32, #tpu.memory_space<vmem>>, %arg8: memref<1x128xf32, #tpu.memory_space<vmem>>, %arg9: memref<32x128xf32, #tpu.memory_space<vmem>>, %arg10: memref<1x128xf32, #tpu.memory_space<vmem>>, %arg11: memref<8x4x32xf32, #tpu.memory_space<vmem>>, %arg12: memref<8x4x128xf32, #tpu.memory_space<vmem>>, %arg13: memref<2x4x32xf32, #tpu.memory_space<vmem>>, %arg14: memref<2x4x32xf32, #tpu.memory_space<vmem>>) attributes {dimension_semantics = [], scalar_prefetch = 0 : i64, scratch_operands = 0 : i64, tpu.core_type = #tpu.core_type<tc>} {
    %c0 = arith.constant 0 : index
    %c0_0 = arith.constant 0 : index
    %0 = vector.load %arg4[%c0, %c0_0] : memref<32x128xf32, #tpu.memory_space<vmem>>, vector<32x128xf32>
    %c0_1 = arith.constant 0 : index
    %c0_2 = arith.constant 0 : index
    %1 = vector.load %arg6[%c0_1, %c0_2] : memref<32x128xf32, #tpu.memory_space<vmem>>, vector<32x128xf32>
    %c0_3 = arith.constant 0 : index
    %c0_4 = arith.constant 0 : index
    %2 = vector.load %arg7[%c0_3, %c0_4] : memref<32x128xf32, #tpu.memory_space<vmem>>, vector<32x128xf32>
    %c0_5 = arith.constant 0 : index
    %c0_6 = arith.constant 0 : index
    %3 = vector.load %arg9[%c0_5, %c0_6] : memref<32x128xf32, #tpu.memory_space<vmem>>, vector<32x128xf32>
    %c0_7 = arith.constant 0 : index
    %c0_8 = arith.constant 0 : index
    %4 = vector.load %arg8[%c0_7, %c0_8] : memref<1x128xf32, #tpu.memory_space<vmem>>, vector<1x128xf32>
    %5 = vector.shape_cast %4 : vector<1x128xf32> to vector<1x128xf32>
    %6 = vector.broadcast %5 : vector<1x128xf32> to vector<4x128xf32>
    %c0_9 = arith.constant 0 : index
    %c0_10 = arith.constant 0 : index
    %7 = vector.load %arg10[%c0_9, %c0_10] : memref<1x128xf32, #tpu.memory_space<vmem>>, vector<1x128xf32>
    %8 = vector.shape_cast %7 : vector<1x128xf32> to vector<1x128xf32>
    %9 = vector.broadcast %8 : vector<1x128xf32> to vector<4x128xf32>
    %c0_11 = arith.constant 0 : index
    %c0_12 = arith.constant 0 : index
    %10 = vector.load %arg0[%c0_11, %c0_12] : memref<32x32xf32, #tpu.memory_space<vmem>>, vector<32x32xf32>
    %cst = arith.constant 0.000000e+00 : f32
    %11 = vector.broadcast %cst : f32 to vector<32x32xf32>
    %12 = arith.maximumf %10, %11 : vector<32x32xf32>
    %c0_13 = arith.constant 0 : index
    %c0_14 = arith.constant 0 : index
    %13 = vector.load %arg3[%c0_13, %c0_14] : memref<32x128xf32, #tpu.memory_space<vmem>>, vector<32x128xf32>
    %cst_15 = arith.constant dense<0.000000e+00> : vector<32x128xf32>
    %14 = tpu.matmul %12, %13, %cst_15 {dimension_numbers = #tpu.dot_dimension_numbers<[1], [0], [0], [1], [0, 0, 1, 1], [], []>} : vector<32x32xf32>, vector<32x128xf32>, vector<32x128xf32> -> vector<32x128xf32>
    %c0_16 = arith.constant 0 : index
    %c0_17 = arith.constant 0 : index
    %15 = vector.load %arg5[%c0_16, %c0_17] : memref<1x128xf32, #tpu.memory_space<vmem>>, vector<1x128xf32>
    %16 = vector.broadcast %15 : vector<1x128xf32> to vector<32x128xf32>
    %17 = arith.addf %14, %16 : vector<32x128xf32>
    %18 = vector.shape_cast %17 : vector<32x128xf32> to vector<8x4x128xf32>
    %c0_18 = arith.constant 0 : index
    %c0_19 = arith.constant 0 : index
    %c0_20 = arith.constant 0 : index
    %19 = vector.load %arg1[%c0_18, %c0_19, %c0_20] : memref<2x4x32xf32, #tpu.memory_space<vmem>>, vector<1x4x32xf32>
    %20 = vector.shape_cast %19 : vector<1x4x32xf32> to vector<4x32xf32>
    %c0_21 = arith.constant 0 : index
    %c0_22 = arith.constant 0 : index
    %c0_23 = arith.constant 0 : index
    %21 = vector.load %arg2[%c0_21, %c0_22, %c0_23] : memref<2x4x32xf32, #tpu.memory_space<vmem>>, vector<1x4x32xf32>
    %22 = vector.shape_cast %21 : vector<1x4x32xf32> to vector<4x32xf32>
    %c1 = arith.constant 1 : index
    %c0_24 = arith.constant 0 : index
    %c0_25 = arith.constant 0 : index
    %23 = vector.load %arg1[%c1, %c0_24, %c0_25] : memref<2x4x32xf32, #tpu.memory_space<vmem>>, vector<1x4x32xf32>
    %24 = vector.shape_cast %23 : vector<1x4x32xf32> to vector<4x32xf32>
    %c1_26 = arith.constant 1 : index
    %c0_27 = arith.constant 0 : index
    %c0_28 = arith.constant 0 : index
    %25 = vector.load %arg2[%c1_26, %c0_27, %c0_28] : memref<2x4x32xf32, #tpu.memory_space<vmem>>, vector<1x4x32xf32>
    %26 = vector.shape_cast %25 : vector<1x4x32xf32> to vector<4x32xf32>
    %27 = vector.extract_strided_slice %18 {offsets = [0, 0, 0], sizes = [1, 4, 128], strides = [1, 1, 1]} : vector<8x4x128xf32> to vector<1x4x128xf32>
    %28 = vector.shape_cast %27 : vector<1x4x128xf32> to vector<4x128xf32>
    %cst_29 = arith.constant dense<0.000000e+00> : vector<4x128xf32>
    %29 = tpu.matmul %20, %0, %cst_29 {dimension_numbers = #tpu.dot_dimension_numbers<[1], [0], [0], [1], [0, 0, 1, 1], [], []>} : vector<4x32xf32>, vector<32x128xf32>, vector<4x128xf32> -> vector<4x128xf32>
    %30 = arith.addf %28, %29 : vector<4x128xf32>
    %31 = arith.negf %30 : vector<4x128xf32>
    %32 = math.exp %31 : vector<4x128xf32>
    %cst_30 = arith.constant 1.000000e+00 : f32
    %33 = vector.broadcast %cst_30 : f32 to vector<4x128xf32>
    %34 = arith.addf %33, %32 : vector<4x128xf32>
    %35 = arith.divf %33, %34 : vector<4x128xf32>
    %36 = vector.extract_strided_slice %35 {offsets = [0, 0], sizes = [4, 32], strides = [1, 1]} : vector<4x128xf32> to vector<4x32xf32>
    %37 = vector.extract_strided_slice %35 {offsets = [0, 32], sizes = [4, 32], strides = [1, 1]} : vector<4x128xf32> to vector<4x32xf32>
    %38 = vector.extract_strided_slice %35 {offsets = [0, 64], sizes = [4, 32], strides = [1, 1]} : vector<4x128xf32> to vector<4x32xf32>
    %39 = vector.extract_strided_slice %30 {offsets = [0, 96], sizes = [4, 32], strides = [1, 1]} : vector<4x128xf32> to vector<4x32xf32>
    %40 = math.tanh %39 : vector<4x32xf32>
    %41 = arith.mulf %37, %22 : vector<4x32xf32>
    %42 = arith.mulf %36, %40 : vector<4x32xf32>
    %43 = arith.addf %41, %42 : vector<4x32xf32>
    %44 = math.tanh %43 : vector<4x32xf32>
    %45 = arith.mulf %38, %44 : vector<4x32xf32>
    %46 = vector.extract_strided_slice %18 {offsets = [1, 0, 0], sizes = [1, 4, 128], strides = [1, 1, 1]} : vector<8x4x128xf32> to vector<1x4x128xf32>
    %47 = vector.shape_cast %46 : vector<1x4x128xf32> to vector<4x128xf32>
    %cst_31 = arith.constant dense<0.000000e+00> : vector<4x128xf32>
    %48 = tpu.matmul %45, %0, %cst_31 {dimension_numbers = #tpu.dot_dimension_numbers<[1], [0], [0], [1], [0, 0, 1, 1], [], []>} : vector<4x32xf32>, vector<32x128xf32>, vector<4x128xf32> -> vector<4x128xf32>
    %49 = arith.addf %47, %48 : vector<4x128xf32>
    %50 = arith.negf %49 : vector<4x128xf32>
    %51 = math.exp %50 : vector<4x128xf32>
    %cst_32 = arith.constant 1.000000e+00 : f32
    %52 = vector.broadcast %cst_32 : f32 to vector<4x128xf32>
    %53 = arith.addf %52, %51 : vector<4x128xf32>
    %54 = arith.divf %52, %53 : vector<4x128xf32>
    %55 = vector.extract_strided_slice %54 {offsets = [0, 0], sizes = [4, 32], strides = [1, 1]} : vector<4x128xf32> to vector<4x32xf32>
    %56 = vector.extract_strided_slice %54 {offsets = [0, 32], sizes = [4, 32], strides = [1, 1]} : vector<4x128xf32> to vector<4x32xf32>
    %57 = vector.extract_strided_slice %54 {offsets = [0, 64], sizes = [4, 32], strides = [1, 1]} : vector<4x128xf32> to vector<4x32xf32>
    %58 = vector.extract_strided_slice %49 {offsets = [0, 96], sizes = [4, 32], strides = [1, 1]} : vector<4x128xf32> to vector<4x32xf32>
    %59 = math.tanh %58 : vector<4x32xf32>
    %60 = arith.mulf %56, %43 : vector<4x32xf32>
    %61 = arith.mulf %55, %59 : vector<4x32xf32>
    %62 = arith.addf %60, %61 : vector<4x32xf32>
    %63 = math.tanh %62 : vector<4x32xf32>
    %64 = arith.mulf %57, %63 : vector<4x32xf32>
    %cst_33 = arith.constant dense<0.000000e+00> : vector<4x128xf32>
    %65 = tpu.matmul %45, %1, %cst_33 {dimension_numbers = #tpu.dot_dimension_numbers<[1], [0], [0], [1], [0, 0, 1, 1], [], []>} : vector<4x32xf32>, vector<32x128xf32>, vector<4x128xf32> -> vector<4x128xf32>
    %cst_34 = arith.constant dense<0.000000e+00> : vector<4x128xf32>
    %66 = tpu.matmul %24, %2, %cst_34 {dimension_numbers = #tpu.dot_dimension_numbers<[1], [0], [0], [1], [0, 0, 1, 1], [], []>} : vector<4x32xf32>, vector<32x128xf32>, vector<4x128xf32> -> vector<4x128xf32>
    %67 = arith.addf %65, %66 : vector<4x128xf32>
    %68 = arith.addf %67, %6 : vector<4x128xf32>
    %69 = arith.negf %68 : vector<4x128xf32>
    %70 = math.exp %69 : vector<4x128xf32>
    %cst_35 = arith.constant 1.000000e+00 : f32
    %71 = vector.broadcast %cst_35 : f32 to vector<4x128xf32>
    %72 = arith.addf %71, %70 : vector<4x128xf32>
    %73 = arith.divf %71, %72 : vector<4x128xf32>
    %74 = vector.extract_strided_slice %73 {offsets = [0, 0], sizes = [4, 32], strides = [1, 1]} : vector<4x128xf32> to vector<4x32xf32>
    %75 = vector.extract_strided_slice %73 {offsets = [0, 32], sizes = [4, 32], strides = [1, 1]} : vector<4x128xf32> to vector<4x32xf32>
    %76 = vector.extract_strided_slice %73 {offsets = [0, 64], sizes = [4, 32], strides = [1, 1]} : vector<4x128xf32> to vector<4x32xf32>
    %77 = vector.extract_strided_slice %68 {offsets = [0, 96], sizes = [4, 32], strides = [1, 1]} : vector<4x128xf32> to vector<4x32xf32>
    %78 = math.tanh %77 : vector<4x32xf32>
    %79 = arith.mulf %75, %26 : vector<4x32xf32>
    %80 = arith.mulf %74, %78 : vector<4x32xf32>
    %81 = arith.addf %79, %80 : vector<4x32xf32>
    %82 = math.tanh %81 : vector<4x32xf32>
    %83 = arith.mulf %76, %82 : vector<4x32xf32>
    %c0_36 = arith.constant 0 : index
    %c0_37 = arith.constant 0 : index
    %c0_38 = arith.constant 0 : index
    %84 = vector.load %arg11[%c0_36, %c0_37, %c0_38] : memref<8x4x32xf32, #tpu.memory_space<vmem>>, vector<1x4x32xf32>
    %85 = vector.shape_cast %84 : vector<1x4x32xf32> to vector<4x32xf32>
    %86 = vector.shape_cast %83 : vector<4x32xf32> to vector<1x4x32xf32>
    tpu.vector_store %arg11[%c0_36, %c0_37, %c0_38], %86 {strides = array<i32>} : memref<8x4x32xf32, #tpu.memory_space<vmem>>, vector<1x4x32xf32>,
    %cst_39 = arith.constant dense<0.000000e+00> : vector<4x128xf32>
    %87 = tpu.matmul %83, %3, %cst_39 {dimension_numbers = #tpu.dot_dimension_numbers<[1], [0], [0], [1], [0, 0, 1, 1], [], []>} : vector<4x32xf32>, vector<32x128xf32>, vector<4x128xf32> -> vector<4x128xf32>
    %88 = arith.addf %87, %9 : vector<4x128xf32>
    %c0_40 = arith.constant 0 : index
    %c0_41 = arith.constant 0 : index
    %c0_42 = arith.constant 0 : index
    %89 = vector.load %arg12[%c0_40, %c0_41, %c0_42] : memref<8x4x128xf32, #tpu.memory_space<vmem>>, vector<1x4x128xf32>
    %90 = vector.shape_cast %89 : vector<1x4x128xf32> to vector<4x128xf32>
    %91 = vector.shape_cast %88 : vector<4x128xf32> to vector<1x4x128xf32>
    tpu.vector_store %arg12[%c0_40, %c0_41, %c0_42], %91 {strides = array<i32>} : memref<8x4x128xf32, #tpu.memory_space<vmem>>, vector<1x4x128xf32>,
    %92 = vector.extract_strided_slice %18 {offsets = [2, 0, 0], sizes = [1, 4, 128], strides = [1, 1, 1]} : vector<8x4x128xf32> to vector<1x4x128xf32>
    %93 = vector.shape_cast %92 : vector<1x4x128xf32> to vector<4x128xf32>
    %cst_43 = arith.constant dense<0.000000e+00> : vector<4x128xf32>
    %94 = tpu.matmul %64, %0, %cst_43 {dimension_numbers = #tpu.dot_dimension_numbers<[1], [0], [0], [1], [0, 0, 1, 1], [], []>} : vector<4x32xf32>, vector<32x128xf32>, vector<4x128xf32> -> vector<4x128xf32>
    %95 = arith.addf %93, %94 : vector<4x128xf32>
    %96 = arith.negf %95 : vector<4x128xf32>
    %97 = math.exp %96 : vector<4x128xf32>
    %cst_44 = arith.constant 1.000000e+00 : f32
    %98 = vector.broadcast %cst_44 : f32 to vector<4x128xf32>
    %99 = arith.addf %98, %97 : vector<4x128xf32>
    %100 = arith.divf %98, %99 : vector<4x128xf32>
    %101 = vector.extract_strided_slice %100 {offsets = [0, 0], sizes = [4, 32], strides = [1, 1]} : vector<4x128xf32> to vector<4x32xf32>
    %102 = vector.extract_strided_slice %100 {offsets = [0, 32], sizes = [4, 32], strides = [1, 1]} : vector<4x128xf32> to vector<4x32xf32>
    %103 = vector.extract_strided_slice %100 {offsets = [0, 64], sizes = [4, 32], strides = [1, 1]} : vector<4x128xf32> to vector<4x32xf32>
    %104 = vector.extract_strided_slice %95 {offsets = [0, 96], sizes = [4, 32], strides = [1, 1]} : vector<4x128xf32> to vector<4x32xf32>
    %105 = math.tanh %104 : vector<4x32xf32>
    %106 = arith.mulf %102, %62 : vector<4x32xf32>
    %107 = arith.mulf %101, %105 : vector<4x32xf32>
    %108 = arith.addf %106, %107 : vector<4x32xf32>
    %109 = math.tanh %108 : vector<4x32xf32>
    %110 = arith.mulf %103, %109 : vector<4x32xf32>
    %cst_45 = arith.constant dense<0.000000e+00> : vector<4x128xf32>
    %111 = tpu.matmul %64, %1, %cst_45 {dimension_numbers = #tpu.dot_dimension_numbers<[1], [0], [0], [1], [0, 0, 1, 1], [], []>} : vector<4x32xf32>, vector<32x128xf32>, vector<4x128xf32> -> vector<4x128xf32>
    %cst_46 = arith.constant dense<0.000000e+00> : vector<4x128xf32>
    %112 = tpu.matmul %83, %2, %cst_46 {dimension_numbers = #tpu.dot_dimension_numbers<[1], [0], [0], [1], [0, 0, 1, 1], [], []>} : vector<4x32xf32>, vector<32x128xf32>, vector<4x128xf32> -> vector<4x128xf32>
    %113 = arith.addf %111, %112 : vector<4x128xf32>
    %114 = arith.addf %113, %6 : vector<4x128xf32>
    %115 = arith.negf %114 : vector<4x128xf32>
    %116 = math.exp %115 : vector<4x128xf32>
    %cst_47 = arith.constant 1.000000e+00 : f32
    %117 = vector.broadcast %cst_47 : f32 to vector<4x128xf32>
    %118 = arith.addf %117, %116 : vector<4x128xf32>
    %119 = arith.divf %117, %118 : vector<4x128xf32>
    %120 = vector.extract_strided_slice %119 {offsets = [0, 0], sizes = [4, 32], strides = [1, 1]} : vector<4x128xf32> to vector<4x32xf32>
    %121 = vector.extract_strided_slice %119 {offsets = [0, 32], sizes = [4, 32], strides = [1, 1]} : vector<4x128xf32> to vector<4x32xf32>
    %122 = vector.extract_strided_slice %119 {offsets = [0, 64], sizes = [4, 32], strides = [1, 1]} : vector<4x128xf32> to vector<4x32xf32>
    %123 = vector.extract_strided_slice %114 {offsets = [0, 96], sizes = [4, 32], strides = [1, 1]} : vector<4x128xf32> to vector<4x32xf32>
    %124 = math.tanh %123 : vector<4x32xf32>
    %125 = arith.mulf %121, %81 : vector<4x32xf32>
    %126 = arith.mulf %120, %124 : vector<4x32xf32>
    %127 = arith.addf %125, %126 : vector<4x32xf32>
    %128 = math.tanh %127 : vector<4x32xf32>
    %129 = arith.mulf %122, %128 : vector<4x32xf32>
    %c1_48 = arith.constant 1 : index
    %c0_49 = arith.constant 0 : index
    %c0_50 = arith.constant 0 : index
    %130 = vector.load %arg11[%c1_48, %c0_49, %c0_50] : memref<8x4x32xf32, #tpu.memory_space<vmem>>, vector<1x4x32xf32>
    %131 = vector.shape_cast %130 : vector<1x4x32xf32> to vector<4x32xf32>
    %132 = vector.shape_cast %129 : vector<4x32xf32> to vector<1x4x32xf32>
    tpu.vector_store %arg11[%c1_48, %c0_49, %c0_50], %132 {strides = array<i32>} : memref<8x4x32xf32, #tpu.memory_space<vmem>>, vector<1x4x32xf32>,
    %cst_51 = arith.constant dense<0.000000e+00> : vector<4x128xf32>
    %133 = tpu.matmul %129, %3, %cst_51 {dimension_numbers = #tpu.dot_dimension_numbers<[1], [0], [0], [1], [0, 0, 1, 1], [], []>} : vector<4x32xf32>, vector<32x128xf32>, vector<4x128xf32> -> vector<4x128xf32>
    %134 = arith.addf %133, %9 : vector<4x128xf32>
    %c1_52 = arith.constant 1 : index
    %c0_53 = arith.constant 0 : index
    %c0_54 = arith.constant 0 : index
    %135 = vector.load %arg12[%c1_52, %c0_53, %c0_54] : memref<8x4x128xf32, #tpu.memory_space<vmem>>, vector<1x4x128xf32>
    %136 = vector.shape_cast %135 : vector<1x4x128xf32> to vector<4x128xf32>
    %137 = vector.shape_cast %134 : vector<4x128xf32> to vector<1x4x128xf32>
    tpu.vector_store %arg12[%c1_52, %c0_53, %c0_54], %137 {strides = array<i32>} : memref<8x4x128xf32, #tpu.memory_space<vmem>>, vector<1x4x128xf32>,
    %138 = vector.extract_strided_slice %18 {offsets = [3, 0, 0], sizes = [1, 4, 128], strides = [1, 1, 1]} : vector<8x4x128xf32> to vector<1x4x128xf32>
    %139 = vector.shape_cast %138 : vector<1x4x128xf32> to vector<4x128xf32>
    %cst_55 = arith.constant dense<0.000000e+00> : vector<4x128xf32>
    %140 = tpu.matmul %110, %0, %cst_55 {dimension_numbers = #tpu.dot_dimension_numbers<[1], [0], [0], [1], [0, 0, 1, 1], [], []>} : vector<4x32xf32>, vector<32x128xf32>, vector<4x128xf32> -> vector<4x128xf32>
    %141 = arith.addf %139, %140 : vector<4x128xf32>
    %142 = arith.negf %141 : vector<4x128xf32>
    %143 = math.exp %142 : vector<4x128xf32>
    %cst_56 = arith.constant 1.000000e+00 : f32
    %144 = vector.broadcast %cst_56 : f32 to vector<4x128xf32>
    %145 = arith.addf %144, %143 : vector<4x128xf32>
    %146 = arith.divf %144, %145 : vector<4x128xf32>
    %147 = vector.extract_strided_slice %146 {offsets = [0, 0], sizes = [4, 32], strides = [1, 1]} : vector<4x128xf32> to vector<4x32xf32>
    %148 = vector.extract_strided_slice %146 {offsets = [0, 32], sizes = [4, 32], strides = [1, 1]} : vector<4x128xf32> to vector<4x32xf32>
    %149 = vector.extract_strided_slice %146 {offsets = [0, 64], sizes = [4, 32], strides = [1, 1]} : vector<4x128xf32> to vector<4x32xf32>
    %150 = vector.extract_strided_slice %141 {offsets = [0, 96], sizes = [4, 32], strides = [1, 1]} : vector<4x128xf32> to vector<4x32xf32>
    %151 = math.tanh %150 : vector<4x32xf32>
    %152 = arith.mulf %148, %108 : vector<4x32xf32>
    %153 = arith.mulf %147, %151 : vector<4x32xf32>
    %154 = arith.addf %152, %153 : vector<4x32xf32>
    %155 = math.tanh %154 : vector<4x32xf32>
    %156 = arith.mulf %149, %155 : vector<4x32xf32>
    %cst_57 = arith.constant dense<0.000000e+00> : vector<4x128xf32>
    %157 = tpu.matmul %110, %1, %cst_57 {dimension_numbers = #tpu.dot_dimension_numbers<[1], [0], [0], [1], [0, 0, 1, 1], [], []>} : vector<4x32xf32>, vector<32x128xf32>, vector<4x128xf32> -> vector<4x128xf32>
    %cst_58 = arith.constant dense<0.000000e+00> : vector<4x128xf32>
    %158 = tpu.matmul %129, %2, %cst_58 {dimension_numbers = #tpu.dot_dimension_numbers<[1], [0], [0], [1], [0, 0, 1, 1], [], []>} : vector<4x32xf32>, vector<32x128xf32>, vector<4x128xf32> -> vector<4x128xf32>
    %159 = arith.addf %157, %158 : vector<4x128xf32>
    %160 = arith.addf %159, %6 : vector<4x128xf32>
    %161 = arith.negf %160 : vector<4x128xf32>
    %162 = math.exp %161 : vector<4x128xf32>
    %cst_59 = arith.constant 1.000000e+00 : f32
    %163 = vector.broadcast %cst_59 : f32 to vector<4x128xf32>
    %164 = arith.addf %163, %162 : vector<4x128xf32>
    %165 = arith.divf %163, %164 : vector<4x128xf32>
    %166 = vector.extract_strided_slice %165 {offsets = [0, 0], sizes = [4, 32], strides = [1, 1]} : vector<4x128xf32> to vector<4x32xf32>
    %167 = vector.extract_strided_slice %165 {offsets = [0, 32], sizes = [4, 32], strides = [1, 1]} : vector<4x128xf32> to vector<4x32xf32>
    %168 = vector.extract_strided_slice %165 {offsets = [0, 64], sizes = [4, 32], strides = [1, 1]} : vector<4x128xf32> to vector<4x32xf32>
    %169 = vector.extract_strided_slice %160 {offsets = [0, 96], sizes = [4, 32], strides = [1, 1]} : vector<4x128xf32> to vector<4x32xf32>
    %170 = math.tanh %169 : vector<4x32xf32>
    %171 = arith.mulf %167, %127 : vector<4x32xf32>
    %172 = arith.mulf %166, %170 : vector<4x32xf32>
    %173 = arith.addf %171, %172 : vector<4x32xf32>
    %174 = math.tanh %173 : vector<4x32xf32>
    %175 = arith.mulf %168, %174 : vector<4x32xf32>
    %c2 = arith.constant 2 : index
    %c0_60 = arith.constant 0 : index
    %c0_61 = arith.constant 0 : index
    %176 = vector.load %arg11[%c2, %c0_60, %c0_61] : memref<8x4x32xf32, #tpu.memory_space<vmem>>, vector<1x4x32xf32>
    %177 = vector.shape_cast %176 : vector<1x4x32xf32> to vector<4x32xf32>
    %178 = vector.shape_cast %175 : vector<4x32xf32> to vector<1x4x32xf32>
    tpu.vector_store %arg11[%c2, %c0_60, %c0_61], %178 {strides = array<i32>} : memref<8x4x32xf32, #tpu.memory_space<vmem>>, vector<1x4x32xf32>,
    %cst_62 = arith.constant dense<0.000000e+00> : vector<4x128xf32>
    %179 = tpu.matmul %175, %3, %cst_62 {dimension_numbers = #tpu.dot_dimension_numbers<[1], [0], [0], [1], [0, 0, 1, 1], [], []>} : vector<4x32xf32>, vector<32x128xf32>, vector<4x128xf32> -> vector<4x128xf32>
    %180 = arith.addf %179, %9 : vector<4x128xf32>
    %c2_63 = arith.constant 2 : index
    %c0_64 = arith.constant 0 : index
    %c0_65 = arith.constant 0 : index
    %181 = vector.load %arg12[%c2_63, %c0_64, %c0_65] : memref<8x4x128xf32, #tpu.memory_space<vmem>>, vector<1x4x128xf32>
    %182 = vector.shape_cast %181 : vector<1x4x128xf32> to vector<4x128xf32>
    %183 = vector.shape_cast %180 : vector<4x128xf32> to vector<1x4x128xf32>
    tpu.vector_store %arg12[%c2_63, %c0_64, %c0_65], %183 {strides = array<i32>} : memref<8x4x128xf32, #tpu.memory_space<vmem>>, vector<1x4x128xf32>,
    %184 = vector.extract_strided_slice %18 {offsets = [4, 0, 0], sizes = [1, 4, 128], strides = [1, 1, 1]} : vector<8x4x128xf32> to vector<1x4x128xf32>
    %185 = vector.shape_cast %184 : vector<1x4x128xf32> to vector<4x128xf32>
    %cst_66 = arith.constant dense<0.000000e+00> : vector<4x128xf32>
    %186 = tpu.matmul %156, %0, %cst_66 {dimension_numbers = #tpu.dot_dimension_numbers<[1], [0], [0], [1], [0, 0, 1, 1], [], []>} : vector<4x32xf32>, vector<32x128xf32>, vector<4x128xf32> -> vector<4x128xf32>
    %187 = arith.addf %185, %186 : vector<4x128xf32>
    %188 = arith.negf %187 : vector<4x128xf32>
    %189 = math.exp %188 : vector<4x128xf32>
    %cst_67 = arith.constant 1.000000e+00 : f32
    %190 = vector.broadcast %cst_67 : f32 to vector<4x128xf32>
    %191 = arith.addf %190, %189 : vector<4x128xf32>
    %192 = arith.divf %190, %191 : vector<4x128xf32>
    %193 = vector.extract_strided_slice %192 {offsets = [0, 0], sizes = [4, 32], strides = [1, 1]} : vector<4x128xf32> to vector<4x32xf32>
    %194 = vector.extract_strided_slice %192 {offsets = [0, 32], sizes = [4, 32], strides = [1, 1]} : vector<4x128xf32> to vector<4x32xf32>
    %195 = vector.extract_strided_slice %192 {offsets = [0, 64], sizes = [4, 32], strides = [1, 1]} : vector<4x128xf32> to vector<4x32xf32>
    %196 = vector.extract_strided_slice %187 {offsets = [0, 96], sizes = [4, 32], strides = [1, 1]} : vector<4x128xf32> to vector<4x32xf32>
    %197 = math.tanh %196 : vector<4x32xf32>
    %198 = arith.mulf %194, %154 : vector<4x32xf32>
    %199 = arith.mulf %193, %197 : vector<4x32xf32>
    %200 = arith.addf %198, %199 : vector<4x32xf32>
    %201 = math.tanh %200 : vector<4x32xf32>
    %202 = arith.mulf %195, %201 : vector<4x32xf32>
    %cst_68 = arith.constant dense<0.000000e+00> : vector<4x128xf32>
    %203 = tpu.matmul %156, %1, %cst_68 {dimension_numbers = #tpu.dot_dimension_numbers<[1], [0], [0], [1], [0, 0, 1, 1], [], []>} : vector<4x32xf32>, vector<32x128xf32>, vector<4x128xf32> -> vector<4x128xf32>
    %cst_69 = arith.constant dense<0.000000e+00> : vector<4x128xf32>
    %204 = tpu.matmul %175, %2, %cst_69 {dimension_numbers = #tpu.dot_dimension_numbers<[1], [0], [0], [1], [0, 0, 1, 1], [], []>} : vector<4x32xf32>, vector<32x128xf32>, vector<4x128xf32> -> vector<4x128xf32>
    %205 = arith.addf %203, %204 : vector<4x128xf32>
    %206 = arith.addf %205, %6 : vector<4x128xf32>
    %207 = arith.negf %206 : vector<4x128xf32>
    %208 = math.exp %207 : vector<4x128xf32>
    %cst_70 = arith.constant 1.000000e+00 : f32
    %209 = vector.broadcast %cst_70 : f32 to vector<4x128xf32>
    %210 = arith.addf %209, %208 : vector<4x128xf32>
    %211 = arith.divf %209, %210 : vector<4x128xf32>
    %212 = vector.extract_strided_slice %211 {offsets = [0, 0], sizes = [4, 32], strides = [1, 1]} : vector<4x128xf32> to vector<4x32xf32>
    %213 = vector.extract_strided_slice %211 {offsets = [0, 32], sizes = [4, 32], strides = [1, 1]} : vector<4x128xf32> to vector<4x32xf32>
    %214 = vector.extract_strided_slice %211 {offsets = [0, 64], sizes = [4, 32], strides = [1, 1]} : vector<4x128xf32> to vector<4x32xf32>
    %215 = vector.extract_strided_slice %206 {offsets = [0, 96], sizes = [4, 32], strides = [1, 1]} : vector<4x128xf32> to vector<4x32xf32>
    %216 = math.tanh %215 : vector<4x32xf32>
    %217 = arith.mulf %213, %173 : vector<4x32xf32>
    %218 = arith.mulf %212, %216 : vector<4x32xf32>
    %219 = arith.addf %217, %218 : vector<4x32xf32>
    %220 = math.tanh %219 : vector<4x32xf32>
    %221 = arith.mulf %214, %220 : vector<4x32xf32>
    %c3 = arith.constant 3 : index
    %c0_71 = arith.constant 0 : index
    %c0_72 = arith.constant 0 : index
    %222 = vector.load %arg11[%c3, %c0_71, %c0_72] : memref<8x4x32xf32, #tpu.memory_space<vmem>>, vector<1x4x32xf32>
    %223 = vector.shape_cast %222 : vector<1x4x32xf32> to vector<4x32xf32>
    %224 = vector.shape_cast %221 : vector<4x32xf32> to vector<1x4x32xf32>
    tpu.vector_store %arg11[%c3, %c0_71, %c0_72], %224 {strides = array<i32>} : memref<8x4x32xf32, #tpu.memory_space<vmem>>, vector<1x4x32xf32>,
    %cst_73 = arith.constant dense<0.000000e+00> : vector<4x128xf32>
    %225 = tpu.matmul %221, %3, %cst_73 {dimension_numbers = #tpu.dot_dimension_numbers<[1], [0], [0], [1], [0, 0, 1, 1], [], []>} : vector<4x32xf32>, vector<32x128xf32>, vector<4x128xf32> -> vector<4x128xf32>
    %226 = arith.addf %225, %9 : vector<4x128xf32>
    %c3_74 = arith.constant 3 : index
    %c0_75 = arith.constant 0 : index
    %c0_76 = arith.constant 0 : index
    %227 = vector.load %arg12[%c3_74, %c0_75, %c0_76] : memref<8x4x128xf32, #tpu.memory_space<vmem>>, vector<1x4x128xf32>
    %228 = vector.shape_cast %227 : vector<1x4x128xf32> to vector<4x128xf32>
    %229 = vector.shape_cast %226 : vector<4x128xf32> to vector<1x4x128xf32>
    tpu.vector_store %arg12[%c3_74, %c0_75, %c0_76], %229 {strides = array<i32>} : memref<8x4x128xf32, #tpu.memory_space<vmem>>, vector<1x4x128xf32>,
    %230 = vector.extract_strided_slice %18 {offsets = [5, 0, 0], sizes = [1, 4, 128], strides = [1, 1, 1]} : vector<8x4x128xf32> to vector<1x4x128xf32>
    %231 = vector.shape_cast %230 : vector<1x4x128xf32> to vector<4x128xf32>
    %cst_77 = arith.constant dense<0.000000e+00> : vector<4x128xf32>
    %232 = tpu.matmul %202, %0, %cst_77 {dimension_numbers = #tpu.dot_dimension_numbers<[1], [0], [0], [1], [0, 0, 1, 1], [], []>} : vector<4x32xf32>, vector<32x128xf32>, vector<4x128xf32> -> vector<4x128xf32>
    %233 = arith.addf %231, %232 : vector<4x128xf32>
    %234 = arith.negf %233 : vector<4x128xf32>
    %235 = math.exp %234 : vector<4x128xf32>
    %cst_78 = arith.constant 1.000000e+00 : f32
    %236 = vector.broadcast %cst_78 : f32 to vector<4x128xf32>
    %237 = arith.addf %236, %235 : vector<4x128xf32>
    %238 = arith.divf %236, %237 : vector<4x128xf32>
    %239 = vector.extract_strided_slice %238 {offsets = [0, 0], sizes = [4, 32], strides = [1, 1]} : vector<4x128xf32> to vector<4x32xf32>
    %240 = vector.extract_strided_slice %238 {offsets = [0, 32], sizes = [4, 32], strides = [1, 1]} : vector<4x128xf32> to vector<4x32xf32>
    %241 = vector.extract_strided_slice %238 {offsets = [0, 64], sizes = [4, 32], strides = [1, 1]} : vector<4x128xf32> to vector<4x32xf32>
    %242 = vector.extract_strided_slice %233 {offsets = [0, 96], sizes = [4, 32], strides = [1, 1]} : vector<4x128xf32> to vector<4x32xf32>
    %243 = math.tanh %242 : vector<4x32xf32>
    %244 = arith.mulf %240, %200 : vector<4x32xf32>
    %245 = arith.mulf %239, %243 : vector<4x32xf32>
    %246 = arith.addf %244, %245 : vector<4x32xf32>
    %247 = math.tanh %246 : vector<4x32xf32>
    %248 = arith.mulf %241, %247 : vector<4x32xf32>
    %cst_79 = arith.constant dense<0.000000e+00> : vector<4x128xf32>
    %249 = tpu.matmul %202, %1, %cst_79 {dimension_numbers = #tpu.dot_dimension_numbers<[1], [0], [0], [1], [0, 0, 1, 1], [], []>} : vector<4x32xf32>, vector<32x128xf32>, vector<4x128xf32> -> vector<4x128xf32>
    %cst_80 = arith.constant dense<0.000000e+00> : vector<4x128xf32>
    %250 = tpu.matmul %221, %2, %cst_80 {dimension_numbers = #tpu.dot_dimension_numbers<[1], [0], [0], [1], [0, 0, 1, 1], [], []>} : vector<4x32xf32>, vector<32x128xf32>, vector<4x128xf32> -> vector<4x128xf32>
    %251 = arith.addf %249, %250 : vector<4x128xf32>
    %252 = arith.addf %251, %6 : vector<4x128xf32>
    %253 = arith.negf %252 : vector<4x128xf32>
    %254 = math.exp %253 : vector<4x128xf32>
    %cst_81 = arith.constant 1.000000e+00 : f32
    %255 = vector.broadcast %cst_81 : f32 to vector<4x128xf32>
    %256 = arith.addf %255, %254 : vector<4x128xf32>
    %257 = arith.divf %255, %256 : vector<4x128xf32>
    %258 = vector.extract_strided_slice %257 {offsets = [0, 0], sizes = [4, 32], strides = [1, 1]} : vector<4x128xf32> to vector<4x32xf32>
    %259 = vector.extract_strided_slice %257 {offsets = [0, 32], sizes = [4, 32], strides = [1, 1]} : vector<4x128xf32> to vector<4x32xf32>
    %260 = vector.extract_strided_slice %257 {offsets = [0, 64], sizes = [4, 32], strides = [1, 1]} : vector<4x128xf32> to vector<4x32xf32>
    %261 = vector.extract_strided_slice %252 {offsets = [0, 96], sizes = [4, 32], strides = [1, 1]} : vector<4x128xf32> to vector<4x32xf32>
    %262 = math.tanh %261 : vector<4x32xf32>
    %263 = arith.mulf %259, %219 : vector<4x32xf32>
    %264 = arith.mulf %258, %262 : vector<4x32xf32>
    %265 = arith.addf %263, %264 : vector<4x32xf32>
    %266 = math.tanh %265 : vector<4x32xf32>
    %267 = arith.mulf %260, %266 : vector<4x32xf32>
    %c4 = arith.constant 4 : index
    %c0_82 = arith.constant 0 : index
    %c0_83 = arith.constant 0 : index
    %268 = vector.load %arg11[%c4, %c0_82, %c0_83] : memref<8x4x32xf32, #tpu.memory_space<vmem>>, vector<1x4x32xf32>
    %269 = vector.shape_cast %268 : vector<1x4x32xf32> to vector<4x32xf32>
    %270 = vector.shape_cast %267 : vector<4x32xf32> to vector<1x4x32xf32>
    tpu.vector_store %arg11[%c4, %c0_82, %c0_83], %270 {strides = array<i32>} : memref<8x4x32xf32, #tpu.memory_space<vmem>>, vector<1x4x32xf32>,
    %cst_84 = arith.constant dense<0.000000e+00> : vector<4x128xf32>
    %271 = tpu.matmul %267, %3, %cst_84 {dimension_numbers = #tpu.dot_dimension_numbers<[1], [0], [0], [1], [0, 0, 1, 1], [], []>} : vector<4x32xf32>, vector<32x128xf32>, vector<4x128xf32> -> vector<4x128xf32>
    %272 = arith.addf %271, %9 : vector<4x128xf32>
    %c4_85 = arith.constant 4 : index
    %c0_86 = arith.constant 0 : index
    %c0_87 = arith.constant 0 : index
    %273 = vector.load %arg12[%c4_85, %c0_86, %c0_87] : memref<8x4x128xf32, #tpu.memory_space<vmem>>, vector<1x4x128xf32>
    %274 = vector.shape_cast %273 : vector<1x4x128xf32> to vector<4x128xf32>
    %275 = vector.shape_cast %272 : vector<4x128xf32> to vector<1x4x128xf32>
    tpu.vector_store %arg12[%c4_85, %c0_86, %c0_87], %275 {strides = array<i32>} : memref<8x4x128xf32, #tpu.memory_space<vmem>>, vector<1x4x128xf32>,
    %276 = vector.extract_strided_slice %18 {offsets = [6, 0, 0], sizes = [1, 4, 128], strides = [1, 1, 1]} : vector<8x4x128xf32> to vector<1x4x128xf32>
    %277 = vector.shape_cast %276 : vector<1x4x128xf32> to vector<4x128xf32>
    %cst_88 = arith.constant dense<0.000000e+00> : vector<4x128xf32>
    %278 = tpu.matmul %248, %0, %cst_88 {dimension_numbers = #tpu.dot_dimension_numbers<[1], [0], [0], [1], [0, 0, 1, 1], [], []>} : vector<4x32xf32>, vector<32x128xf32>, vector<4x128xf32> -> vector<4x128xf32>
    %279 = arith.addf %277, %278 : vector<4x128xf32>
    %280 = arith.negf %279 : vector<4x128xf32>
    %281 = math.exp %280 : vector<4x128xf32>
    %cst_89 = arith.constant 1.000000e+00 : f32
    %282 = vector.broadcast %cst_89 : f32 to vector<4x128xf32>
    %283 = arith.addf %282, %281 : vector<4x128xf32>
    %284 = arith.divf %282, %283 : vector<4x128xf32>
    %285 = vector.extract_strided_slice %284 {offsets = [0, 0], sizes = [4, 32], strides = [1, 1]} : vector<4x128xf32> to vector<4x32xf32>
    %286 = vector.extract_strided_slice %284 {offsets = [0, 32], sizes = [4, 32], strides = [1, 1]} : vector<4x128xf32> to vector<4x32xf32>
    %287 = vector.extract_strided_slice %284 {offsets = [0, 64], sizes = [4, 32], strides = [1, 1]} : vector<4x128xf32> to vector<4x32xf32>
    %288 = vector.extract_strided_slice %279 {offsets = [0, 96], sizes = [4, 32], strides = [1, 1]} : vector<4x128xf32> to vector<4x32xf32>
    %289 = math.tanh %288 : vector<4x32xf32>
    %290 = arith.mulf %286, %246 : vector<4x32xf32>
    %291 = arith.mulf %285, %289 : vector<4x32xf32>
    %292 = arith.addf %290, %291 : vector<4x32xf32>
    %293 = math.tanh %292 : vector<4x32xf32>
    %294 = arith.mulf %287, %293 : vector<4x32xf32>
    %cst_90 = arith.constant dense<0.000000e+00> : vector<4x128xf32>
    %295 = tpu.matmul %248, %1, %cst_90 {dimension_numbers = #tpu.dot_dimension_numbers<[1], [0], [0], [1], [0, 0, 1, 1], [], []>} : vector<4x32xf32>, vector<32x128xf32>, vector<4x128xf32> -> vector<4x128xf32>
    %cst_91 = arith.constant dense<0.000000e+00> : vector<4x128xf32>
    %296 = tpu.matmul %267, %2, %cst_91 {dimension_numbers = #tpu.dot_dimension_numbers<[1], [0], [0], [1], [0, 0, 1, 1], [], []>} : vector<4x32xf32>, vector<32x128xf32>, vector<4x128xf32> -> vector<4x128xf32>
    %297 = arith.addf %295, %296 : vector<4x128xf32>
    %298 = arith.addf %297, %6 : vector<4x128xf32>
    %299 = arith.negf %298 : vector<4x128xf32>
    %300 = math.exp %299 : vector<4x128xf32>
    %cst_92 = arith.constant 1.000000e+00 : f32
    %301 = vector.broadcast %cst_92 : f32 to vector<4x128xf32>
    %302 = arith.addf %301, %300 : vector<4x128xf32>
    %303 = arith.divf %301, %302 : vector<4x128xf32>
    %304 = vector.extract_strided_slice %303 {offsets = [0, 0], sizes = [4, 32], strides = [1, 1]} : vector<4x128xf32> to vector<4x32xf32>
    %305 = vector.extract_strided_slice %303 {offsets = [0, 32], sizes = [4, 32], strides = [1, 1]} : vector<4x128xf32> to vector<4x32xf32>
    %306 = vector.extract_strided_slice %303 {offsets = [0, 64], sizes = [4, 32], strides = [1, 1]} : vector<4x128xf32> to vector<4x32xf32>
    %307 = vector.extract_strided_slice %298 {offsets = [0, 96], sizes = [4, 32], strides = [1, 1]} : vector<4x128xf32> to vector<4x32xf32>
    %308 = math.tanh %307 : vector<4x32xf32>
    %309 = arith.mulf %305, %265 : vector<4x32xf32>
    %310 = arith.mulf %304, %308 : vector<4x32xf32>
    %311 = arith.addf %309, %310 : vector<4x32xf32>
    %312 = math.tanh %311 : vector<4x32xf32>
    %313 = arith.mulf %306, %312 : vector<4x32xf32>
    %c5 = arith.constant 5 : index
    %c0_93 = arith.constant 0 : index
    %c0_94 = arith.constant 0 : index
    %314 = vector.load %arg11[%c5, %c0_93, %c0_94] : memref<8x4x32xf32, #tpu.memory_space<vmem>>, vector<1x4x32xf32>
    %315 = vector.shape_cast %314 : vector<1x4x32xf32> to vector<4x32xf32>
    %316 = vector.shape_cast %313 : vector<4x32xf32> to vector<1x4x32xf32>
    tpu.vector_store %arg11[%c5, %c0_93, %c0_94], %316 {strides = array<i32>} : memref<8x4x32xf32, #tpu.memory_space<vmem>>, vector<1x4x32xf32>,
    %cst_95 = arith.constant dense<0.000000e+00> : vector<4x128xf32>
    %317 = tpu.matmul %313, %3, %cst_95 {dimension_numbers = #tpu.dot_dimension_numbers<[1], [0], [0], [1], [0, 0, 1, 1], [], []>} : vector<4x32xf32>, vector<32x128xf32>, vector<4x128xf32> -> vector<4x128xf32>
    %318 = arith.addf %317, %9 : vector<4x128xf32>
    %c5_96 = arith.constant 5 : index
    %c0_97 = arith.constant 0 : index
    %c0_98 = arith.constant 0 : index
    %319 = vector.load %arg12[%c5_96, %c0_97, %c0_98] : memref<8x4x128xf32, #tpu.memory_space<vmem>>, vector<1x4x128xf32>
    %320 = vector.shape_cast %319 : vector<1x4x128xf32> to vector<4x128xf32>
    %321 = vector.shape_cast %318 : vector<4x128xf32> to vector<1x4x128xf32>
    tpu.vector_store %arg12[%c5_96, %c0_97, %c0_98], %321 {strides = array<i32>} : memref<8x4x128xf32, #tpu.memory_space<vmem>>, vector<1x4x128xf32>,
    %322 = vector.extract_strided_slice %18 {offsets = [7, 0, 0], sizes = [1, 4, 128], strides = [1, 1, 1]} : vector<8x4x128xf32> to vector<1x4x128xf32>
    %323 = vector.shape_cast %322 : vector<1x4x128xf32> to vector<4x128xf32>
    %cst_99 = arith.constant dense<0.000000e+00> : vector<4x128xf32>
    %324 = tpu.matmul %294, %0, %cst_99 {dimension_numbers = #tpu.dot_dimension_numbers<[1], [0], [0], [1], [0, 0, 1, 1], [], []>} : vector<4x32xf32>, vector<32x128xf32>, vector<4x128xf32> -> vector<4x128xf32>
    %325 = arith.addf %323, %324 : vector<4x128xf32>
    %326 = arith.negf %325 : vector<4x128xf32>
    %327 = math.exp %326 : vector<4x128xf32>
    %cst_100 = arith.constant 1.000000e+00 : f32
    %328 = vector.broadcast %cst_100 : f32 to vector<4x128xf32>
    %329 = arith.addf %328, %327 : vector<4x128xf32>
    %330 = arith.divf %328, %329 : vector<4x128xf32>
    %331 = vector.extract_strided_slice %330 {offsets = [0, 0], sizes = [4, 32], strides = [1, 1]} : vector<4x128xf32> to vector<4x32xf32>
    %332 = vector.extract_strided_slice %330 {offsets = [0, 32], sizes = [4, 32], strides = [1, 1]} : vector<4x128xf32> to vector<4x32xf32>
    %333 = vector.extract_strided_slice %330 {offsets = [0, 64], sizes = [4, 32], strides = [1, 1]} : vector<4x128xf32> to vector<4x32xf32>
    %334 = vector.extract_strided_slice %325 {offsets = [0, 96], sizes = [4, 32], strides = [1, 1]} : vector<4x128xf32> to vector<4x32xf32>
    %335 = math.tanh %334 : vector<4x32xf32>
    %336 = arith.mulf %332, %292 : vector<4x32xf32>
    %337 = arith.mulf %331, %335 : vector<4x32xf32>
    %338 = arith.addf %336, %337 : vector<4x32xf32>
    %339 = math.tanh %338 : vector<4x32xf32>
    %340 = arith.mulf %333, %339 : vector<4x32xf32>
    %cst_101 = arith.constant dense<0.000000e+00> : vector<4x128xf32>
    %341 = tpu.matmul %294, %1, %cst_101 {dimension_numbers = #tpu.dot_dimension_numbers<[1], [0], [0], [1], [0, 0, 1, 1], [], []>} : vector<4x32xf32>, vector<32x128xf32>, vector<4x128xf32> -> vector<4x128xf32>
    %cst_102 = arith.constant dense<0.000000e+00> : vector<4x128xf32>
    %342 = tpu.matmul %313, %2, %cst_102 {dimension_numbers = #tpu.dot_dimension_numbers<[1], [0], [0], [1], [0, 0, 1, 1], [], []>} : vector<4x32xf32>, vector<32x128xf32>, vector<4x128xf32> -> vector<4x128xf32>
    %343 = arith.addf %341, %342 : vector<4x128xf32>
    %344 = arith.addf %343, %6 : vector<4x128xf32>
    %345 = arith.negf %344 : vector<4x128xf32>
    %346 = math.exp %345 : vector<4x128xf32>
    %cst_103 = arith.constant 1.000000e+00 : f32
    %347 = vector.broadcast %cst_103 : f32 to vector<4x128xf32>
    %348 = arith.addf %347, %346 : vector<4x128xf32>
    %349 = arith.divf %347, %348 : vector<4x128xf32>
    %350 = vector.extract_strided_slice %349 {offsets = [0, 0], sizes = [4, 32], strides = [1, 1]} : vector<4x128xf32> to vector<4x32xf32>
    %351 = vector.extract_strided_slice %349 {offsets = [0, 32], sizes = [4, 32], strides = [1, 1]} : vector<4x128xf32> to vector<4x32xf32>
    %352 = vector.extract_strided_slice %349 {offsets = [0, 64], sizes = [4, 32], strides = [1, 1]} : vector<4x128xf32> to vector<4x32xf32>
    %353 = vector.extract_strided_slice %344 {offsets = [0, 96], sizes = [4, 32], strides = [1, 1]} : vector<4x128xf32> to vector<4x32xf32>
    %354 = math.tanh %353 : vector<4x32xf32>
    %355 = arith.mulf %351, %311 : vector<4x32xf32>
    %356 = arith.mulf %350, %354 : vector<4x32xf32>
    %357 = arith.addf %355, %356 : vector<4x32xf32>
    %358 = math.tanh %357 : vector<4x32xf32>
    %359 = arith.mulf %352, %358 : vector<4x32xf32>
    %c6 = arith.constant 6 : index
    %c0_104 = arith.constant 0 : index
    %c0_105 = arith.constant 0 : index
    %360 = vector.load %arg11[%c6, %c0_104, %c0_105] : memref<8x4x32xf32, #tpu.memory_space<vmem>>, vector<1x4x32xf32>
    %361 = vector.shape_cast %360 : vector<1x4x32xf32> to vector<4x32xf32>
    %362 = vector.shape_cast %359 : vector<4x32xf32> to vector<1x4x32xf32>
    tpu.vector_store %arg11[%c6, %c0_104, %c0_105], %362 {strides = array<i32>} : memref<8x4x32xf32, #tpu.memory_space<vmem>>, vector<1x4x32xf32>,
    %cst_106 = arith.constant dense<0.000000e+00> : vector<4x128xf32>
    %363 = tpu.matmul %359, %3, %cst_106 {dimension_numbers = #tpu.dot_dimension_numbers<[1], [0], [0], [1], [0, 0, 1, 1], [], []>} : vector<4x32xf32>, vector<32x128xf32>, vector<4x128xf32> -> vector<4x128xf32>
    %364 = arith.addf %363, %9 : vector<4x128xf32>
    %c6_107 = arith.constant 6 : index
    %c0_108 = arith.constant 0 : index
    %c0_109 = arith.constant 0 : index
    %365 = vector.load %arg12[%c6_107, %c0_108, %c0_109] : memref<8x4x128xf32, #tpu.memory_space<vmem>>, vector<1x4x128xf32>
    %366 = vector.shape_cast %365 : vector<1x4x128xf32> to vector<4x128xf32>
    %367 = vector.shape_cast %364 : vector<4x128xf32> to vector<1x4x128xf32>
    tpu.vector_store %arg12[%c6_107, %c0_108, %c0_109], %367 {strides = array<i32>} : memref<8x4x128xf32, #tpu.memory_space<vmem>>, vector<1x4x128xf32>,
    %cst_110 = arith.constant dense<0.000000e+00> : vector<4x128xf32>
    %368 = tpu.matmul %340, %1, %cst_110 {dimension_numbers = #tpu.dot_dimension_numbers<[1], [0], [0], [1], [0, 0, 1, 1], [], []>} : vector<4x32xf32>, vector<32x128xf32>, vector<4x128xf32> -> vector<4x128xf32>
    %cst_111 = arith.constant dense<0.000000e+00> : vector<4x128xf32>
    %369 = tpu.matmul %359, %2, %cst_111 {dimension_numbers = #tpu.dot_dimension_numbers<[1], [0], [0], [1], [0, 0, 1, 1], [], []>} : vector<4x32xf32>, vector<32x128xf32>, vector<4x128xf32> -> vector<4x128xf32>
    %370 = arith.addf %368, %369 : vector<4x128xf32>
    %371 = arith.addf %370, %6 : vector<4x128xf32>
    %372 = arith.negf %371 : vector<4x128xf32>
    %373 = math.exp %372 : vector<4x128xf32>
    %cst_112 = arith.constant 1.000000e+00 : f32
    %374 = vector.broadcast %cst_112 : f32 to vector<4x128xf32>
    %375 = arith.addf %374, %373 : vector<4x128xf32>
    %376 = arith.divf %374, %375 : vector<4x128xf32>
    %377 = vector.extract_strided_slice %376 {offsets = [0, 0], sizes = [4, 32], strides = [1, 1]} : vector<4x128xf32> to vector<4x32xf32>
    %378 = vector.extract_strided_slice %376 {offsets = [0, 32], sizes = [4, 32], strides = [1, 1]} : vector<4x128xf32> to vector<4x32xf32>
    %379 = vector.extract_strided_slice %376 {offsets = [0, 64], sizes = [4, 32], strides = [1, 1]} : vector<4x128xf32> to vector<4x32xf32>
    %380 = vector.extract_strided_slice %371 {offsets = [0, 96], sizes = [4, 32], strides = [1, 1]} : vector<4x128xf32> to vector<4x32xf32>
    %381 = math.tanh %380 : vector<4x32xf32>
    %382 = arith.mulf %378, %357 : vector<4x32xf32>
    %383 = arith.mulf %377, %381 : vector<4x32xf32>
    %384 = arith.addf %382, %383 : vector<4x32xf32>
    %385 = math.tanh %384 : vector<4x32xf32>
    %386 = arith.mulf %379, %385 : vector<4x32xf32>
    %c7 = arith.constant 7 : index
    %c0_113 = arith.constant 0 : index
    %c0_114 = arith.constant 0 : index
    %387 = vector.load %arg11[%c7, %c0_113, %c0_114] : memref<8x4x32xf32, #tpu.memory_space<vmem>>, vector<1x4x32xf32>
    %388 = vector.shape_cast %387 : vector<1x4x32xf32> to vector<4x32xf32>
    %389 = vector.shape_cast %386 : vector<4x32xf32> to vector<1x4x32xf32>
    tpu.vector_store %arg11[%c7, %c0_113, %c0_114], %389 {strides = array<i32>} : memref<8x4x32xf32, #tpu.memory_space<vmem>>, vector<1x4x32xf32>,
    %cst_115 = arith.constant dense<0.000000e+00> : vector<4x128xf32>
    %390 = tpu.matmul %386, %3, %cst_115 {dimension_numbers = #tpu.dot_dimension_numbers<[1], [0], [0], [1], [0, 0, 1, 1], [], []>} : vector<4x32xf32>, vector<32x128xf32>, vector<4x128xf32> -> vector<4x128xf32>
    %391 = arith.addf %390, %9 : vector<4x128xf32>
    %c7_116 = arith.constant 7 : index
    %c0_117 = arith.constant 0 : index
    %c0_118 = arith.constant 0 : index
    %392 = vector.load %arg12[%c7_116, %c0_117, %c0_118] : memref<8x4x128xf32, #tpu.memory_space<vmem>>, vector<1x4x128xf32>
    %393 = vector.shape_cast %392 : vector<1x4x128xf32> to vector<4x128xf32>
    %394 = vector.shape_cast %391 : vector<4x128xf32> to vector<1x4x128xf32>
    tpu.vector_store %arg12[%c7_116, %c0_117, %c0_118], %394 {strides = array<i32>} : memref<8x4x128xf32, #tpu.memory_space<vmem>>, vector<1x4x128xf32>,
    %c0_119 = arith.constant 0 : index
    %c0_120 = arith.constant 0 : index
    %c0_121 = arith.constant 0 : index
    %395 = vector.load %arg13[%c0_119, %c0_120, %c0_121] : memref<2x4x32xf32, #tpu.memory_space<vmem>>, vector<1x4x32xf32>
    %396 = vector.shape_cast %395 : vector<1x4x32xf32> to vector<4x32xf32>
    %397 = vector.shape_cast %340 : vector<4x32xf32> to vector<1x4x32xf32>
    tpu.vector_store %arg13[%c0_119, %c0_120, %c0_121], %397 {strides = array<i32>} : memref<2x4x32xf32, #tpu.memory_space<vmem>>, vector<1x4x32xf32>,
    %c1_122 = arith.constant 1 : index
    %c0_123 = arith.constant 0 : index
    %c0_124 = arith.constant 0 : index
    %398 = vector.load %arg13[%c1_122, %c0_123, %c0_124] : memref<2x4x32xf32, #tpu.memory_space<vmem>>, vector<1x4x32xf32>
    %399 = vector.shape_cast %398 : vector<1x4x32xf32> to vector<4x32xf32>
    %400 = vector.shape_cast %386 : vector<4x32xf32> to vector<1x4x32xf32>
    tpu.vector_store %arg13[%c1_122, %c0_123, %c0_124], %400 {strides = array<i32>} : memref<2x4x32xf32, #tpu.memory_space<vmem>>, vector<1x4x32xf32>,
    %c0_125 = arith.constant 0 : index
    %c0_126 = arith.constant 0 : index
    %c0_127 = arith.constant 0 : index
    %401 = vector.load %arg14[%c0_125, %c0_126, %c0_127] : memref<2x4x32xf32, #tpu.memory_space<vmem>>, vector<1x4x32xf32>
    %402 = vector.shape_cast %401 : vector<1x4x32xf32> to vector<4x32xf32>
    %403 = vector.shape_cast %338 : vector<4x32xf32> to vector<1x4x32xf32>
    tpu.vector_store %arg14[%c0_125, %c0_126, %c0_127], %403 {strides = array<i32>} : memref<2x4x32xf32, #tpu.memory_space<vmem>>, vector<1x4x32xf32>,
    %c1_128 = arith.constant 1 : index
    %c0_129 = arith.constant 0 : index
    %c0_130 = arith.constant 0 : index
    %404 = vector.load %arg14[%c1_128, %c0_129, %c0_130] : memref<2x4x32xf32, #tpu.memory_space<vmem>>, vector<1x4x32xf32>
    %405 = vector.shape_cast %404 : vector<1x4x32xf32> to vector<4x32xf32>
    %406 = vector.shape_cast %384 : vector<4x32xf32> to vector<1x4x32xf32>
    tpu.vector_store %arg14[%c1_128, %c0_129, %c0_130], %406 {strides = array<i32>} : memref<2x4x32xf32, #tpu.memory_space<vmem>>, vector<1x4x32xf32>,
    %c0_131 = arith.constant 0 : index
    %c0_132 = arith.constant 0 : index
    %c0_133 = arith.constant 0 : index
    %407 = vector.load %arg12[%c0_131, %c0_132, %c0_133] : memref<8x4x128xf32, #tpu.memory_space<vmem>>, vector<8x4x128xf32>
    %cst_134 = arith.constant dense<0xFF800000> : vector<4x128xf32>
    %408 = vector.multi_reduction <maximumf>, %407, %cst_134 [0] : vector<8x4x128xf32> to vector<4x128xf32>
    %409 = vector.shape_cast %408 : vector<4x128xf32> to vector<1x4x128xf32>
    %410 = vector.broadcast %409 : vector<1x4x128xf32> to vector<8x4x128xf32>
    %411 = arith.subf %407, %410 : vector<8x4x128xf32>
    %412 = math.exp %411 : vector<8x4x128xf32>
    %413 = vector.broadcast %409 : vector<1x4x128xf32> to vector<8x4x128xf32>
    %414 = arith.subf %407, %413 : vector<8x4x128xf32>
    %cst_135 = arith.constant dense<0.000000e+00> : vector<4x128xf32>
    %415 = vector.multi_reduction <add>, %412, %cst_135 [0] : vector<8x4x128xf32> to vector<4x128xf32>
    %416 = vector.shape_cast %415 : vector<4x128xf32> to vector<1x4x128xf32>
    %417 = math.log %416 : vector<1x4x128xf32>
    %418 = vector.broadcast %417 : vector<1x4x128xf32> to vector<8x4x128xf32>
    %419 = arith.subf %414, %418 : vector<8x4x128xf32>
    %c0_136 = arith.constant 0 : index
    %c0_137 = arith.constant 0 : index
    %c0_138 = arith.constant 0 : index
    %420 = vector.load %arg12[%c0_136, %c0_137, %c0_138] : memref<8x4x128xf32, #tpu.memory_space<vmem>>, vector<8x4x128xf32>
    tpu.vector_store %arg12[%c0_136, %c0_137, %c0_138], %419 {strides = array<i32>} : memref<8x4x128xf32, #tpu.memory_space<vmem>>, vector<8x4x128xf32>,
    return
  }
}

</mosaic_0001>

<llo_original>
// kernel: decoder_rnn_forward.1
$region0: #{decoder_rnn_forward.1}
  #allocation0 [shape = 'u32[]', space=smem, size = 0x4, offset = 0x4, fixed_abs, tag = 'smem constant byte address 0x4 - core index']
  #allocation1 [shape = 'u32[144,128]{1,0:T(1,128)}', space=vmem, size = 0x12000, scoped, tag = 'internal scratch']
  %s0 = inlined_call_operand.vmem [shape: f32[32,32], index: 0, kind: input, shape index: {}]
  %s1 = inlined_call_operand.vmem [shape: f32[2,4,32], index: 1, kind: input, shape index: {}]
  %s2 = inlined_call_operand.vmem [shape: f32[2,4,32], index: 2, kind: input, shape index: {}]
  %s3 = inlined_call_operand.vmem [shape: f32[32,128], index: 3, kind: input, shape index: {}]
  %s4 = inlined_call_operand.vmem [shape: f32[32,128], index: 4, kind: input, shape index: {}]
  %s5 = inlined_call_operand.vmem [shape: f32[1,128], index: 5, kind: input, shape index: {}]
  %s6 = inlined_call_operand.vmem [shape: f32[32,128], index: 6, kind: input, shape index: {}]
  %s7 = inlined_call_operand.vmem [shape: f32[32,128], index: 7, kind: input, shape index: {}]
  %s8 = inlined_call_operand.vmem [shape: f32[1,128], index: 8, kind: input, shape index: {}]
  %s9 = inlined_call_operand.vmem [shape: f32[32,128], index: 9, kind: input, shape index: {}]
  %s10 = inlined_call_operand.vmem [shape: f32[1,128], index: 10, kind: input, shape index: {}]
  %s11 = inlined_call_operand.vmem [shape: f32[8,4,32], index: 11, kind: output, shape index: {0}]
  %s12 = inlined_call_operand.vmem [shape: f32[8,4,128], index: 12, kind: output, shape index: {1}]
  %s13 = inlined_call_operand.hbm [shape: f32[2,4,32], index: 13, kind: output, shape index: {2}]
  %s14 = inlined_call_operand.hbm [shape: f32[2,4,32], index: 14, kind: output, shape index: {3}]
  %15 = xla_tuple %s11, %s12, %s13, %s14
  %s16 = sld [smem:[#allocation0]]
  $region78: #{decoder_rnn_forward.1} parent=0
    _
  %s18 = ssub.s32 1, %s16
  %s19 = scalar_select 0, %s18, %s16
  $region1: #{decoder_rnn_forward.1} parent=0
    #allocation2 [shape = 'u8[4096]{0}', space=vmem, size = 0x1000, scoped, tag = 'output window, operand 2, single buffered']
    #allocation3 [shape = 's32[1]{0}', space=sflag, size = 0x4, scoped, tag = 'scoped memory for decoder_rnn_forward.1']
    #allocation4 [shape = 'u8[4096]{0}', space=vmem, size = 0x1000, scoped, tag = 'output window, operand 3, single buffered']
    #allocation5 [shape = 's32[1]{0}', space=sflag, size = 0x4, scoped, tag = 'scoped memory for decoder_rnn_forward.1']
    %20 = vsyncpa [#allocation3], 0
    %21 = vsyncpa [#allocation5], 0
    // Predicated region
    $region2: #{decoder_rnn_forward.1} parent=1 // pred_check
      _
    $region3: #{decoder_rnn_forward.1} parent=1 // pred_check_branch
      %23 = sbr.rel (0) target = $region5
    $region4: #{decoder_rnn_forward.1} parent=1 // pred_region
      _
    $region5: #{decoder_rnn_forward.1} parent=1 // pred_fallthru
      _
    // Predicated region
    $region6: #{decoder_rnn_forward.1} parent=1 // pred_check
      _
    $region7: #{decoder_rnn_forward.1} parent=1 // pred_check_branch
      %25 = sbr.rel (0) target = $region9
    $region8: #{decoder_rnn_forward.1} parent=1 // pred_region
      _
    $region9: #{decoder_rnn_forward.1} parent=1 // pred_fallthru
      _
    // Predicated region
    $region10: #{decoder_rnn_forward.1} parent=1 // pred_check
      _
    $region11: #{decoder_rnn_forward.1} parent=1 // pred_check_branch
      %27 = sbr.rel (0) target = $region13
    $region12: #{decoder_rnn_forward.1} parent=1 // pred_region
      _
    $region13: #{decoder_rnn_forward.1} parent=1 // pred_fallthru
      _
    // Predicated region
    $region14: #{decoder_rnn_forward.1} parent=1 // pred_check
      _
    $region15: #{decoder_rnn_forward.1} parent=1 // pred_check_branch
      %29 = sbr.rel (0) target = $region17
    $region16: #{decoder_rnn_forward.1} parent=1 // pred_region
      _
    $region17: #{decoder_rnn_forward.1} parent=1 // pred_fallthru
      _
    // Predicated region
    $region18: #{decoder_rnn_forward.1} parent=1 // pred_check
      _
    $region19: #{decoder_rnn_forward.1} parent=1 // pred_check_branch
      %31 = sbr.rel (0) target = $region21
    $region20: #{decoder_rnn_forward.1} parent=1 // pred_region
      _
    $region21: #{decoder_rnn_forward.1} parent=1 // pred_fallthru
      _
    // Predicated region
    $region22: #{decoder_rnn_forward.1} parent=1 // pred_check
      _
    $region23: #{decoder_rnn_forward.1} parent=1 // pred_check_branch
      %33 = sbr.rel (0) target = $region25
    $region24: #{decoder_rnn_forward.1} parent=1 // pred_region
      _
    $region25: #{decoder_rnn_forward.1} parent=1 // pred_fallthru
      _
    // Predicated region
    $region26: #{decoder_rnn_forward.1} parent=1 // pred_check
      _
    $region27: #{decoder_rnn_forward.1} parent=1 // pred_check_branch
      %35 = sbr.rel (0) target = $region29
    $region28: #{decoder_rnn_forward.1} parent=1 // pred_region
      _
    $region29: #{decoder_rnn_forward.1} parent=1 // pred_fallthru
      _
    // Predicated region
    $region30: #{decoder_rnn_forward.1} parent=1 // pred_check
      _
    $region31: #{decoder_rnn_forward.1} parent=1 // pred_check_branch
      %37 = sbr.rel (0) target = $region33
    $region32: #{decoder_rnn_forward.1} parent=1 // pred_region
      _
    $region33: #{decoder_rnn_forward.1} parent=1 // pred_fallthru
      _
    // Predicated region
    $region34: #{decoder_rnn_forward.1} parent=1 // pred_check
      _
    $region35: #{decoder_rnn_forward.1} parent=1 // pred_check_branch
      %39 = sbr.rel (0) target = $region37
    $region36: #{decoder_rnn_forward.1} parent=1 // pred_region
      _
    $region37: #{decoder_rnn_forward.1} parent=1 // pred_fallthru
      _
    // Predicated region
    $region38: #{decoder_rnn_forward.1} parent=1 // pred_check
      _
    $region39: #{decoder_rnn_forward.1} parent=1 // pred_check_branch
      %41 = sbr.rel (0) target = $region41
    $region40: #{decoder_rnn_forward.1} parent=1 // pred_region
      _
    $region41: #{decoder_rnn_forward.1} parent=1 // pred_fallthru
      _
    // Predicated region
    $region42: #{decoder_rnn_forward.1} parent=1 // pred_check
      _
    $region43: #{decoder_rnn_forward.1} parent=1 // pred_check_branch
      %43 = sbr.rel (0) target = $region45
    $region44: #{decoder_rnn_forward.1} parent=1 // pred_region
      _
    $region45: #{decoder_rnn_forward.1} parent=1 // pred_fallthru
      _
    %v44 = vld [vmem:[%s4] sm:$0xff]
    %v45 = vld [vmem:[%s4 + $0x8] sm:$0xff]
    %v46 = vld [vmem:[%s4 + $0x10] sm:$0xff]
    %v47 = vld [vmem:[%s4 + $0x18] sm:$0xff]
    %v48 = vld [vmem:[%s6] sm:$0xff]
    %v49 = vld [vmem:[%s6 + $0x8] sm:$0xff]
    %v50 = vld [vmem:[%s6 + $0x10] sm:$0xff]
    %v51 = vld [vmem:[%s6 + $0x18] sm:$0xff]
    %v52 = vld [vmem:[%s7] sm:$0xff]
    %v53 = vld [vmem:[%s7 + $0x8] sm:$0xff]
    %v54 = vld [vmem:[%s7 + $0x10] sm:$0xff]
    %v55 = vld [vmem:[%s7 + $0x18] sm:$0xff]
    %v56 = vld [vmem:[%s9] sm:$0xff]
    %v57 = vld [vmem:[%s9 + $0x8] sm:$0xff]
    %v58 = vld [vmem:[%s9 + $0x10] sm:$0xff]
    %v59 = vld [vmem:[%s9 + $0x18] sm:$0xff]
    %v60 = vld [vmem:[%s8] sm:$0x1]
    %v62 = vlaneseq
    %v63 = vshrl.u32 %v62, 7
    %v64 = vsub.s32 0, %v63
    %v65 = vrot.slane %v60, %v64
    %v67 = vld [vmem:[%s10] sm:$0x1]
    %v69 = vlaneseq
    %v70 = vshrl.u32 %v69, 7
    %v71 = vsub.s32 0, %v70
    %v72 = vrot.slane %v67, %v71
    %v74 = vld [vmem:[%s0] sm:$0xff]
    %v75 = vld [vmem:[%s0 + $0x8] sm:$0xff]
    %v76 = vld [vmem:[%s0 + $0x10] sm:$0xff]
    %v77 = vld [vmem:[%s0 + $0x18] sm:$0xff]
    %v78 = vmax.f32 %v74, 0.0
    %v79 = vmax.f32 %v75, 0.0
    %v80 = vmax.f32 %v76, 0.0
    %v81 = vmax.f32 %v77, 0.0
    %v82 = vld [vmem:[%s3] sm:$0xff]
    %v83 = vld [vmem:[%s3 + $0x8] sm:$0xff]
    %v84 = vld [vmem:[%s3 + $0x10] sm:$0xff]
    %v85 = vld [vmem:[%s3 + $0x18] sm:$0xff]
    %v86 = vld [vmem:[%s5] sm:$0x1]
    %v88 = vlaneseq
    %v89 = vshrl.u32 %v88, 7
    %v90 = vsub.s32 0, %v89
    %v91 = vrot.slane %v86, %v90
    %vm93 = vcmask 261120
    %v95 = vsel %vm93, %v78, 0
    %v98 = vsel %vm93, %v79, 0
    %v101 = vsel %vm93, %v80, 0
    %v104 = vsel %vm93, %v81, 0
    %106 = vmatprep.subr.mxu0 0.0
    %107 = vmatpush1.msra.mxu0 %v82
    %108 = vmatprep.subr.mxu0 0.0
    %109 = vmatpush1.msra.mxu0 %v83
    %110 = vmatprep.subr.mxu0 0.0
    %111 = vmatpush1.msra.mxu0 %v84
    %112 = vmatprep.subr.mxu0 0.0
    %113 = vmatpush1.msra.mxu0 %v85
    %114 = vmatprep.subr.mxu0 0.0
    %115 = vmatpush1.msra.mxu0 0.0
    %116 = vmatprep.subr.mxu0 0.0
    %117 = vmatpush1.msra.mxu0 0.0
    %118 = vmatprep.subr.mxu0 0.0
    %119 = vmatpush1.msra.mxu0 0.0
    %120 = vmatprep.subr.mxu0 0.0
    %121 = vmatpush1.msra.mxu0 0.0
    %122 = vmatprep.subr.mxu0 0.0
    %123 = vmatpush1.msra.mxu0 0.0
    %124 = vmatprep.subr.mxu0 0.0
    %125 = vmatpush1.msra.mxu0 0.0
    %126 = vmatprep.subr.mxu0 0.0
    %127 = vmatpush1.msra.mxu0 0.0
    %128 = vmatprep.subr.mxu0 0.0
    %129 = vmatpush1.msra.mxu0 0.0
    %130 = vmatprep.subr.mxu0 0.0
    %131 = vmatpush1.msra.mxu0 0.0
    %132 = vmatprep.subr.mxu0 0.0
    %133 = vmatpush1.msra.mxu0 0.0
    %134 = vmatprep.subr.mxu0 0.0
    %135 = vmatpush1.msra.mxu0 0.0
    %136 = vmatprep.subr.mxu0 0.0
    %137 = vmatpush1.msra.mxu0 0.0
    %138 = vmatprep.subr.mxu0 0.0
    %139 = vmatpush1.msra.mxu0 0.0
    %140 = vmatprep.subr.mxu0 0.0
    %141 = vmatpush1.msra.mxu0 0.0
    %142 = vmatprep.subr.mxu0 0.0
    %143 = vmatpush1.msra.mxu0 0.0
    %144 = vmatprep.subr.mxu0 0.0
    %145 = vmatpush1.msra.mxu0 0.0
    %146 = vmatprep.subr.mxu0 0.0
    %147 = vmatpush1.msra.mxu0 0.0
    %148 = vmatprep.subr.mxu0 0.0
    %149 = vmatpush1.msra.mxu0 0.0
    %150 = vmatprep.subr.mxu0 0.0
    %151 = vmatpush1.msra.mxu0 0.0
    %152 = vmatprep.subr.mxu0 0.0
    %153 = vmatpush1.msra.mxu0 0.0
    %154 = vmatprep.subr.mxu0 0.0
    %155 = vmatpush1.msra.mxu0 0.0
    %156 = vmatprep.subr.mxu0 0.0
    %157 = vmatpush1.msra.mxu0 0.0
    %158 = vmatprep.subr.mxu0 0.0
    %159 = vmatpush1.msra.mxu0 0.0
    %160 = vmatprep.subr.mxu0 0.0
    %161 = vmatpush1.msra.mxu0 0.0
    %162 = vmatprep.subr.mxu0 0.0
    %163 = vmatpush1.msra.mxu0 0.0
    %164 = vmatprep.subr.mxu0 0.0
    %165 = vmatpush1.msra.mxu0 0.0
    %166 = vmatprep.subr.mxu0 0.0
    %167 = vmatpush1.msra.mxu0 0.0
    %168 = vmatprep.subr.mxu0 0.0
    %169 = vmatpush1.msra.mxu0 0.0
    %170 = vmatprep.mubr.f32.mxu0 0.0
    %171 = vmatmul.mubr.f32.gmra.mrb[0].mxu0 %v95
    %v172 = vpop.f32.mrb[0].mxu0
    %v173 = vadd.f32 %v91, %v172
    %v174 = vpop.f32.mrb[0].mxu0
    %175 = vmatprep.mubr.f32.mxu0 0.0
    %176 = vmatmul.mubr.f32.gmra.mrb[0].mxu0 %v98
    %v177 = vpop.f32.mrb[0].mxu0
    %v178 = vadd.f32 %v91, %v177
    %v179 = vpop.f32.mrb[0].mxu0
    %180 = vmatprep.mubr.f32.mxu0 0.0
    %181 = vmatmul.mubr.f32.gmra.mrb[0].mxu0 %v101
    %v182 = vpop.f32.mrb[0].mxu0
    %v183 = vadd.f32 %v91, %v182
    %v184 = vpop.f32.mrb[0].mxu0
    %185 = vmatprep.mubr.f32.mxu0 0.0
    %186 = vmatmul.mubr.f32.gmra.mrb[0].mxu0 %v104
    %v187 = vpop.f32.mrb[0].mxu0
    %v188 = vadd.f32 %v91, %v187
    %v189 = vpop.f32.mrb[0].mxu0
    %190 = vdwg.mxu0
    %v195 = vcombine.high %v173, %v173
    %v196 = vcombine.high %v178, %v178
    %v197 = vcombine.high %v183, %v183
    %v198 = vcombine.high %v188, %v188
    %v203 = vld [vmem:[%s1] sm:$0xf]
    %v204 = vld [vmem:[%s2] sm:$0xf]
    %s205 = scalar_lea.vmem %s1, 4
    %v206 = vld [vmem:[%s205] sm:$0xf]
    %s207 = scalar_lea.vmem %s2, 4
    %v208 = vld [vmem:[%s207] sm:$0xf]
    %v210 = vsel %vm93, %v203, 0
    %212 = vmatprep.subr.mxu0 0.0
    %213 = vmatpush1.msra.mxu0 %v44
    %214 = vmatprep.subr.mxu0 0.0
    %215 = vmatpush1.msra.mxu0 %v45
    %216 = vmatprep.subr.mxu0 0.0
    %217 = vmatpush1.msra.mxu0 %v46
    %218 = vmatprep.subr.mxu0 0.0
    %219 = vmatpush1.msra.mxu0 %v47
    %220 = vmatprep.subr.mxu0 0.0
    %221 = vmatpush1.msra.mxu0 0.0
    %222 = vmatprep.subr.mxu0 0.0
    %223 = vmatpush1.msra.mxu0 0.0
    %224 = vmatprep.subr.mxu0 0.0
    %225 = vmatpush1.msra.mxu0 0.0
    %226 = vmatprep.subr.mxu0 0.0
    %227 = vmatpush1.msra.mxu0 0.0
    %228 = vmatprep.subr.mxu0 0.0
    %229 = vmatpush1.msra.mxu0 0.0
    %230 = vmatprep.subr.mxu0 0.0
    %231 = vmatpush1.msra.mxu0 0.0
    %232 = vmatprep.subr.mxu0 0.0
    %233 = vmatpush1.msra.mxu0 0.0
    %234 = vmatprep.subr.mxu0 0.0
    %235 = vmatpush1.msra.mxu0 0.0
    %236 = vmatprep.subr.mxu0 0.0
    %237 = vmatpush1.msra.mxu0 0.0
    %238 = vmatprep.subr.mxu0 0.0
    %239 = vmatpush1.msra.mxu0 0.0
    %240 = vmatprep.subr.mxu0 0.0
    %241 = vmatpush1.msra.mxu0 0.0
    %242 = vmatprep.subr.mxu0 0.0
    %243 = vmatpush1.msra.mxu0 0.0
    %244 = vmatprep.subr.mxu0 0.0
    %245 = vmatpush1.msra.mxu0 0.0
    %246 = vmatprep.subr.mxu0 0.0
    %247 = vmatpush1.msra.mxu0 0.0
    %248 = vmatprep.subr.mxu0 0.0
    %249 = vmatpush1.msra.mxu0 0.0
    %250 = vmatprep.subr.mxu0 0.0
    %251 = vmatpush1.msra.mxu0 0.0
    %252 = vmatprep.subr.mxu0 0.0
    %253 = vmatpush1.msra.mxu0 0.0
    %254 = vmatprep.subr.mxu0 0.0
    %255 = vmatpush1.msra.mxu0 0.0
    %256 = vmatprep.subr.mxu0 0.0
    %257 = vmatpush1.msra.mxu0 0.0
    %258 = vmatprep.subr.mxu0 0.0
    %259 = vmatpush1.msra.mxu0 0.0
    %260 = vmatprep.subr.mxu0 0.0
    %261 = vmatpush1.msra.mxu0 0.0
    %262 = vmatprep.subr.mxu0 0.0
    %263 = vmatpush1.msra.mxu0 0.0
    %264 = vmatprep.subr.mxu0 0.0
    %265 = vmatpush1.msra.mxu0 0.0
    %266 = vmatprep.subr.mxu0 0.0
    %267 = vmatpush1.msra.mxu0 0.0
    %268 = vmatprep.subr.mxu0 0.0
    %269 = vmatpush1.msra.mxu0 0.0
    %270 = vmatprep.subr.mxu0 0.0
    %271 = vmatpush1.msra.mxu0 0.0
    %272 = vmatprep.subr.mxu0 0.0
    %273 = vmatpush1.msra.mxu0 0.0
    %274 = vmatprep.subr.mxu0 0.0
    %275 = vmatpush1.msra.mxu0 0.0
    %276 = vmatprep.mubr.f32.mxu0 0.0
    %277 = vmatmul.mubr.f32.gmra.mrb[0].mxu0 %v210
    %v278 = vpop.f32.mrb[0].mxu0
    %v279 = vadd.f32 0.0, %v278
    %v280 = vpop.f32.mrb[0].mxu0
    %281 = vdwg.mxu0
    %v282 = vadd.f32 %v173, %v279
    %v283 = vxor.u32 %v282, 2147483648
    %v284 = vmul.f32 %v283, 1.442695
    %v285 = vpow.pop %v284
    %v286 = vadd.f32 %v285, 1.0
    %v287 = vrcp.pop %v286
    %v288 = vmul.f32 1.0, %v287
    %v289 = vtanh.pop %v282
    %291 = vrot.lane.b32.xlu0 %v204, 32
    %v292 = vpop.permute.xlu0 %291
    %v294 = vmul.f32 %v288, %v292
    %296 = vrot.lane.b32.xlu0 %v289, 32
    %v297 = vpop.permute.xlu0 %296
    %v299 = vmul.f32 %v288, %v297
    %301 = vrot.lane.b32.xlu0 %v299, 32
    %v302 = vpop.permute.xlu0 %301
    %v304 = vadd.f32 %v294, %v302
    %v305 = vtanh.pop %v304
    %307 = vrot.lane.b32.xlu0 %v305, 32
    %v308 = vpop.permute.xlu0 %307
    %v310 = vmul.f32 %v288, %v308
    %312 = vrot.lane.b32.xlu0 %v310, 64
    %v313 = vpop.permute.xlu0 %312
    %v314 = vsel %vm93, %v313, 0
    %316 = vmatprep.subr.mxu0 0.0
    %317 = vmatpush1.msra.mxu0 %v44
    %318 = vmatprep.subr.mxu0 0.0
    %319 = vmatpush1.msra.mxu0 %v45
    %320 = vmatprep.subr.mxu0 0.0
    %321 = vmatpush1.msra.mxu0 %v46
    %322 = vmatprep.subr.mxu0 0.0
    %323 = vmatpush1.msra.mxu0 %v47
    %324 = vmatprep.subr.mxu0 0.0
    %325 = vmatpush1.msra.mxu0 0.0
    %326 = vmatprep.subr.mxu0 0.0
    %327 = vmatpush1.msra.mxu0 0.0
    %328 = vmatprep.subr.mxu0 0.0
    %329 = vmatpush1.msra.mxu0 0.0
    %330 = vmatprep.subr.mxu0 0.0
    %331 = vmatpush1.msra.mxu0 0.0
    %332 = vmatprep.subr.mxu0 0.0
    %333 = vmatpush1.msra.mxu0 0.0
    %334 = vmatprep.subr.mxu0 0.0
    %335 = vmatpush1.msra.mxu0 0.0
    %336 = vmatprep.subr.mxu0 0.0
    %337 = vmatpush1.msra.mxu0 0.0
    %338 = vmatprep.subr.mxu0 0.0
    %339 = vmatpush1.msra.mxu0 0.0
    %340 = vmatprep.subr.mxu0 0.0
    %341 = vmatpush1.msra.mxu0 0.0
    %342 = vmatprep.subr.mxu0 0.0
    %343 = vmatpush1.msra.mxu0 0.0
    %344 = vmatprep.subr.mxu0 0.0
    %345 = vmatpush1.msra.mxu0 0.0
    %346 = vmatprep.subr.mxu0 0.0
    %347 = vmatpush1.msra.mxu0 0.0
    %348 = vmatprep.subr.mxu0 0.0
    %349 = vmatpush1.msra.mxu0 0.0
    %350 = vmatprep.subr.mxu0 0.0
    %351 = vmatpush1.msra.mxu0 0.0
    %352 = vmatprep.subr.mxu0 0.0
    %353 = vmatpush1.msra.mxu0 0.0
    %354 = vmatprep.subr.mxu0 0.0
    %355 = vmatpush1.msra.mxu0 0.0
    %356 = vmatprep.subr.mxu0 0.0
    %357 = vmatpush1.msra.mxu0 0.0
    %358 = vmatprep.subr.mxu0 0.0
    %359 = vmatpush1.msra.mxu0 0.0
    %360 = vmatprep.subr.mxu0 0.0
    %361 = vmatpush1.msra.mxu0 0.0
    %362 = vmatprep.subr.mxu0 0.0
    %363 = vmatpush1.msra.mxu0 0.0
    %364 = vmatprep.subr.mxu0 0.0
    %365 = vmatpush1.msra.mxu0 0.0
    %366 = vmatprep.subr.mxu0 0.0
    %367 = vmatpush1.msra.mxu0 0.0
    %368 = vmatprep.subr.mxu0 0.0
    %369 = vmatpush1.msra.mxu0 0.0
    %370 = vmatprep.subr.mxu0 0.0
    %371 = vmatpush1.msra.mxu0 0.0
    %372 = vmatprep.subr.mxu0 0.0
    %373 = vmatpush1.msra.mxu0 0.0
    %374 = vmatprep.subr.mxu0 0.0
    %375 = vmatpush1.msra.mxu0 0.0
    %376 = vmatprep.subr.mxu0 0.0
    %377 = vmatpush1.msra.mxu0 0.0
    %378 = vmatprep.subr.mxu0 0.0
    %379 = vmatpush1.msra.mxu0 0.0
    %380 = vmatprep.mubr.f32.mxu0 0.0
    %381 = vmatmul.mubr.f32.gmra.mrb[0].mxu0 %v314
    %v382 = vpop.f32.mrb[0].mxu0
    %v383 = vadd.f32 0.0, %v382
    %v384 = vpop.f32.mrb[0].mxu0
    %385 = vdwg.mxu0
    %v386 = vadd.f32 %v195, %v383
    %v387 = vxor.u32 %v386, 2147483648
    %v388 = vmul.f32 %v387, 1.442695
    %v389 = vpow.pop %v388
    %v390 = vadd.f32 %v389, 1.0
    %v391 = vrcp.pop %v390
    %v392 = vmul.f32 1.0, %v391
    %v393 = vtanh.pop %v386
    %v394 = vmul.f32 %v392, %v304
    %396 = vrot.lane.b32.xlu0 %v393, 32
    %v397 = vpop.permute.xlu0 %396
    %v399 = vmul.f32 %v392, %v397
    %401 = vrot.lane.b32.xlu0 %v399, 32
    %v402 = vpop.permute.xlu0 %401
    %v404 = vadd.f32 %v394, %v402
    %v405 = vtanh.pop %v404
    %407 = vrot.lane.b32.xlu0 %v405, 32
    %v408 = vpop.permute.xlu0 %407
    %v410 = vmul.f32 %v392, %v408
    %v412 = vsel %vm93, %v206, 0
    %414 = vmatprep.subr.mxu0 0.0
    %415 = vmatpush1.msra.mxu0 %v52
    %416 = vmatprep.subr.mxu0 0.0
    %417 = vmatpush1.msra.mxu0 %v53
    %418 = vmatprep.subr.mxu0 0.0
    %419 = vmatpush1.msra.mxu0 %v54
    %420 = vmatprep.subr.mxu0 0.0
    %421 = vmatpush1.msra.mxu0 %v55
    %422 = vmatprep.subr.mxu0 0.0
    %423 = vmatpush1.msra.mxu0 0.0
    %424 = vmatprep.subr.mxu0 0.0
    %425 = vmatpush1.msra.mxu0 0.0
    %426 = vmatprep.subr.mxu0 0.0
    %427 = vmatpush1.msra.mxu0 0.0
    %428 = vmatprep.subr.mxu0 0.0
    %429 = vmatpush1.msra.mxu0 0.0
    %430 = vmatprep.subr.mxu0 0.0
    %431 = vmatpush1.msra.mxu0 0.0
    %432 = vmatprep.subr.mxu0 0.0
    %433 = vmatpush1.msra.mxu0 0.0
    %434 = vmatprep.subr.mxu0 0.0
    %435 = vmatpush1.msra.mxu0 0.0
    %436 = vmatprep.subr.mxu0 0.0
    %437 = vmatpush1.msra.mxu0 0.0
    %438 = vmatprep.subr.mxu0 0.0
    %439 = vmatpush1.msra.mxu0 0.0
    %440 = vmatprep.subr.mxu0 0.0
    %441 = vmatpush1.msra.mxu0 0.0
    %442 = vmatprep.subr.mxu0 0.0
    %443 = vmatpush1.msra.mxu0 0.0
    %444 = vmatprep.subr.mxu0 0.0
    %445 = vmatpush1.msra.mxu0 0.0
    %446 = vmatprep.subr.mxu0 0.0
    %447 = vmatpush1.msra.mxu0 0.0
    %448 = vmatprep.subr.mxu0 0.0
    %449 = vmatpush1.msra.mxu0 0.0
    %450 = vmatprep.subr.mxu0 0.0
    %451 = vmatpush1.msra.mxu0 0.0
    %452 = vmatprep.subr.mxu0 0.0
    %453 = vmatpush1.msra.mxu0 0.0
    %454 = vmatprep.subr.mxu0 0.0
    %455 = vmatpush1.msra.mxu0 0.0
    %456 = vmatprep.subr.mxu0 0.0
    %457 = vmatpush1.msra.mxu0 0.0
    %458 = vmatprep.subr.mxu0 0.0
    %459 = vmatpush1.msra.mxu0 0.0
    %460 = vmatprep.subr.mxu0 0.0
    %461 = vmatpush1.msra.mxu0 0.0
    %462 = vmatprep.subr.mxu0 0.0
    %463 = vmatpush1.msra.mxu0 0.0
    %464 = vmatprep.subr.mxu0 0.0
    %465 = vmatpush1.msra.mxu0 0.0
    %466 = vmatprep.subr.mxu0 0.0
    %467 = vmatpush1.msra.mxu0 0.0
    %468 = vmatprep.subr.mxu0 0.0
    %469 = vmatpush1.msra.mxu0 0.0
    %470 = vmatprep.subr.mxu0 0.0
    %471 = vmatpush1.msra.mxu0 0.0
    %472 = vmatprep.subr.mxu0 0.0
    %473 = vmatpush1.msra.mxu0 0.0
    %474 = vmatprep.subr.mxu0 0.0
    %475 = vmatpush1.msra.mxu0 0.0
    %476 = vmatprep.subr.mxu0 0.0
    %477 = vmatpush1.msra.mxu0 0.0
    %478 = vmatprep.mubr.f32.mxu0 0.0
    %479 = vmatmul.mubr.f32.gmra.mrb[0].mxu0 %v412
    %v480 = vpop.f32.mrb[0].mxu0
    %v481 = vadd.f32 0.0, %v480
    %v482 = vpop.f32.mrb[0].mxu0
    %483 = vdwg.mxu0
    %484 = vmatprep.subr.mxu0 0.0
    %485 = vmatpush1.msra.mxu0 %v48
    %486 = vmatprep.subr.mxu0 0.0
    %487 = vmatpush1.msra.mxu0 %v49
    %488 = vmatprep.subr.mxu0 0.0
    %489 = vmatpush1.msra.mxu0 %v50
    %490 = vmatprep.subr.mxu0 0.0
    %491 = vmatpush1.msra.mxu0 %v51
    %492 = vmatprep.subr.mxu0 0.0
    %493 = vmatpush1.msra.mxu0 0.0
    %494 = vmatprep.subr.mxu0 0.0
    %495 = vmatpush1.msra.mxu0 0.0
    %496 = vmatprep.subr.mxu0 0.0
    %497 = vmatpush1.msra.mxu0 0.0
    %498 = vmatprep.subr.mxu0 0.0
    %499 = vmatpush1.msra.mxu0 0.0
    %500 = vmatprep.subr.mxu0 0.0
    %501 = vmatpush1.msra.mxu0 0.0
    %502 = vmatprep.subr.mxu0 0.0
    %503 = vmatpush1.msra.mxu0 0.0
    %504 = vmatprep.subr.mxu0 0.0
    %505 = vmatpush1.msra.mxu0 0.0
    %506 = vmatprep.subr.mxu0 0.0
    %507 = vmatpush1.msra.mxu0 0.0
    %508 = vmatprep.subr.mxu0 0.0
    %509 = vmatpush1.msra.mxu0 0.0
    %510 = vmatprep.subr.mxu0 0.0
    %511 = vmatpush1.msra.mxu0 0.0
    %512 = vmatprep.subr.mxu0 0.0
    %513 = vmatpush1.msra.mxu0 0.0
    %514 = vmatprep.subr.mxu0 0.0
    %515 = vmatpush1.msra.mxu0 0.0
    %516 = vmatprep.subr.mxu0 0.0
    %517 = vmatpush1.msra.mxu0 0.0
    %518 = vmatprep.subr.mxu0 0.0
    %519 = vmatpush1.msra.mxu0 0.0
    %520 = vmatprep.subr.mxu0 0.0
    %521 = vmatpush1.msra.mxu0 0.0
    %522 = vmatprep.subr.mxu0 0.0
    %523 = vmatpush1.msra.mxu0 0.0
    %524 = vmatprep.subr.mxu0 0.0
    %525 = vmatpush1.msra.mxu0 0.0
    %526 = vmatprep.subr.mxu0 0.0
    %527 = vmatpush1.msra.mxu0 0.0
    %528 = vmatprep.subr.mxu0 0.0
    %529 = vmatpush1.msra.mxu0 0.0
    %530 = vmatprep.subr.mxu0 0.0
    %531 = vmatpush1.msra.mxu0 0.0
    %532 = vmatprep.subr.mxu0 0.0
    %533 = vmatpush1.msra.mxu0 0.0
    %534 = vmatprep.subr.mxu0 0.0
    %535 = vmatpush1.msra.mxu0 0.0
    %536 = vmatprep.subr.mxu0 0.0
    %537 = vmatpush1.msra.mxu0 0.0
    %538 = vmatprep.subr.mxu0 0.0
    %539 = vmatpush1.msra.mxu0 0.0
    %540 = vmatprep.subr.mxu0 0.0
    %541 = vmatpush1.msra.mxu0 0.0
    %542 = vmatprep.subr.mxu0 0.0
    %543 = vmatpush1.msra.mxu0 0.0
    %544 = vmatprep.subr.mxu0 0.0
    %545 = vmatpush1.msra.mxu0 0.0
    %546 = vmatprep.subr.mxu0 0.0
    %547 = vmatpush1.msra.mxu0 0.0
    %548 = vmatprep.mubr.f32.mxu0 0.0
    %549 = vmatmul.mubr.f32.gmra.mrb[0].mxu0 %v314
    %v550 = vpop.f32.mrb[0].mxu0
    %v551 = vadd.f32 %v481, %v550
    %v552 = vpop.f32.mrb[0].mxu0
    %553 = vdwg.mxu0
    %v554 = vadd.f32 %v551, %v65
    %v555 = vxor.u32 %v554, 2147483648
    %v556 = vmul.f32 %v555, 1.442695
    %v557 = vpow.pop %v556
    %v558 = vadd.f32 %v557, 1.0
    %v559 = vrcp.pop %v558
    %v560 = vmul.f32 1.0, %v559
    %v561 = vtanh.pop %v554
    %563 = vrot.lane.b32.xlu0 %v208, 32
    %v564 = vpop.permute.xlu0 %563
    %v566 = vmul.f32 %v560, %v564
    %568 = vrot.lane.b32.xlu0 %v561, 32
    %v569 = vpop.permute.xlu0 %568
    %v571 = vmul.f32 %v560, %v569
    %573 = vrot.lane.b32.xlu0 %v571, 32
    %v574 = vpop.permute.xlu0 %573
    %v576 = vadd.f32 %v566, %v574
    %v577 = vtanh.pop %v576
    %579 = vrot.lane.b32.xlu0 %v577, 32
    %v580 = vpop.permute.xlu0 %579
    %v582 = vmul.f32 %v560, %v580
    %584 = vrot.lane.b32.xlu0 %v582, 64
    %v585 = vpop.permute.xlu0 %584
    %vm587 = vcmask 257024
    %588 = vst.msk [vmem:[%s11] sm:$0xf] %vm587, %v585
    %v589 = vsel %vm93, %v585, 0
    %591 = vmatprep.subr.mxu0 0.0
    %592 = vmatpush1.msra.mxu0 %v56
    %593 = vmatprep.subr.mxu0 0.0
    %594 = vmatpush1.msra.mxu0 %v57
    %595 = vmatprep.subr.mxu0 0.0
    %596 = vmatpush1.msra.mxu0 %v58
    %597 = vmatprep.subr.mxu0 0.0
    %598 = vmatpush1.msra.mxu0 %v59
    %599 = vmatprep.subr.mxu0 0.0
    %600 = vmatpush1.msra.mxu0 0.0
    %601 = vmatprep.subr.mxu0 0.0
    %602 = vmatpush1.msra.mxu0 0.0
    %603 = vmatprep.subr.mxu0 0.0
    %604 = vmatpush1.msra.mxu0 0.0
    %605 = vmatprep.subr.mxu0 0.0
    %606 = vmatpush1.msra.mxu0 0.0
    %607 = vmatprep.subr.mxu0 0.0
    %608 = vmatpush1.msra.mxu0 0.0
    %609 = vmatprep.subr.mxu0 0.0
    %610 = vmatpush1.msra.mxu0 0.0
    %611 = vmatprep.subr.mxu0 0.0
    %612 = vmatpush1.msra.mxu0 0.0
    %613 = vmatprep.subr.mxu0 0.0
    %614 = vmatpush1.msra.mxu0 0.0
    %615 = vmatprep.subr.mxu0 0.0
    %616 = vmatpush1.msra.mxu0 0.0
    %617 = vmatprep.subr.mxu0 0.0
    %618 = vmatpush1.msra.mxu0 0.0
    %619 = vmatprep.subr.mxu0 0.0
    %620 = vmatpush1.msra.mxu0 0.0
    %621 = vmatprep.subr.mxu0 0.0
    %622 = vmatpush1.msra.mxu0 0.0
    %623 = vmatprep.subr.mxu0 0.0
    %624 = vmatpush1.msra.mxu0 0.0
    %625 = vmatprep.subr.mxu0 0.0
    %626 = vmatpush1.msra.mxu0 0.0
    %627 = vmatprep.subr.mxu0 0.0
    %628 = vmatpush1.msra.mxu0 0.0
    %629 = vmatprep.subr.mxu0 0.0
    %630 = vmatpush1.msra.mxu0 0.0
    %631 = vmatprep.subr.mxu0 0.0
    %632 = vmatpush1.msra.mxu0 0.0
    %633 = vmatprep.subr.mxu0 0.0
    %634 = vmatpush1.msra.mxu0 0.0
    %635 = vmatprep.subr.mxu0 0.0
    %636 = vmatpush1.msra.mxu0 0.0
    %637 = vmatprep.subr.mxu0 0.0
    %638 = vmatpush1.msra.mxu0 0.0
    %639 = vmatprep.subr.mxu0 0.0
    %640 = vmatpush1.msra.mxu0 0.0
    %641 = vmatprep.subr.mxu0 0.0
    %642 = vmatpush1.msra.mxu0 0.0
    %643 = vmatprep.subr.mxu0 0.0
    %644 = vmatpush1.msra.mxu0 0.0
    %645 = vmatprep.subr.mxu0 0.0
    %646 = vmatpush1.msra.mxu0 0.0
    %647 = vmatprep.subr.mxu0 0.0
    %648 = vmatpush1.msra.mxu0 0.0
    %649 = vmatprep.subr.mxu0 0.0
    %650 = vmatpush1.msra.mxu0 0.0
    %651 = vmatprep.subr.mxu0 0.0
    %652 = vmatpush1.msra.mxu0 0.0
    %653 = vmatprep.subr.mxu0 0.0
    %654 = vmatpush1.msra.mxu0 0.0
    %655 = vmatprep.mubr.f32.mxu0 0.0
    %656 = vmatmul.mubr.f32.gmra.mrb[0].mxu0 %v589
    %v657 = vpop.f32.mrb[0].mxu0
    %v658 = vadd.f32 %v72, %v657
    %v659 = vpop.f32.mrb[0].mxu0
    %660 = vdwg.mxu0
    %661 = vst [vmem:[%s12] sm:$0xf] %v658
    %663 = vrot.lane.b32.xlu0 %v410, 64
    %v664 = vpop.permute.xlu0 %663
    %v665 = vsel %vm93, %v664, 0
    %667 = vmatprep.subr.mxu0 0.0
    %668 = vmatpush1.msra.mxu0 %v44
    %669 = vmatprep.subr.mxu0 0.0
    %670 = vmatpush1.msra.mxu0 %v45
    %671 = vmatprep.subr.mxu0 0.0
    %672 = vmatpush1.msra.mxu0 %v46
    %673 = vmatprep.subr.mxu0 0.0
    %674 = vmatpush1.msra.mxu0 %v47
    %675 = vmatprep.subr.mxu0 0.0
    %676 = vmatpush1.msra.mxu0 0.0
    %677 = vmatprep.subr.mxu0 0.0
    %678 = vmatpush1.msra.mxu0 0.0
    %679 = vmatprep.subr.mxu0 0.0
    %680 = vmatpush1.msra.mxu0 0.0
    %681 = vmatprep.subr.mxu0 0.0
    %682 = vmatpush1.msra.mxu0 0.0
    %683 = vmatprep.subr.mxu0 0.0
    %684 = vmatpush1.msra.mxu0 0.0
    %685 = vmatprep.subr.mxu0 0.0
    %686 = vmatpush1.msra.mxu0 0.0
    %687 = vmatprep.subr.mxu0 0.0
    %688 = vmatpush1.msra.mxu0 0.0
    %689 = vmatprep.subr.mxu0 0.0
    %690 = vmatpush1.msra.mxu0 0.0
    %691 = vmatprep.subr.mxu0 0.0
    %692 = vmatpush1.msra.mxu0 0.0
    %693 = vmatprep.subr.mxu0 0.0
    %694 = vmatpush1.msra.mxu0 0.0
    %695 = vmatprep.subr.mxu0 0.0
    %696 = vmatpush1.msra.mxu0 0.0
    %697 = vmatprep.subr.mxu0 0.0
    %698 = vmatpush1.msra.mxu0 0.0
    %699 = vmatprep.subr.mxu0 0.0
    %700 = vmatpush1.msra.mxu0 0.0
    %701 = vmatprep.subr.mxu0 0.0
    %702 = vmatpush1.msra.mxu0 0.0
    %703 = vmatprep.subr.mxu0 0.0
    %704 = vmatpush1.msra.mxu0 0.0
    %705 = vmatprep.subr.mxu0 0.0
    %706 = vmatpush1.msra.mxu0 0.0
    %707 = vmatprep.subr.mxu0 0.0
    %708 = vmatpush1.msra.mxu0 0.0
    %709 = vmatprep.subr.mxu0 0.0
    %710 = vmatpush1.msra.mxu0 0.0
    %711 = vmatprep.subr.mxu0 0.0
    %712 = vmatpush1.msra.mxu0 0.0
    %713 = vmatprep.subr.mxu0 0.0
    %714 = vmatpush1.msra.mxu0 0.0
    %715 = vmatprep.subr.mxu0 0.0
    %716 = vmatpush1.msra.mxu0 0.0
    %717 = vmatprep.subr.mxu0 0.0
    %718 = vmatpush1.msra.mxu0 0.0
    %719 = vmatprep.subr.mxu0 0.0
    %720 = vmatpush1.msra.mxu0 0.0
    %721 = vmatprep.subr.mxu0 0.0
    %722 = vmatpush1.msra.mxu0 0.0
    %723 = vmatprep.subr.mxu0 0.0
    %724 = vmatpush1.msra.mxu0 0.0
    %725 = vmatprep.subr.mxu0 0.0
    %726 = vmatpush1.msra.mxu0 0.0
    %727 = vmatprep.subr.mxu0 0.0
    %728 = vmatpush1.msra.mxu0 0.0
    %729 = vmatprep.subr.mxu0 0.0
    %730 = vmatpush1.msra.mxu0 0.0
    %731 = vmatprep.mubr.f32.mxu0 0.0
    %732 = vmatmul.mubr.f32.gmra.mrb[0].mxu0 %v665
    %v733 = vpop.f32.mrb[0].mxu0
    %v734 = vadd.f32 0.0, %v733
    %v735 = vpop.f32.mrb[0].mxu0
    %736 = vdwg.mxu0
    %v737 = vadd.f32 %v178, %v734
    %v738 = vxor.u32 %v737, 2147483648
    %v739 = vmul.f32 %v738, 1.442695
    %v740 = vpow.pop %v739
    %v741 = vadd.f32 %v740, 1.0
    %v742 = vrcp.pop %v741
    %v743 = vmul.f32 1.0, %v742
    %v744 = vtanh.pop %v737
    %v745 = vmul.f32 %v743, %v404
    %747 = vrot.lane.b32.xlu0 %v744, 32
    %v748 = vpop.permute.xlu0 %747
    %v750 = vmul.f32 %v743, %v748
    %752 = vrot.lane.b32.xlu0 %v750, 32
    %v753 = vpop.permute.xlu0 %752
    %v755 = vadd.f32 %v745, %v753
    %v756 = vtanh.pop %v755
    %758 = vrot.lane.b32.xlu0 %v756, 32
    %v759 = vpop.permute.xlu0 %758
    %v761 = vmul.f32 %v743, %v759
    %762 = vmatprep.subr.mxu0 0.0
    %763 = vmatpush1.msra.mxu0 %v52
    %764 = vmatprep.subr.mxu0 0.0
    %765 = vmatpush1.msra.mxu0 %v53
    %766 = vmatprep.subr.mxu0 0.0
    %767 = vmatpush1.msra.mxu0 %v54
    %768 = vmatprep.subr.mxu0 0.0
    %769 = vmatpush1.msra.mxu0 %v55
    %770 = vmatprep.subr.mxu0 0.0
    %771 = vmatpush1.msra.mxu0 0.0
    %772 = vmatprep.subr.mxu0 0.0
    %773 = vmatpush1.msra.mxu0 0.0
    %774 = vmatprep.subr.mxu0 0.0
    %775 = vmatpush1.msra.mxu0 0.0
    %776 = vmatprep.subr.mxu0 0.0
    %777 = vmatpush1.msra.mxu0 0.0
    %778 = vmatprep.subr.mxu0 0.0
    %779 = vmatpush1.msra.mxu0 0.0
    %780 = vmatprep.subr.mxu0 0.0
    %781 = vmatpush1.msra.mxu0 0.0
    %782 = vmatprep.subr.mxu0 0.0
    %783 = vmatpush1.msra.mxu0 0.0
    %784 = vmatprep.subr.mxu0 0.0
    %785 = vmatpush1.msra.mxu0 0.0
    %786 = vmatprep.subr.mxu0 0.0
    %787 = vmatpush1.msra.mxu0 0.0
    %788 = vmatprep.subr.mxu0 0.0
    %789 = vmatpush1.msra.mxu0 0.0
    %790 = vmatprep.subr.mxu0 0.0
    %791 = vmatpush1.msra.mxu0 0.0
    %792 = vmatprep.subr.mxu0 0.0
    %793 = vmatpush1.msra.mxu0 0.0
    %794 = vmatprep.subr.mxu0 0.0
    %795 = vmatpush1.msra.mxu0 0.0
    %796 = vmatprep.subr.mxu0 0.0
    %797 = vmatpush1.msra.mxu0 0.0
    %798 = vmatprep.subr.mxu0 0.0
    %799 = vmatpush1.msra.mxu0 0.0
    %800 = vmatprep.subr.mxu0 0.0
    %801 = vmatpush1.msra.mxu0 0.0
    %802 = vmatprep.subr.mxu0 0.0
    %803 = vmatpush1.msra.mxu0 0.0
    %804 = vmatprep.subr.mxu0 0.0
    %805 = vmatpush1.msra.mxu0 0.0
    %806 = vmatprep.subr.mxu0 0.0
    %807 = vmatpush1.msra.mxu0 0.0
    %808 = vmatprep.subr.mxu0 0.0
    %809 = vmatpush1.msra.mxu0 0.0
    %810 = vmatprep.subr.mxu0 0.0
    %811 = vmatpush1.msra.mxu0 0.0
    %812 = vmatprep.subr.mxu0 0.0
    %813 = vmatpush1.msra.mxu0 0.0
    %814 = vmatprep.subr.mxu0 0.0
    %815 = vmatpush1.msra.mxu0 0.0
    %816 = vmatprep.subr.mxu0 0.0
    %817 = vmatpush1.msra.mxu0 0.0
    %818 = vmatprep.subr.mxu0 0.0
    %819 = vmatpush1.msra.mxu0 0.0
    %820 = vmatprep.subr.mxu0 0.0
    %821 = vmatpush1.msra.mxu0 0.0
    %822 = vmatprep.subr.mxu0 0.0
    %823 = vmatpush1.msra.mxu0 0.0
    %824 = vmatprep.subr.mxu0 0.0
    %825 = vmatpush1.msra.mxu0 0.0
    %826 = vmatprep.mubr.f32.mxu0 0.0
    %827 = vmatmul.mubr.f32.gmra.mrb[0].mxu0 %v589
    %v828 = vpop.f32.mrb[0].mxu0
    %v829 = vadd.f32 0.0, %v828
    %v830 = vpop.f32.mrb[0].mxu0
    %831 = vdwg.mxu0
    %832 = vmatprep.subr.mxu0 0.0
    %833 = vmatpush1.msra.mxu0 %v48
    %834 = vmatprep.subr.mxu0 0.0
    %835 = vmatpush1.msra.mxu0 %v49
    %836 = vmatprep.subr.mxu0 0.0
    %837 = vmatpush1.msra.mxu0 %v50
    %838 = vmatprep.subr.mxu0 0.0
    %839 = vmatpush1.msra.mxu0 %v51
    %840 = vmatprep.subr.mxu0 0.0
    %841 = vmatpush1.msra.mxu0 0.0
    %842 = vmatprep.subr.mxu0 0.0
    %843 = vmatpush1.msra.mxu0 0.0
    %844 = vmatprep.subr.mxu0 0.0
    %845 = vmatpush1.msra.mxu0 0.0
    %846 = vmatprep.subr.mxu0 0.0
    %847 = vmatpush1.msra.mxu0 0.0
    %848 = vmatprep.subr.mxu0 0.0
    %849 = vmatpush1.msra.mxu0 0.0
    %850 = vmatprep.subr.mxu0 0.0
    %851 = vmatpush1.msra.mxu0 0.0
    %852 = vmatprep.subr.mxu0 0.0
    %853 = vmatpush1.msra.mxu0 0.0
    %854 = vmatprep.subr.mxu0 0.0
    %855 = vmatpush1.msra.mxu0 0.0
    %856 = vmatprep.subr.mxu0 0.0
    %857 = vmatpush1.msra.mxu0 0.0
    %858 = vmatprep.subr.mxu0 0.0
    %859 = vmatpush1.msra.mxu0 0.0
    %860 = vmatprep.subr.mxu0 0.0
    %861 = vmatpush1.msra.mxu0 0.0
    %862 = vmatprep.subr.mxu0 0.0
    %863 = vmatpush1.msra.mxu0 0.0
    %864 = vmatprep.subr.mxu0 0.0
    %865 = vmatpush1.msra.mxu0 0.0
    %866 = vmatprep.subr.mxu0 0.0
    %867 = vmatpush1.msra.mxu0 0.0
    %868 = vmatprep.subr.mxu0 0.0
    %869 = vmatpush1.msra.mxu0 0.0
    %870 = vmatprep.subr.mxu0 0.0
    %871 = vmatpush1.msra.mxu0 0.0
    %872 = vmatprep.subr.mxu0 0.0
    %873 = vmatpush1.msra.mxu0 0.0
    %874 = vmatprep.subr.mxu0 0.0
    %875 = vmatpush1.msra.mxu0 0.0
    %876 = vmatprep.subr.mxu0 0.0
    %877 = vmatpush1.msra.mxu0 0.0
    %878 = vmatprep.subr.mxu0 0.0
    %879 = vmatpush1.msra.mxu0 0.0
    %880 = vmatprep.subr.mxu0 0.0
    %881 = vmatpush1.msra.mxu0 0.0
    %882 = vmatprep.subr.mxu0 0.0
    %883 = vmatpush1.msra.mxu0 0.0
    %884 = vmatprep.subr.mxu0 0.0
    %885 = vmatpush1.msra.mxu0 0.0
    %886 = vmatprep.subr.mxu0 0.0
    %887 = vmatpush1.msra.mxu0 0.0
    %888 = vmatprep.subr.mxu0 0.0
    %889 = vmatpush1.msra.mxu0 0.0
    %890 = vmatprep.subr.mxu0 0.0
    %891 = vmatpush1.msra.mxu0 0.0
    %892 = vmatprep.subr.mxu0 0.0
    %893 = vmatpush1.msra.mxu0 0.0
    %894 = vmatprep.subr.mxu0 0.0
    %895 = vmatpush1.msra.mxu0 0.0
    %896 = vmatprep.mubr.f32.mxu0 0.0
    %897 = vmatmul.mubr.f32.gmra.mrb[0].mxu0 %v665
    %v898 = vpop.f32.mrb[0].mxu0
    %v899 = vadd.f32 %v829, %v898
    %v900 = vpop.f32.mrb[0].mxu0
    %901 = vdwg.mxu0
    %v902 = vadd.f32 %v899, %v65
    %v903 = vxor.u32 %v902, 2147483648
    %v904 = vmul.f32 %v903, 1.442695
    %v905 = vpow.pop %v904
    %v906 = vadd.f32 %v905, 1.0
    %v907 = vrcp.pop %v906
    %v908 = vmul.f32 1.0, %v907
    %v909 = vtanh.pop %v902
    %v910 = vmul.f32 %v908, %v576
    %912 = vrot.lane.b32.xlu0 %v909, 32
    %v913 = vpop.permute.xlu0 %912
    %v915 = vmul.f32 %v908, %v913
    %917 = vrot.lane.b32.xlu0 %v915, 32
    %v918 = vpop.permute.xlu0 %917
    %v920 = vadd.f32 %v910, %v918
    %v921 = vtanh.pop %v920
    %923 = vrot.lane.b32.xlu0 %v921, 32
    %v924 = vpop.permute.xlu0 %923
    %v926 = vmul.f32 %v908, %v924
    %928 = vrot.lane.b32.xlu0 %v926, 64
    %v929 = vpop.permute.xlu0 %928
    %s931 = scalar_lea.vmem %s11, 4
    %932 = vst.msk [vmem:[%s931] sm:$0xf] %vm587, %v929
    %v933 = vsel %vm93, %v929, 0
    %935 = vmatprep.subr.mxu0 0.0
    %936 = vmatpush1.msra.mxu0 %v56
    %937 = vmatprep.subr.mxu0 0.0
    %938 = vmatpush1.msra.mxu0 %v57
    %939 = vmatprep.subr.mxu0 0.0
    %940 = vmatpush1.msra.mxu0 %v58
    %941 = vmatprep.subr.mxu0 0.0
    %942 = vmatpush1.msra.mxu0 %v59
    %943 = vmatprep.subr.mxu0 0.0
    %944 = vmatpush1.msra.mxu0 0.0
    %945 = vmatprep.subr.mxu0 0.0
    %946 = vmatpush1.msra.mxu0 0.0
    %947 = vmatprep.subr.mxu0 0.0
    %948 = vmatpush1.msra.mxu0 0.0
    %949 = vmatprep.subr.mxu0 0.0
    %950 = vmatpush1.msra.mxu0 0.0
    %951 = vmatprep.subr.mxu0 0.0
    %952 = vmatpush1.msra.mxu0 0.0
    %953 = vmatprep.subr.mxu0 0.0
    %954 = vmatpush1.msra.mxu0 0.0
    %955 = vmatprep.subr.mxu0 0.0
    %956 = vmatpush1.msra.mxu0 0.0
    %957 = vmatprep.subr.mxu0 0.0
    %958 = vmatpush1.msra.mxu0 0.0
    %959 = vmatprep.subr.mxu0 0.0
    %960 = vmatpush1.msra.mxu0 0.0
    %961 = vmatprep.subr.mxu0 0.0
    %962 = vmatpush1.msra.mxu0 0.0
    %963 = vmatprep.subr.mxu0 0.0
    %964 = vmatpush1.msra.mxu0 0.0
    %965 = vmatprep.subr.mxu0 0.0
    %966 = vmatpush1.msra.mxu0 0.0
    %967 = vmatprep.subr.mxu0 0.0
    %968 = vmatpush1.msra.mxu0 0.0
    %969 = vmatprep.subr.mxu0 0.0
    %970 = vmatpush1.msra.mxu0 0.0
    %971 = vmatprep.subr.mxu0 0.0
    %972 = vmatpush1.msra.mxu0 0.0
    %973 = vmatprep.subr.mxu0 0.0
    %974 = vmatpush1.msra.mxu0 0.0
    %975 = vmatprep.subr.mxu0 0.0
    %976 = vmatpush1.msra.mxu0 0.0
    %977 = vmatprep.subr.mxu0 0.0
    %978 = vmatpush1.msra.mxu0 0.0
    %979 = vmatprep.subr.mxu0 0.0
    %980 = vmatpush1.msra.mxu0 0.0
    %981 = vmatprep.subr.mxu0 0.0
    %982 = vmatpush1.msra.mxu0 0.0
    %983 = vmatprep.subr.mxu0 0.0
    %984 = vmatpush1.msra.mxu0 0.0
    %985 = vmatprep.subr.mxu0 0.0
    %986 = vmatpush1.msra.mxu0 0.0
    %987 = vmatprep.subr.mxu0 0.0
    %988 = vmatpush1.msra.mxu0 0.0
    %989 = vmatprep.subr.mxu0 0.0
    %990 = vmatpush1.msra.mxu0 0.0
    %991 = vmatprep.subr.mxu0 0.0
    %992 = vmatpush1.msra.mxu0 0.0
    %993 = vmatprep.subr.mxu0 0.0
    %994 = vmatpush1.msra.mxu0 0.0
    %995 = vmatprep.subr.mxu0 0.0
    %996 = vmatpush1.msra.mxu0 0.0
    %997 = vmatprep.subr.mxu0 0.0
    %998 = vmatpush1.msra.mxu0 0.0
    %999 = vmatprep.mubr.f32.mxu0 0.0
    %1000 = vmatmul.mubr.f32.gmra.mrb[0].mxu0 %v933
    %v1001 = vpop.f32.mrb[0].mxu0
    %v1002 = vadd.f32 %v72, %v1001
    %v1003 = vpop.f32.mrb[0].mxu0
    %1004 = vdwg.mxu0
    %s1005 = scalar_lea.vmem %s12, 4
    %1006 = vst [vmem:[%s1005] sm:$0xf] %v1002
    %1008 = vrot.lane.b32.xlu0 %v761, 64
    %v1009 = vpop.permute.xlu0 %1008
    %v1010 = vsel %vm93, %v1009, 0
    %1012 = vmatprep.subr.mxu0 0.0
    %1013 = vmatpush1.msra.mxu0 %v44
    %1014 = vmatprep.subr.mxu0 0.0
    %1015 = vmatpush1.msra.mxu0 %v45
    %1016 = vmatprep.subr.mxu0 0.0
    %1017 = vmatpush1.msra.mxu0 %v46
    %1018 = vmatprep.subr.mxu0 0.0
    %1019 = vmatpush1.msra.mxu0 %v47
    %1020 = vmatprep.subr.mxu0 0.0
    %1021 = vmatpush1.msra.mxu0 0.0
    %1022 = vmatprep.subr.mxu0 0.0
    %1023 = vmatpush1.msra.mxu0 0.0
    %1024 = vmatprep.subr.mxu0 0.0
    %1025 = vmatpush1.msra.mxu0 0.0
    %1026 = vmatprep.subr.mxu0 0.0
    %1027 = vmatpush1.msra.mxu0 0.0
    %1028 = vmatprep.subr.mxu0 0.0
    %1029 = vmatpush1.msra.mxu0 0.0
    %1030 = vmatprep.subr.mxu0 0.0
    %1031 = vmatpush1.msra.mxu0 0.0
    %1032 = vmatprep.subr.mxu0 0.0
    %1033 = vmatpush1.msra.mxu0 0.0
    %1034 = vmatprep.subr.mxu0 0.0
    %1035 = vmatpush1.msra.mxu0 0.0
    %1036 = vmatprep.subr.mxu0 0.0
    %1037 = vmatpush1.msra.mxu0 0.0
    %1038 = vmatprep.subr.mxu0 0.0
    %1039 = vmatpush1.msra.mxu0 0.0
    %1040 = vmatprep.subr.mxu0 0.0
    %1041 = vmatpush1.msra.mxu0 0.0
    %1042 = vmatprep.subr.mxu0 0.0
    %1043 = vmatpush1.msra.mxu0 0.0
    %1044 = vmatprep.subr.mxu0 0.0
    %1045 = vmatpush1.msra.mxu0 0.0
    %1046 = vmatprep.subr.mxu0 0.0
    %1047 = vmatpush1.msra.mxu0 0.0
    %1048 = vmatprep.subr.mxu0 0.0
    %1049 = vmatpush1.msra.mxu0 0.0
    %1050 = vmatprep.subr.mxu0 0.0
    %1051 = vmatpush1.msra.mxu0 0.0
    %1052 = vmatprep.subr.mxu0 0.0
    %1053 = vmatpush1.msra.mxu0 0.0
    %1054 = vmatprep.subr.mxu0 0.0
    %1055 = vmatpush1.msra.mxu0 0.0
    %1056 = vmatprep.subr.mxu0 0.0
    %1057 = vmatpush1.msra.mxu0 0.0
    %1058 = vmatprep.subr.mxu0 0.0
    %1059 = vmatpush1.msra.mxu0 0.0
    %1060 = vmatprep.subr.mxu0 0.0
    %1061 = vmatpush1.msra.mxu0 0.0
    %1062 = vmatprep.subr.mxu0 0.0
    %1063 = vmatpush1.msra.mxu0 0.0
    %1064 = vmatprep.subr.mxu0 0.0
    %1065 = vmatpush1.msra.mxu0 0.0
    %1066 = vmatprep.subr.mxu0 0.0
    %1067 = vmatpush1.msra.mxu0 0.0
    %1068 = vmatprep.subr.mxu0 0.0
    %1069 = vmatpush1.msra.mxu0 0.0
    %1070 = vmatprep.subr.mxu0 0.0
    %1071 = vmatpush1.msra.mxu0 0.0
    %1072 = vmatprep.subr.mxu0 0.0
    %1073 = vmatpush1.msra.mxu0 0.0
    %1074 = vmatprep.subr.mxu0 0.0
    %1075 = vmatpush1.msra.mxu0 0.0
    %1076 = vmatprep.mubr.f32.mxu0 0.0
    %1077 = vmatmul.mubr.f32.gmra.mrb[0].mxu0 %v1010
    %v1078 = vpop.f32.mrb[0].mxu0
    %v1079 = vadd.f32 0.0, %v1078
    %v1080 = vpop.f32.mrb[0].mxu0
    %1081 = vdwg.mxu0
    %v1082 = vadd.f32 %v196, %v1079
    %v1083 = vxor.u32 %v1082, 2147483648
    %v1084 = vmul.f32 %v1083, 1.442695
    %v1085 = vpow.pop %v1084
    %v1086 = vadd.f32 %v1085, 1.0
    %v1087 = vrcp.pop %v1086
    %v1088 = vmul.f32 1.0, %v1087
    %v1089 = vtanh.pop %v1082
    %v1090 = vmul.f32 %v1088, %v755
    %1092 = vrot.lane.b32.xlu0 %v1089, 32
    %v1093 = vpop.permute.xlu0 %1092
    %v1095 = vmul.f32 %v1088, %v1093
    %1097 = vrot.lane.b32.xlu0 %v1095, 32
    %v1098 = vpop.permute.xlu0 %1097
    %v1100 = vadd.f32 %v1090, %v1098
    %v1101 = vtanh.pop %v1100
    %1103 = vrot.lane.b32.xlu0 %v1101, 32
    %v1104 = vpop.permute.xlu0 %1103
    %v1106 = vmul.f32 %v1088, %v1104
    %1107 = vmatprep.subr.mxu0 0.0
    %1108 = vmatpush1.msra.mxu0 %v52
    %1109 = vmatprep.subr.mxu0 0.0
    %1110 = vmatpush1.msra.mxu0 %v53
    %1111 = vmatprep.subr.mxu0 0.0
    %1112 = vmatpush1.msra.mxu0 %v54
    %1113 = vmatprep.subr.mxu0 0.0
    %1114 = vmatpush1.msra.mxu0 %v55
    %1115 = vmatprep.subr.mxu0 0.0
    %1116 = vmatpush1.msra.mxu0 0.0
    %1117 = vmatprep.subr.mxu0 0.0
    %1118 = vmatpush1.msra.mxu0 0.0
    %1119 = vmatprep.subr.mxu0 0.0
    %1120 = vmatpush1.msra.mxu0 0.0
    %1121 = vmatprep.subr.mxu0 0.0
    %1122 = vmatpush1.msra.mxu0 0.0
    %1123 = vmatprep.subr.mxu0 0.0
    %1124 = vmatpush1.msra.mxu0 0.0
    %1125 = vmatprep.subr.mxu0 0.0
    %1126 = vmatpush1.msra.mxu0 0.0
    %1127 = vmatprep.subr.mxu0 0.0
    %1128 = vmatpush1.msra.mxu0 0.0
    %1129 = vmatprep.subr.mxu0 0.0
    %1130 = vmatpush1.msra.mxu0 0.0
    %1131 = vmatprep.subr.mxu0 0.0
    %1132 = vmatpush1.msra.mxu0 0.0
    %1133 = vmatprep.subr.mxu0 0.0
    %1134 = vmatpush1.msra.mxu0 0.0
    %1135 = vmatprep.subr.mxu0 0.0
    %1136 = vmatpush1.msra.mxu0 0.0
    %1137 = vmatprep.subr.mxu0 0.0
    %1138 = vmatpush1.msra.mxu0 0.0
    %1139 = vmatprep.subr.mxu0 0.0
    %1140 = vmatpush1.msra.mxu0 0.0
    %1141 = vmatprep.subr.mxu0 0.0
    %1142 = vmatpush1.msra.mxu0 0.0
    %1143 = vmatprep.subr.mxu0 0.0
    %1144 = vmatpush1.msra.mxu0 0.0
    %1145 = vmatprep.subr.mxu0 0.0
    %1146 = vmatpush1.msra.mxu0 0.0
    %1147 = vmatprep.subr.mxu0 0.0
    %1148 = vmatpush1.msra.mxu0 0.0
    %1149 = vmatprep.subr.mxu0 0.0
    %1150 = vmatpush1.msra.mxu0 0.0
    %1151 = vmatprep.subr.mxu0 0.0
    %1152 = vmatpush1.msra.mxu0 0.0
    %1153 = vmatprep.subr.mxu0 0.0
    %1154 = vmatpush1.msra.mxu0 0.0
    %1155 = vmatprep.subr.mxu0 0.0
    %1156 = vmatpush1.msra.mxu0 0.0
    %1157 = vmatprep.subr.mxu0 0.0
    %1158 = vmatpush1.msra.mxu0 0.0
    %1159 = vmatprep.subr.mxu0 0.0
    %1160 = vmatpush1.msra.mxu0 0.0
    %1161 = vmatprep.subr.mxu0 0.0
    %1162 = vmatpush1.msra.mxu0 0.0
    %1163 = vmatprep.subr.mxu0 0.0
    %1164 = vmatpush1.msra.mxu0 0.0
    %1165 = vmatprep.subr.mxu0 0.0
    %1166 = vmatpush1.msra.mxu0 0.0
    %1167 = vmatprep.subr.mxu0 0.0
    %1168 = vmatpush1.msra.mxu0 0.0
    %1169 = vmatprep.subr.mxu0 0.0
    %1170 = vmatpush1.msra.mxu0 0.0
    %1171 = vmatprep.mubr.f32.mxu0 0.0
    %1172 = vmatmul.mubr.f32.gmra.mrb[0].mxu0 %v933
    %v1173 = vpop.f32.mrb[0].mxu0
    %v1174 = vadd.f32 0.0, %v1173
    %v1175 = vpop.f32.mrb[0].mxu0
    %1176 = vdwg.mxu0
    %1177 = vmatprep.subr.mxu0 0.0
    %1178 = vmatpush1.msra.mxu0 %v48
    %1179 = vmatprep.subr.mxu0 0.0
    %1180 = vmatpush1.msra.mxu0 %v49
    %1181 = vmatprep.subr.mxu0 0.0
    %1182 = vmatpush1.msra.mxu0 %v50
    %1183 = vmatprep.subr.mxu0 0.0
    %1184 = vmatpush1.msra.mxu0 %v51
    %1185 = vmatprep.subr.mxu0 0.0
    %1186 = vmatpush1.msra.mxu0 0.0
    %1187 = vmatprep.subr.mxu0 0.0
    %1188 = vmatpush1.msra.mxu0 0.0
    %1189 = vmatprep.subr.mxu0 0.0
    %1190 = vmatpush1.msra.mxu0 0.0
    %1191 = vmatprep.subr.mxu0 0.0
    %1192 = vmatpush1.msra.mxu0 0.0
    %1193 = vmatprep.subr.mxu0 0.0
    %1194 = vmatpush1.msra.mxu0 0.0
    %1195 = vmatprep.subr.mxu0 0.0
    %1196 = vmatpush1.msra.mxu0 0.0
    %1197 = vmatprep.subr.mxu0 0.0
    %1198 = vmatpush1.msra.mxu0 0.0
    %1199 = vmatprep.subr.mxu0 0.0
    %1200 = vmatpush1.msra.mxu0 0.0
    %1201 = vmatprep.subr.mxu0 0.0
    %1202 = vmatpush1.msra.mxu0 0.0
    %1203 = vmatprep.subr.mxu0 0.0
    %1204 = vmatpush1.msra.mxu0 0.0
    %1205 = vmatprep.subr.mxu0 0.0
    %1206 = vmatpush1.msra.mxu0 0.0
    %1207 = vmatprep.subr.mxu0 0.0
    %1208 = vmatpush1.msra.mxu0 0.0
    %1209 = vmatprep.subr.mxu0 0.0
    %1210 = vmatpush1.msra.mxu0 0.0
    %1211 = vmatprep.subr.mxu0 0.0
    %1212 = vmatpush1.msra.mxu0 0.0
    %1213 = vmatprep.subr.mxu0 0.0
    %1214 = vmatpush1.msra.mxu0 0.0
    %1215 = vmatprep.subr.mxu0 0.0
    %1216 = vmatpush1.msra.mxu0 0.0
    %1217 = vmatprep.subr.mxu0 0.0
    %1218 = vmatpush1.msra.mxu0 0.0
    %1219 = vmatprep.subr.mxu0 0.0
    %1220 = vmatpush1.msra.mxu0 0.0
    %1221 = vmatprep.subr.mxu0 0.0
    %1222 = vmatpush1.msra.mxu0 0.0
    %1223 = vmatprep.subr.mxu0 0.0
    %1224 = vmatpush1.msra.mxu0 0.0
    %1225 = vmatprep.subr.mxu0 0.0
    %1226 = vmatpush1.msra.mxu0 0.0
    %1227 = vmatprep.subr.mxu0 0.0
    %1228 = vmatpush1.msra.mxu0 0.0
    %1229 = vmatprep.subr.mxu0 0.0
    %1230 = vmatpush1.msra.mxu0 0.0
    %1231 = vmatprep.subr.mxu0 0.0
    %1232 = vmatpush1.msra.mxu0 0.0
    %1233 = vmatprep.subr.mxu0 0.0
    %1234 = vmatpush1.msra.mxu0 0.0
    %1235 = vmatprep.subr.mxu0 0.0
    %1236 = vmatpush1.msra.mxu0 0.0
    %1237 = vmatprep.subr.mxu0 0.0
    %1238 = vmatpush1.msra.mxu0 0.0
    %1239 = vmatprep.subr.mxu0 0.0
    %1240 = vmatpush1.msra.mxu0 0.0
    %1241 = vmatprep.mubr.f32.mxu0 0.0
    %1242 = vmatmul.mubr.f32.gmra.mrb[0].mxu0 %v1010
    %v1243 = vpop.f32.mrb[0].mxu0
    %v1244 = vadd.f32 %v1174, %v1243
    %v1245 = vpop.f32.mrb[0].mxu0
    %1246 = vdwg.mxu0
    %v1247 = vadd.f32 %v1244, %v65
    %v1248 = vxor.u32 %v1247, 2147483648
    %v1249 = vmul.f32 %v1248, 1.442695
    %v1250 = vpow.pop %v1249
    %v1251 = vadd.f32 %v1250, 1.0
    %v1252 = vrcp.pop %v1251
    %v1253 = vmul.f32 1.0, %v1252
    %v1254 = vtanh.pop %v1247
    %v1255 = vmul.f32 %v1253, %v920
    %1257 = vrot.lane.b32.xlu0 %v1254, 32
    %v1258 = vpop.permute.xlu0 %1257
    %v1260 = vmul.f32 %v1253, %v1258
    %1262 = vrot.lane.b32.xlu0 %v1260, 32
    %v1263 = vpop.permute.xlu0 %1262
    %v1265 = vadd.f32 %v1255, %v1263
    %v1266 = vtanh.pop %v1265
    %1268 = vrot.lane.b32.xlu0 %v1266, 32
    %v1269 = vpop.permute.xlu0 %1268
    %v1271 = vmul.f32 %v1253, %v1269
    %1273 = vrot.lane.b32.xlu0 %v1271, 64
    %v1274 = vpop.permute.xlu0 %1273
    %s1276 = scalar_lea.vmem %s11, 8
    %1277 = vst.msk [vmem:[%s1276] sm:$0xf] %vm587, %v1274
    %v1278 = vsel %vm93, %v1274, 0
    %1280 = vmatprep.subr.mxu0 0.0
    %1281 = vmatpush1.msra.mxu0 %v56
    %1282 = vmatprep.subr.mxu0 0.0
    %1283 = vmatpush1.msra.mxu0 %v57
    %1284 = vmatprep.subr.mxu0 0.0
    %1285 = vmatpush1.msra.mxu0 %v58
    %1286 = vmatprep.subr.mxu0 0.0
    %1287 = vmatpush1.msra.mxu0 %v59
    %1288 = vmatprep.subr.mxu0 0.0
    %1289 = vmatpush1.msra.mxu0 0.0
    %1290 = vmatprep.subr.mxu0 0.0
    %1291 = vmatpush1.msra.mxu0 0.0
    %1292 = vmatprep.subr.mxu0 0.0
    %1293 = vmatpush1.msra.mxu0 0.0
    %1294 = vmatprep.subr.mxu0 0.0
    %1295 = vmatpush1.msra.mxu0 0.0
    %1296 = vmatprep.subr.mxu0 0.0
    %1297 = vmatpush1.msra.mxu0 0.0
    %1298 = vmatprep.subr.mxu0 0.0
    %1299 = vmatpush1.msra.mxu0 0.0
    %1300 = vmatprep.subr.mxu0 0.0
    %1301 = vmatpush1.msra.mxu0 0.0
    %1302 = vmatprep.subr.mxu0 0.0
    %1303 = vmatpush1.msra.mxu0 0.0
    %1304 = vmatprep.subr.mxu0 0.0
    %1305 = vmatpush1.msra.mxu0 0.0
    %1306 = vmatprep.subr.mxu0 0.0
    %1307 = vmatpush1.msra.mxu0 0.0
    %1308 = vmatprep.subr.mxu0 0.0
    %1309 = vmatpush1.msra.mxu0 0.0
    %1310 = vmatprep.subr.mxu0 0.0
    %1311 = vmatpush1.msra.mxu0 0.0
    %1312 = vmatprep.subr.mxu0 0.0
    %1313 = vmatpush1.msra.mxu0 0.0
    %1314 = vmatprep.subr.mxu0 0.0
    %1315 = vmatpush1.msra.mxu0 0.0
    %1316 = vmatprep.subr.mxu0 0.0
    %1317 = vmatpush1.msra.mxu0 0.0
    %1318 = vmatprep.subr.mxu0 0.0
    %1319 = vmatpush1.msra.mxu0 0.0
    %1320 = vmatprep.subr.mxu0 0.0
    %1321 = vmatpush1.msra.mxu0 0.0
    %1322 = vmatprep.subr.mxu0 0.0
    %1323 = vmatpush1.msra.mxu0 0.0
    %1324 = vmatprep.subr.mxu0 0.0
    %1325 = vmatpush1.msra.mxu0 0.0
    %1326 = vmatprep.subr.mxu0 0.0
    %1327 = vmatpush1.msra.mxu0 0.0
    %1328 = vmatprep.subr.mxu0 0.0
    %1329 = vmatpush1.msra.mxu0 0.0
    %1330 = vmatprep.subr.mxu0 0.0
    %1331 = vmatpush1.msra.mxu0 0.0
    %1332 = vmatprep.subr.mxu0 0.0
    %1333 = vmatpush1.msra.mxu0 0.0
    %1334 = vmatprep.subr.mxu0 0.0
    %1335 = vmatpush1.msra.mxu0 0.0
    %1336 = vmatprep.subr.mxu0 0.0
    %1337 = vmatpush1.msra.mxu0 0.0
    %1338 = vmatprep.subr.mxu0 0.0
    %1339 = vmatpush1.msra.mxu0 0.0
    %1340 = vmatprep.subr.mxu0 0.0
    %1341 = vmatpush1.msra.mxu0 0.0
    %1342 = vmatprep.subr.mxu0 0.0
    %1343 = vmatpush1.msra.mxu0 0.0
    %1344 = vmatprep.mubr.f32.mxu0 0.0
    %1345 = vmatmul.mubr.f32.gmra.mrb[0].mxu0 %v1278
    %v1346 = vpop.f32.mrb[0].mxu0
    %v1347 = vadd.f32 %v72, %v1346
    %v1348 = vpop.f32.mrb[0].mxu0
    %1349 = vdwg.mxu0
    %s1350 = scalar_lea.vmem %s12, 8
    %1351 = vst [vmem:[%s1350] sm:$0xf] %v1347
    %1353 = vrot.lane.b32.xlu0 %v1106, 64
    %v1354 = vpop.permute.xlu0 %1353
    %v1355 = vsel %vm93, %v1354, 0
    %1357 = vmatprep.subr.mxu0 0.0
    %1358 = vmatpush1.msra.mxu0 %v44
    %1359 = vmatprep.subr.mxu0 0.0
    %1360 = vmatpush1.msra.mxu0 %v45
    %1361 = vmatprep.subr.mxu0 0.0
    %1362 = vmatpush1.msra.mxu0 %v46
    %1363 = vmatprep.subr.mxu0 0.0
    %1364 = vmatpush1.msra.mxu0 %v47
    %1365 = vmatprep.subr.mxu0 0.0
    %1366 = vmatpush1.msra.mxu0 0.0
    %1367 = vmatprep.subr.mxu0 0.0
    %1368 = vmatpush1.msra.mxu0 0.0
    %1369 = vmatprep.subr.mxu0 0.0
    %1370 = vmatpush1.msra.mxu0 0.0
    %1371 = vmatprep.subr.mxu0 0.0
    %1372 = vmatpush1.msra.mxu0 0.0
    %1373 = vmatprep.subr.mxu0 0.0
    %1374 = vmatpush1.msra.mxu0 0.0
    %1375 = vmatprep.subr.mxu0 0.0
    %1376 = vmatpush1.msra.mxu0 0.0
    %1377 = vmatprep.subr.mxu0 0.0
    %1378 = vmatpush1.msra.mxu0 0.0
    %1379 = vmatprep.subr.mxu0 0.0
    %1380 = vmatpush1.msra.mxu0 0.0
    %1381 = vmatprep.subr.mxu0 0.0
    %1382 = vmatpush1.msra.mxu0 0.0
    %1383 = vmatprep.subr.mxu0 0.0
    %1384 = vmatpush1.msra.mxu0 0.0
    %1385 = vmatprep.subr.mxu0 0.0
    %1386 = vmatpush1.msra.mxu0 0.0
    %1387 = vmatprep.subr.mxu0 0.0
    %1388 = vmatpush1.msra.mxu0 0.0
    %1389 = vmatprep.subr.mxu0 0.0
    %1390 = vmatpush1.msra.mxu0 0.0
    %1391 = vmatprep.subr.mxu0 0.0
    %1392 = vmatpush1.msra.mxu0 0.0
    %1393 = vmatprep.subr.mxu0 0.0
    %1394 = vmatpush1.msra.mxu0 0.0
    %1395 = vmatprep.subr.mxu0 0.0
    %1396 = vmatpush1.msra.mxu0 0.0
    %1397 = vmatprep.subr.mxu0 0.0
    %1398 = vmatpush1.msra.mxu0 0.0
    %1399 = vmatprep.subr.mxu0 0.0
    %1400 = vmatpush1.msra.mxu0 0.0
    %1401 = vmatprep.subr.mxu0 0.0
    %1402 = vmatpush1.msra.mxu0 0.0
    %1403 = vmatprep.subr.mxu0 0.0
    %1404 = vmatpush1.msra.mxu0 0.0
    %1405 = vmatprep.subr.mxu0 0.0
    %1406 = vmatpush1.msra.mxu0 0.0
    %1407 = vmatprep.subr.mxu0 0.0
    %1408 = vmatpush1.msra.mxu0 0.0
    %1409 = vmatprep.subr.mxu0 0.0
    %1410 = vmatpush1.msra.mxu0 0.0
    %1411 = vmatprep.subr.mxu0 0.0
    %1412 = vmatpush1.msra.mxu0 0.0
    %1413 = vmatprep.subr.mxu0 0.0
    %1414 = vmatpush1.msra.mxu0 0.0
    %1415 = vmatprep.subr.mxu0 0.0
    %1416 = vmatpush1.msra.mxu0 0.0
    %1417 = vmatprep.subr.mxu0 0.0
    %1418 = vmatpush1.msra.mxu0 0.0
    %1419 = vmatprep.subr.mxu0 0.0
    %1420 = vmatpush1.msra.mxu0 0.0
    %1421 = vmatprep.mubr.f32.mxu0 0.0
    %1422 = vmatmul.mubr.f32.gmra.mrb[0].mxu0 %v1355
    %v1423 = vpop.f32.mrb[0].mxu0
    %v1424 = vadd.f32 0.0, %v1423
    %v1425 = vpop.f32.mrb[0].mxu0
    %1426 = vdwg.mxu0
    %v1427 = vadd.f32 %v183, %v1424
    %v1428 = vxor.u32 %v1427, 2147483648
    %v1429 = vmul.f32 %v1428, 1.442695
    %v1430 = vpow.pop %v1429
    %v1431 = vadd.f32 %v1430, 1.0
    %v1432 = vrcp.pop %v1431
    %v1433 = vmul.f32 1.0, %v1432
    %v1434 = vtanh.pop %v1427
    %v1435 = vmul.f32 %v1433, %v1100
    %1437 = vrot.lane.b32.xlu0 %v1434, 32
    %v1438 = vpop.permute.xlu0 %1437
    %v1440 = vmul.f32 %v1433, %v1438
    %1442 = vrot.lane.b32.xlu0 %v1440, 32
    %v1443 = vpop.permute.xlu0 %1442
    %v1445 = vadd.f32 %v1435, %v1443
    %v1446 = vtanh.pop %v1445
    %1448 = vrot.lane.b32.xlu0 %v1446, 32
    %v1449 = vpop.permute.xlu0 %1448
    %v1451 = vmul.f32 %v1433, %v1449
    %1452 = vmatprep.subr.mxu0 0.0
    %1453 = vmatpush1.msra.mxu0 %v52
    %1454 = vmatprep.subr.mxu0 0.0
    %1455 = vmatpush1.msra.mxu0 %v53
    %1456 = vmatprep.subr.mxu0 0.0
    %1457 = vmatpush1.msra.mxu0 %v54
    %1458 = vmatprep.subr.mxu0 0.0
    %1459 = vmatpush1.msra.mxu0 %v55
    %1460 = vmatprep.subr.mxu0 0.0
    %1461 = vmatpush1.msra.mxu0 0.0
    %1462 = vmatprep.subr.mxu0 0.0
    %1463 = vmatpush1.msra.mxu0 0.0
    %1464 = vmatprep.subr.mxu0 0.0
    %1465 = vmatpush1.msra.mxu0 0.0
    %1466 = vmatprep.subr.mxu0 0.0
    %1467 = vmatpush1.msra.mxu0 0.0
    %1468 = vmatprep.subr.mxu0 0.0
    %1469 = vmatpush1.msra.mxu0 0.0
    %1470 = vmatprep.subr.mxu0 0.0
    %1471 = vmatpush1.msra.mxu0 0.0
    %1472 = vmatprep.subr.mxu0 0.0
    %1473 = vmatpush1.msra.mxu0 0.0
    %1474 = vmatprep.subr.mxu0 0.0
    %1475 = vmatpush1.msra.mxu0 0.0
    %1476 = vmatprep.subr.mxu0 0.0
    %1477 = vmatpush1.msra.mxu0 0.0
    %1478 = vmatprep.subr.mxu0 0.0
    %1479 = vmatpush1.msra.mxu0 0.0
    %1480 = vmatprep.subr.mxu0 0.0
    %1481 = vmatpush1.msra.mxu0 0.0
    %1482 = vmatprep.subr.mxu0 0.0
    %1483 = vmatpush1.msra.mxu0 0.0
    %1484 = vmatprep.subr.mxu0 0.0
    %1485 = vmatpush1.msra.mxu0 0.0
    %1486 = vmatprep.subr.mxu0 0.0
    %1487 = vmatpush1.msra.mxu0 0.0
    %1488 = vmatprep.subr.mxu0 0.0
    %1489 = vmatpush1.msra.mxu0 0.0
    %1490 = vmatprep.subr.mxu0 0.0
    %1491 = vmatpush1.msra.mxu0 0.0
    %1492 = vmatprep.subr.mxu0 0.0
    %1493 = vmatpush1.msra.mxu0 0.0
    %1494 = vmatprep.subr.mxu0 0.0
    %1495 = vmatpush1.msra.mxu0 0.0
    %1496 = vmatprep.subr.mxu0 0.0
    %1497 = vmatpush1.msra.mxu0 0.0
    %1498 = vmatprep.subr.mxu0 0.0
    %1499 = vmatpush1.msra.mxu0 0.0
    %1500 = vmatprep.subr.mxu0 0.0
    %1501 = vmatpush1.msra.mxu0 0.0
    %1502 = vmatprep.subr.mxu0 0.0
    %1503 = vmatpush1.msra.mxu0 0.0
    %1504 = vmatprep.subr.mxu0 0.0
    %1505 = vmatpush1.msra.mxu0 0.0
    %1506 = vmatprep.subr.mxu0 0.0
    %1507 = vmatpush1.msra.mxu0 0.0
    %1508 = vmatprep.subr.mxu0 0.0
    %1509 = vmatpush1.msra.mxu0 0.0
    %1510 = vmatprep.subr.mxu0 0.0
    %1511 = vmatpush1.msra.mxu0 0.0
    %1512 = vmatprep.subr.mxu0 0.0
    %1513 = vmatpush1.msra.mxu0 0.0
    %1514 = vmatprep.subr.mxu0 0.0
    %1515 = vmatpush1.msra.mxu0 0.0
    %1516 = vmatprep.mubr.f32.mxu0 0.0
    %1517 = vmatmul.mubr.f32.gmra.mrb[0].mxu0 %v1278
    %v1518 = vpop.f32.mrb[0].mxu0
    %v1519 = vadd.f32 0.0, %v1518
    %v1520 = vpop.f32.mrb[0].mxu0
    %1521 = vdwg.mxu0
    %1522 = vmatprep.subr.mxu0 0.0
    %1523 = vmatpush1.msra.mxu0 %v48
    %1524 = vmatprep.subr.mxu0 0.0
    %1525 = vmatpush1.msra.mxu0 %v49
    %1526 = vmatprep.subr.mxu0 0.0
    %1527 = vmatpush1.msra.mxu0 %v50
    %1528 = vmatprep.subr.mxu0 0.0
    %1529 = vmatpush1.msra.mxu0 %v51
    %1530 = vmatprep.subr.mxu0 0.0
    %1531 = vmatpush1.msra.mxu0 0.0
    %1532 = vmatprep.subr.mxu0 0.0
    %1533 = vmatpush1.msra.mxu0 0.0
    %1534 = vmatprep.subr.mxu0 0.0
    %1535 = vmatpush1.msra.mxu0 0.0
    %1536 = vmatprep.subr.mxu0 0.0
    %1537 = vmatpush1.msra.mxu0 0.0
    %1538 = vmatprep.subr.mxu0 0.0
    %1539 = vmatpush1.msra.mxu0 0.0
    %1540 = vmatprep.subr.mxu0 0.0
    %1541 = vmatpush1.msra.mxu0 0.0
    %1542 = vmatprep.subr.mxu0 0.0
    %1543 = vmatpush1.msra.mxu0 0.0
    %1544 = vmatprep.subr.mxu0 0.0
    %1545 = vmatpush1.msra.mxu0 0.0
    %1546 = vmatprep.subr.mxu0 0.0
    %1547 = vmatpush1.msra.mxu0 0.0
    %1548 = vmatprep.subr.mxu0 0.0
    %1549 = vmatpush1.msra.mxu0 0.0
    %1550 = vmatprep.subr.mxu0 0.0
    %1551 = vmatpush1.msra.mxu0 0.0
    %1552 = vmatprep.subr.mxu0 0.0
    %1553 = vmatpush1.msra.mxu0 0.0
    %1554 = vmatprep.subr.mxu0 0.0
    %1555 = vmatpush1.msra.mxu0 0.0
    %1556 = vmatprep.subr.mxu0 0.0
    %1557 = vmatpush1.msra.mxu0 0.0
    %1558 = vmatprep.subr.mxu0 0.0
    %1559 = vmatpush1.msra.mxu0 0.0
    %1560 = vmatprep.subr.mxu0 0.0
    %1561 = vmatpush1.msra.mxu0 0.0
    %1562 = vmatprep.subr.mxu0 0.0
    %1563 = vmatpush1.msra.mxu0 0.0
    %1564 = vmatprep.subr.mxu0 0.0
    %1565 = vmatpush1.msra.mxu0 0.0
    %1566 = vmatprep.subr.mxu0 0.0
    %1567 = vmatpush1.msra.mxu0 0.0
    %1568 = vmatprep.subr.mxu0 0.0
    %1569 = vmatpush1.msra.mxu0 0.0
    %1570 = vmatprep.subr.mxu0 0.0
    %1571 = vmatpush1.msra.mxu0 0.0
    %1572 = vmatprep.subr.mxu0 0.0
    %1573 = vmatpush1.msra.mxu0 0.0
    %1574 = vmatprep.subr.mxu0 0.0
    %1575 = vmatpush1.msra.mxu0 0.0
    %1576 = vmatprep.subr.mxu0 0.0
    %1577 = vmatpush1.msra.mxu0 0.0
    %1578 = vmatprep.subr.mxu0 0.0
    %1579 = vmatpush1.msra.mxu0 0.0
    %1580 = vmatprep.subr.mxu0 0.0
    %1581 = vmatpush1.msra.mxu0 0.0
    %1582 = vmatprep.subr.mxu0 0.0
    %1583 = vmatpush1.msra.mxu0 0.0
    %1584 = vmatprep.subr.mxu0 0.0
    %1585 = vmatpush1.msra.mxu0 0.0
    %1586 = vmatprep.mubr.f32.mxu0 0.0
    %1587 = vmatmul.mubr.f32.gmra.mrb[0].mxu0 %v1355
    %v1588 = vpop.f32.mrb[0].mxu0
    %v1589 = vadd.f32 %v1519, %v1588
    %v1590 = vpop.f32.mrb[0].mxu0
    %1591 = vdwg.mxu0
    %v1592 = vadd.f32 %v1589, %v65
    %v1593 = vxor.u32 %v1592, 2147483648
    %v1594 = vmul.f32 %v1593, 1.442695
    %v1595 = vpow.pop %v1594
    %v1596 = vadd.f32 %v1595, 1.0
    %v1597 = vrcp.pop %v1596
    %v1598 = vmul.f32 1.0, %v1597
    %v1599 = vtanh.pop %v1592
    %v1600 = vmul.f32 %v1598, %v1265
    %1602 = vrot.lane.b32.xlu0 %v1599, 32
    %v1603 = vpop.permute.xlu0 %1602
    %v1605 = vmul.f32 %v1598, %v1603
    %1607 = vrot.lane.b32.xlu0 %v1605, 32
    %v1608 = vpop.permute.xlu0 %1607
    %v1610 = vadd.f32 %v1600, %v1608
    %v1611 = vtanh.pop %v1610
    %1613 = vrot.lane.b32.xlu0 %v1611, 32
    %v1614 = vpop.permute.xlu0 %1613
    %v1616 = vmul.f32 %v1598, %v1614
    %1618 = vrot.lane.b32.xlu0 %v1616, 64
    %v1619 = vpop.permute.xlu0 %1618
    %s1621 = scalar_lea.vmem %s11, 12
    %1622 = vst.msk [vmem:[%s1621] sm:$0xf] %vm587, %v1619
    %v1623 = vsel %vm93, %v1619, 0
    %1625 = vmatprep.subr.mxu0 0.0
    %1626 = vmatpush1.msra.mxu0 %v56
    %1627 = vmatprep.subr.mxu0 0.0
    %1628 = vmatpush1.msra.mxu0 %v57
    %1629 = vmatprep.subr.mxu0 0.0
    %1630 = vmatpush1.msra.mxu0 %v58
    %1631 = vmatprep.subr.mxu0 0.0
    %1632 = vmatpush1.msra.mxu0 %v59
    %1633 = vmatprep.subr.mxu0 0.0
    %1634 = vmatpush1.msra.mxu0 0.0
    %1635 = vmatprep.subr.mxu0 0.0
    %1636 = vmatpush1.msra.mxu0 0.0
    %1637 = vmatprep.subr.mxu0 0.0
    %1638 = vmatpush1.msra.mxu0 0.0
    %1639 = vmatprep.subr.mxu0 0.0
    %1640 = vmatpush1.msra.mxu0 0.0
    %1641 = vmatprep.subr.mxu0 0.0
    %1642 = vmatpush1.msra.mxu0 0.0
    %1643 = vmatprep.subr.mxu0 0.0
    %1644 = vmatpush1.msra.mxu0 0.0
    %1645 = vmatprep.subr.mxu0 0.0
    %1646 = vmatpush1.msra.mxu0 0.0
    %1647 = vmatprep.subr.mxu0 0.0
    %1648 = vmatpush1.msra.mxu0 0.0
    %1649 = vmatprep.subr.mxu0 0.0
    %1650 = vmatpush1.msra.mxu0 0.0
    %1651 = vmatprep.subr.mxu0 0.0
    %1652 = vmatpush1.msra.mxu0 0.0
    %1653 = vmatprep.subr.mxu0 0.0
    %1654 = vmatpush1.msra.mxu0 0.0
    %1655 = vmatprep.subr.mxu0 0.0
    %1656 = vmatpush1.msra.mxu0 0.0
    %1657 = vmatprep.subr.mxu0 0.0
    %1658 = vmatpush1.msra.mxu0 0.0
    %1659 = vmatprep.subr.mxu0 0.0
    %1660 = vmatpush1.msra.mxu0 0.0
    %1661 = vmatprep.subr.mxu0 0.0
    %1662 = vmatpush1.msra.mxu0 0.0
    %1663 = vmatprep.subr.mxu0 0.0
    %1664 = vmatpush1.msra.mxu0 0.0
    %1665 = vmatprep.subr.mxu0 0.0
    %1666 = vmatpush1.msra.mxu0 0.0
    %1667 = vmatprep.subr.mxu0 0.0
    %1668 = vmatpush1.msra.mxu0 0.0
    %1669 = vmatprep.subr.mxu0 0.0
    %1670 = vmatpush1.msra.mxu0 0.0
    %1671 = vmatprep.subr.mxu0 0.0
    %1672 = vmatpush1.msra.mxu0 0.0
    %1673 = vmatprep.subr.mxu0 0.0
    %1674 = vmatpush1.msra.mxu0 0.0
    %1675 = vmatprep.subr.mxu0 0.0
    %1676 = vmatpush1.msra.mxu0 0.0
    %1677 = vmatprep.subr.mxu0 0.0
    %1678 = vmatpush1.msra.mxu0 0.0
    %1679 = vmatprep.subr.mxu0 0.0
    %1680 = vmatpush1.msra.mxu0 0.0
    %1681 = vmatprep.subr.mxu0 0.0
    %1682 = vmatpush1.msra.mxu0 0.0
    %1683 = vmatprep.subr.mxu0 0.0
    %1684 = vmatpush1.msra.mxu0 0.0
    %1685 = vmatprep.subr.mxu0 0.0
    %1686 = vmatpush1.msra.mxu0 0.0
    %1687 = vmatprep.subr.mxu0 0.0
    %1688 = vmatpush1.msra.mxu0 0.0
    %1689 = vmatprep.mubr.f32.mxu0 0.0
    %1690 = vmatmul.mubr.f32.gmra.mrb[0].mxu0 %v1623
    %v1691 = vpop.f32.mrb[0].mxu0
    %v1692 = vadd.f32 %v72, %v1691
    %v1693 = vpop.f32.mrb[0].mxu0
    %1694 = vdwg.mxu0
    %s1695 = scalar_lea.vmem %s12, 12
    %1696 = vst [vmem:[%s1695] sm:$0xf] %v1692
    %1698 = vrot.lane.b32.xlu0 %v1451, 64
    %v1699 = vpop.permute.xlu0 %1698
    %v1700 = vsel %vm93, %v1699, 0
    %1702 = vmatprep.subr.mxu0 0.0
    %1703 = vmatpush1.msra.mxu0 %v44
    %1704 = vmatprep.subr.mxu0 0.0
    %1705 = vmatpush1.msra.mxu0 %v45
    %1706 = vmatprep.subr.mxu0 0.0
    %1707 = vmatpush1.msra.mxu0 %v46
    %1708 = vmatprep.subr.mxu0 0.0
    %1709 = vmatpush1.msra.mxu0 %v47
    %1710 = vmatprep.subr.mxu0 0.0
    %1711 = vmatpush1.msra.mxu0 0.0
    %1712 = vmatprep.subr.mxu0 0.0
    %1713 = vmatpush1.msra.mxu0 0.0
    %1714 = vmatprep.subr.mxu0 0.0
    %1715 = vmatpush1.msra.mxu0 0.0
    %1716 = vmatprep.subr.mxu0 0.0
    %1717 = vmatpush1.msra.mxu0 0.0
    %1718 = vmatprep.subr.mxu0 0.0
    %1719 = vmatpush1.msra.mxu0 0.0
    %1720 = vmatprep.subr.mxu0 0.0
    %1721 = vmatpush1.msra.mxu0 0.0
    %1722 = vmatprep.subr.mxu0 0.0
    %1723 = vmatpush1.msra.mxu0 0.0
    %1724 = vmatprep.subr.mxu0 0.0
    %1725 = vmatpush1.msra.mxu0 0.0
    %1726 = vmatprep.subr.mxu0 0.0
    %1727 = vmatpush1.msra.mxu0 0.0
    %1728 = vmatprep.subr.mxu0 0.0
    %1729 = vmatpush1.msra.mxu0 0.0
    %1730 = vmatprep.subr.mxu0 0.0
    %1731 = vmatpush1.msra.mxu0 0.0
    %1732 = vmatprep.subr.mxu0 0.0
    %1733 = vmatpush1.msra.mxu0 0.0
    %1734 = vmatprep.subr.mxu0 0.0
    %1735 = vmatpush1.msra.mxu0 0.0
    %1736 = vmatprep.subr.mxu0 0.0
    %1737 = vmatpush1.msra.mxu0 0.0
    %1738 = vmatprep.subr.mxu0 0.0
    %1739 = vmatpush1.msra.mxu0 0.0
    %1740 = vmatprep.subr.mxu0 0.0
    %1741 = vmatpush1.msra.mxu0 0.0
    %1742 = vmatprep.subr.mxu0 0.0
    %1743 = vmatpush1.msra.mxu0 0.0
    %1744 = vmatprep.subr.mxu0 0.0
    %1745 = vmatpush1.msra.mxu0 0.0
    %1746 = vmatprep.subr.mxu0 0.0
    %1747 = vmatpush1.msra.mxu0 0.0
    %1748 = vmatprep.subr.mxu0 0.0
    %1749 = vmatpush1.msra.mxu0 0.0
    %1750 = vmatprep.subr.mxu0 0.0
    %1751 = vmatpush1.msra.mxu0 0.0
    %1752 = vmatprep.subr.mxu0 0.0
    %1753 = vmatpush1.msra.mxu0 0.0
    %1754 = vmatprep.subr.mxu0 0.0
    %1755 = vmatpush1.msra.mxu0 0.0
    %1756 = vmatprep.subr.mxu0 0.0
    %1757 = vmatpush1.msra.mxu0 0.0
    %1758 = vmatprep.subr.mxu0 0.0
    %1759 = vmatpush1.msra.mxu0 0.0
    %1760 = vmatprep.subr.mxu0 0.0
    %1761 = vmatpush1.msra.mxu0 0.0
    %1762 = vmatprep.subr.mxu0 0.0
    %1763 = vmatpush1.msra.mxu0 0.0
    %1764 = vmatprep.subr.mxu0 0.0
    %1765 = vmatpush1.msra.mxu0 0.0
    %1766 = vmatprep.mubr.f32.mxu0 0.0
    %1767 = vmatmul.mubr.f32.gmra.mrb[0].mxu0 %v1700
    %v1768 = vpop.f32.mrb[0].mxu0
    %v1769 = vadd.f32 0.0, %v1768
    %v1770 = vpop.f32.mrb[0].mxu0
    %1771 = vdwg.mxu0
    %v1772 = vadd.f32 %v197, %v1769
    %v1773 = vxor.u32 %v1772, 2147483648
    %v1774 = vmul.f32 %v1773, 1.442695
    %v1775 = vpow.pop %v1774
    %v1776 = vadd.f32 %v1775, 1.0
    %v1777 = vrcp.pop %v1776
    %v1778 = vmul.f32 1.0, %v1777
    %v1779 = vtanh.pop %v1772
    %v1780 = vmul.f32 %v1778, %v1445
    %1782 = vrot.lane.b32.xlu0 %v1779, 32
    %v1783 = vpop.permute.xlu0 %1782
    %v1785 = vmul.f32 %v1778, %v1783
    %1787 = vrot.lane.b32.xlu0 %v1785, 32
    %v1788 = vpop.permute.xlu0 %1787
    %v1790 = vadd.f32 %v1780, %v1788
    %v1791 = vtanh.pop %v1790
    %1793 = vrot.lane.b32.xlu0 %v1791, 32
    %v1794 = vpop.permute.xlu0 %1793
    %v1796 = vmul.f32 %v1778, %v1794
    %1797 = vmatprep.subr.mxu0 0.0
    %1798 = vmatpush1.msra.mxu0 %v52
    %1799 = vmatprep.subr.mxu0 0.0
    %1800 = vmatpush1.msra.mxu0 %v53
    %1801 = vmatprep.subr.mxu0 0.0
    %1802 = vmatpush1.msra.mxu0 %v54
    %1803 = vmatprep.subr.mxu0 0.0
    %1804 = vmatpush1.msra.mxu0 %v55
    %1805 = vmatprep.subr.mxu0 0.0
    %1806 = vmatpush1.msra.mxu0 0.0
    %1807 = vmatprep.subr.mxu0 0.0
    %1808 = vmatpush1.msra.mxu0 0.0
    %1809 = vmatprep.subr.mxu0 0.0
    %1810 = vmatpush1.msra.mxu0 0.0
    %1811 = vmatprep.subr.mxu0 0.0
    %1812 = vmatpush1.msra.mxu0 0.0
    %1813 = vmatprep.subr.mxu0 0.0
    %1814 = vmatpush1.msra.mxu0 0.0
    %1815 = vmatprep.subr.mxu0 0.0
    %1816 = vmatpush1.msra.mxu0 0.0
    %1817 = vmatprep.subr.mxu0 0.0
    %1818 = vmatpush1.msra.mxu0 0.0
    %1819 = vmatprep.subr.mxu0 0.0
    %1820 = vmatpush1.msra.mxu0 0.0
    %1821 = vmatprep.subr.mxu0 0.0
    %1822 = vmatpush1.msra.mxu0 0.0
    %1823 = vmatprep.subr.mxu0 0.0
    %1824 = vmatpush1.msra.mxu0 0.0
    %1825 = vmatprep.subr.mxu0 0.0
    %1826 = vmatpush1.msra.mxu0 0.0
    %1827 = vmatprep.subr.mxu0 0.0
    %1828 = vmatpush1.msra.mxu0 0.0
    %1829 = vmatprep.subr.mxu0 0.0
    %1830 = vmatpush1.msra.mxu0 0.0
    %1831 = vmatprep.subr.mxu0 0.0
    %1832 = vmatpush1.msra.mxu0 0.0
    %1833 = vmatprep.subr.mxu0 0.0
    %1834 = vmatpush1.msra.mxu0 0.0
    %1835 = vmatprep.subr.mxu0 0.0
    %1836 = vmatpush1.msra.mxu0 0.0
    %1837 = vmatprep.subr.mxu0 0.0
    %1838 = vmatpush1.msra.mxu0 0.0
    %1839 = vmatprep.subr.mxu0 0.0
    %1840 = vmatpush1.msra.mxu0 0.0
    %1841 = vmatprep.subr.mxu0 0.0
    %1842 = vmatpush1.msra.mxu0 0.0
    %1843 = vmatprep.subr.mxu0 0.0
    %1844 = vmatpush1.msra.mxu0 0.0
    %1845 = vmatprep.subr.mxu0 0.0
    %1846 = vmatpush1.msra.mxu0 0.0
    %1847 = vmatprep.subr.mxu0 0.0
    %1848 = vmatpush1.msra.mxu0 0.0
    %1849 = vmatprep.subr.mxu0 0.0
    %1850 = vmatpush1.msra.mxu0 0.0
    %1851 = vmatprep.subr.mxu0 0.0
    %1852 = vmatpush1.msra.mxu0 0.0
    %1853 = vmatprep.subr.mxu0 0.0
    %1854 = vmatpush1.msra.mxu0 0.0
    %1855 = vmatprep.subr.mxu0 0.0
    %1856 = vmatpush1.msra.mxu0 0.0
    %1857 = vmatprep.subr.mxu0 0.0
    %1858 = vmatpush1.msra.mxu0 0.0
    %1859 = vmatprep.subr.mxu0 0.0
    %1860 = vmatpush1.msra.mxu0 0.0
    %1861 = vmatprep.mubr.f32.mxu0 0.0
    %1862 = vmatmul.mubr.f32.gmra.mrb[0].mxu0 %v1623
    %v1863 = vpop.f32.mrb[0].mxu0
    %v1864 = vadd.f32 0.0, %v1863
    %v1865 = vpop.f32.mrb[0].mxu0
    %1866 = vdwg.mxu0
    %1867 = vmatprep.subr.mxu0 0.0
    %1868 = vmatpush1.msra.mxu0 %v48
    %1869 = vmatprep.subr.mxu0 0.0
    %1870 = vmatpush1.msra.mxu0 %v49
    %1871 = vmatprep.subr.mxu0 0.0
    %1872 = vmatpush1.msra.mxu0 %v50
    %1873 = vmatprep.subr.mxu0 0.0
    %1874 = vmatpush1.msra.mxu0 %v51
    %1875 = vmatprep.subr.mxu0 0.0
    %1876 = vmatpush1.msra.mxu0 0.0
    %1877 = vmatprep.subr.mxu0 0.0
    %1878 = vmatpush1.msra.mxu0 0.0
    %1879 = vmatprep.subr.mxu0 0.0
    %1880 = vmatpush1.msra.mxu0 0.0
    %1881 = vmatprep.subr.mxu0 0.0
    %1882 = vmatpush1.msra.mxu0 0.0
    %1883 = vmatprep.subr.mxu0 0.0
    %1884 = vmatpush1.msra.mxu0 0.0
    %1885 = vmatprep.subr.mxu0 0.0
    %1886 = vmatpush1.msra.mxu0 0.0
    %1887 = vmatprep.subr.mxu0 0.0
    %1888 = vmatpush1.msra.mxu0 0.0
    %1889 = vmatprep.subr.mxu0 0.0
    %1890 = vmatpush1.msra.mxu0 0.0
    %1891 = vmatprep.subr.mxu0 0.0
    %1892 = vmatpush1.msra.mxu0 0.0
    %1893 = vmatprep.subr.mxu0 0.0
    %1894 = vmatpush1.msra.mxu0 0.0
    %1895 = vmatprep.subr.mxu0 0.0
    %1896 = vmatpush1.msra.mxu0 0.0
    %1897 = vmatprep.subr.mxu0 0.0
    %1898 = vmatpush1.msra.mxu0 0.0
    %1899 = vmatprep.subr.mxu0 0.0
    %1900 = vmatpush1.msra.mxu0 0.0
    %1901 = vmatprep.subr.mxu0 0.0
    %1902 = vmatpush1.msra.mxu0 0.0
    %1903 = vmatprep.subr.mxu0 0.0
    %1904 = vmatpush1.msra.mxu0 0.0
    %1905 = vmatprep.subr.mxu0 0.0
    %1906 = vmatpush1.msra.mxu0 0.0
    %1907 = vmatprep.subr.mxu0 0.0
    %1908 = vmatpush1.msra.mxu0 0.0
    %1909 = vmatprep.subr.mxu0 0.0
    %1910 = vmatpush1.msra.mxu0 0.0
    %1911 = vmatprep.subr.mxu0 0.0
    %1912 = vmatpush1.msra.mxu0 0.0
    %1913 = vmatprep.subr.mxu0 0.0
    %1914 = vmatpush1.msra.mxu0 0.0
    %1915 = vmatprep.subr.mxu0 0.0
    %1916 = vmatpush1.msra.mxu0 0.0
    %1917 = vmatprep.subr.mxu0 0.0
    %1918 = vmatpush1.msra.mxu0 0.0
    %1919 = vmatprep.subr.mxu0 0.0
    %1920 = vmatpush1.msra.mxu0 0.0
    %1921 = vmatprep.subr.mxu0 0.0
    %1922 = vmatpush1.msra.mxu0 0.0
    %1923 = vmatprep.subr.mxu0 0.0
    %1924 = vmatpush1.msra.mxu0 0.0
    %1925 = vmatprep.subr.mxu0 0.0
    %1926 = vmatpush1.msra.mxu0 0.0
    %1927 = vmatprep.subr.mxu0 0.0
    %1928 = vmatpush1.msra.mxu0 0.0
    %1929 = vmatprep.subr.mxu0 0.0
    %1930 = vmatpush1.msra.mxu0 0.0
    %1931 = vmatprep.mubr.f32.mxu0 0.0
    %1932 = vmatmul.mubr.f32.gmra.mrb[0].mxu0 %v1700
    %v1933 = vpop.f32.mrb[0].mxu0
    %v1934 = vadd.f32 %v1864, %v1933
    %v1935 = vpop.f32.mrb[0].mxu0
    %1936 = vdwg.mxu0
    %v1937 = vadd.f32 %v1934, %v65
    %v1938 = vxor.u32 %v1937, 2147483648
    %v1939 = vmul.f32 %v1938, 1.442695
    %v1940 = vpow.pop %v1939
    %v1941 = vadd.f32 %v1940, 1.0
    %v1942 = vrcp.pop %v1941
    %v1943 = vmul.f32 1.0, %v1942
    %v1944 = vtanh.pop %v1937
    %v1945 = vmul.f32 %v1943, %v1610
    %1947 = vrot.lane.b32.xlu0 %v1944, 32
    %v1948 = vpop.permute.xlu0 %1947
    %v1950 = vmul.f32 %v1943, %v1948
    %1952 = vrot.lane.b32.xlu0 %v1950, 32
    %v1953 = vpop.permute.xlu0 %1952
    %v1955 = vadd.f32 %v1945, %v1953
    %v1956 = vtanh.pop %v1955
    %1958 = vrot.lane.b32.xlu0 %v1956, 32
    %v1959 = vpop.permute.xlu0 %1958
    %v1961 = vmul.f32 %v1943, %v1959
    %1963 = vrot.lane.b32.xlu0 %v1961, 64
    %v1964 = vpop.permute.xlu0 %1963
    %s1966 = scalar_lea.vmem %s11, 16
    %1967 = vst.msk [vmem:[%s1966] sm:$0xf] %vm587, %v1964
    %v1968 = vsel %vm93, %v1964, 0
    %1970 = vmatprep.subr.mxu0 0.0
    %1971 = vmatpush1.msra.mxu0 %v56
    %1972 = vmatprep.subr.mxu0 0.0
    %1973 = vmatpush1.msra.mxu0 %v57
    %1974 = vmatprep.subr.mxu0 0.0
    %1975 = vmatpush1.msra.mxu0 %v58
    %1976 = vmatprep.subr.mxu0 0.0
    %1977 = vmatpush1.msra.mxu0 %v59
    %1978 = vmatprep.subr.mxu0 0.0
    %1979 = vmatpush1.msra.mxu0 0.0
    %1980 = vmatprep.subr.mxu0 0.0
    %1981 = vmatpush1.msra.mxu0 0.0
    %1982 = vmatprep.subr.mxu0 0.0
    %1983 = vmatpush1.msra.mxu0 0.0
    %1984 = vmatprep.subr.mxu0 0.0
    %1985 = vmatpush1.msra.mxu0 0.0
    %1986 = vmatprep.subr.mxu0 0.0
    %1987 = vmatpush1.msra.mxu0 0.0
    %1988 = vmatprep.subr.mxu0 0.0
    %1989 = vmatpush1.msra.mxu0 0.0
    %1990 = vmatprep.subr.mxu0 0.0
    %1991 = vmatpush1.msra.mxu0 0.0
    %1992 = vmatprep.subr.mxu0 0.0
    %1993 = vmatpush1.msra.mxu0 0.0
    %1994 = vmatprep.subr.mxu0 0.0
    %1995 = vmatpush1.msra.mxu0 0.0
    %1996 = vmatprep.subr.mxu0 0.0
    %1997 = vmatpush1.msra.mxu0 0.0
    %1998 = vmatprep.subr.mxu0 0.0
    %1999 = vmatpush1.msra.mxu0 0.0
    %2000 = vmatprep.subr.mxu0 0.0
    %2001 = vmatpush1.msra.mxu0 0.0
    %2002 = vmatprep.subr.mxu0 0.0
    %2003 = vmatpush1.msra.mxu0 0.0
    %2004 = vmatprep.subr.mxu0 0.0
    %2005 = vmatpush1.msra.mxu0 0.0
    %2006 = vmatprep.subr.mxu0 0.0
    %2007 = vmatpush1.msra.mxu0 0.0
    %2008 = vmatprep.subr.mxu0 0.0
    %2009 = vmatpush1.msra.mxu0 0.0
    %2010 = vmatprep.subr.mxu0 0.0
    %2011 = vmatpush1.msra.mxu0 0.0
    %2012 = vmatprep.subr.mxu0 0.0
    %2013 = vmatpush1.msra.mxu0 0.0
    %2014 = vmatprep.subr.mxu0 0.0
    %2015 = vmatpush1.msra.mxu0 0.0
    %2016 = vmatprep.subr.mxu0 0.0
    %2017 = vmatpush1.msra.mxu0 0.0
    %2018 = vmatprep.subr.mxu0 0.0
    %2019 = vmatpush1.msra.mxu0 0.0
    %2020 = vmatprep.subr.mxu0 0.0
    %2021 = vmatpush1.msra.mxu0 0.0
    %2022 = vmatprep.subr.mxu0 0.0
    %2023 = vmatpush1.msra.mxu0 0.0
    %2024 = vmatprep.subr.mxu0 0.0
    %2025 = vmatpush1.msra.mxu0 0.0
    %2026 = vmatprep.subr.mxu0 0.0
    %2027 = vmatpush1.msra.mxu0 0.0
    %2028 = vmatprep.subr.mxu0 0.0
    %2029 = vmatpush1.msra.mxu0 0.0
    %2030 = vmatprep.subr.mxu0 0.0
    %2031 = vmatpush1.msra.mxu0 0.0
    %2032 = vmatprep.subr.mxu0 0.0
    %2033 = vmatpush1.msra.mxu0 0.0
    %2034 = vmatprep.mubr.f32.mxu0 0.0
    %2035 = vmatmul.mubr.f32.gmra.mrb[0].mxu0 %v1968
    %v2036 = vpop.f32.mrb[0].mxu0
    %v2037 = vadd.f32 %v72, %v2036
    %v2038 = vpop.f32.mrb[0].mxu0
    %2039 = vdwg.mxu0
    %s2040 = scalar_lea.vmem %s12, 16
    %2041 = vst [vmem:[%s2040] sm:$0xf] %v2037
    %2043 = vrot.lane.b32.xlu0 %v1796, 64
    %v2044 = vpop.permute.xlu0 %2043
    %v2045 = vsel %vm93, %v2044, 0
    %2047 = vmatprep.subr.mxu0 0.0
    %2048 = vmatpush1.msra.mxu0 %v44
    %2049 = vmatprep.subr.mxu0 0.0
    %2050 = vmatpush1.msra.mxu0 %v45
    %2051 = vmatprep.subr.mxu0 0.0
    %2052 = vmatpush1.msra.mxu0 %v46
    %2053 = vmatprep.subr.mxu0 0.0
    %2054 = vmatpush1.msra.mxu0 %v47
    %2055 = vmatprep.subr.mxu0 0.0
    %2056 = vmatpush1.msra.mxu0 0.0
    %2057 = vmatprep.subr.mxu0 0.0
    %2058 = vmatpush1.msra.mxu0 0.0
    %2059 = vmatprep.subr.mxu0 0.0
    %2060 = vmatpush1.msra.mxu0 0.0
    %2061 = vmatprep.subr.mxu0 0.0
    %2062 = vmatpush1.msra.mxu0 0.0
    %2063 = vmatprep.subr.mxu0 0.0
    %2064 = vmatpush1.msra.mxu0 0.0
    %2065 = vmatprep.subr.mxu0 0.0
    %2066 = vmatpush1.msra.mxu0 0.0
    %2067 = vmatprep.subr.mxu0 0.0
    %2068 = vmatpush1.msra.mxu0 0.0
    %2069 = vmatprep.subr.mxu0 0.0
    %2070 = vmatpush1.msra.mxu0 0.0
    %2071 = vmatprep.subr.mxu0 0.0
    %2072 = vmatpush1.msra.mxu0 0.0
    %2073 = vmatprep.subr.mxu0 0.0
    %2074 = vmatpush1.msra.mxu0 0.0
    %2075 = vmatprep.subr.mxu0 0.0
    %2076 = vmatpush1.msra.mxu0 0.0
    %2077 = vmatprep.subr.mxu0 0.0
    %2078 = vmatpush1.msra.mxu0 0.0
    %2079 = vmatprep.subr.mxu0 0.0
    %2080 = vmatpush1.msra.mxu0 0.0
    %2081 = vmatprep.subr.mxu0 0.0
    %2082 = vmatpush1.msra.mxu0 0.0
    %2083 = vmatprep.subr.mxu0 0.0
    %2084 = vmatpush1.msra.mxu0 0.0
    %2085 = vmatprep.subr.mxu0 0.0
    %2086 = vmatpush1.msra.mxu0 0.0
    %2087 = vmatprep.subr.mxu0 0.0
    %2088 = vmatpush1.msra.mxu0 0.0
    %2089 = vmatprep.subr.mxu0 0.0
    %2090 = vmatpush1.msra.mxu0 0.0
    %2091 = vmatprep.subr.mxu0 0.0
    %2092 = vmatpush1.msra.mxu0 0.0
    %2093 = vmatprep.subr.mxu0 0.0
    %2094 = vmatpush1.msra.mxu0 0.0
    %2095 = vmatprep.subr.mxu0 0.0
    %2096 = vmatpush1.msra.mxu0 0.0
    %2097 = vmatprep.subr.mxu0 0.0
    %2098 = vmatpush1.msra.mxu0 0.0
    %2099 = vmatprep.subr.mxu0 0.0
    %2100 = vmatpush1.msra.mxu0 0.0
    %2101 = vmatprep.subr.mxu0 0.0
    %2102 = vmatpush1.msra.mxu0 0.0
    %2103 = vmatprep.subr.mxu0 0.0
    %2104 = vmatpush1.msra.mxu0 0.0
    %2105 = vmatprep.subr.mxu0 0.0
    %2106 = vmatpush1.msra.mxu0 0.0
    %2107 = vmatprep.subr.mxu0 0.0
    %2108 = vmatpush1.msra.mxu0 0.0
    %2109 = vmatprep.subr.mxu0 0.0
    %2110 = vmatpush1.msra.mxu0 0.0
    %2111 = vmatprep.mubr.f32.mxu0 0.0
    %2112 = vmatmul.mubr.f32.gmra.mrb[0].mxu0 %v2045
    %v2113 = vpop.f32.mrb[0].mxu0
    %v2114 = vadd.f32 0.0, %v2113
    %v2115 = vpop.f32.mrb[0].mxu0
    %2116 = vdwg.mxu0
    %v2117 = vadd.f32 %v188, %v2114
    %v2118 = vxor.u32 %v2117, 2147483648
    %v2119 = vmul.f32 %v2118, 1.442695
    %v2120 = vpow.pop %v2119
    %v2121 = vadd.f32 %v2120, 1.0
    %v2122 = vrcp.pop %v2121
    %v2123 = vmul.f32 1.0, %v2122
    %v2124 = vtanh.pop %v2117
    %v2125 = vmul.f32 %v2123, %v1790
    %2127 = vrot.lane.b32.xlu0 %v2124, 32
    %v2128 = vpop.permute.xlu0 %2127
    %v2130 = vmul.f32 %v2123, %v2128
    %2132 = vrot.lane.b32.xlu0 %v2130, 32
    %v2133 = vpop.permute.xlu0 %2132
    %v2135 = vadd.f32 %v2125, %v2133
    %v2136 = vtanh.pop %v2135
    %2138 = vrot.lane.b32.xlu0 %v2136, 32
    %v2139 = vpop.permute.xlu0 %2138
    %v2141 = vmul.f32 %v2123, %v2139
    %2142 = vmatprep.subr.mxu0 0.0
    %2143 = vmatpush1.msra.mxu0 %v52
    %2144 = vmatprep.subr.mxu0 0.0
    %2145 = vmatpush1.msra.mxu0 %v53
    %2146 = vmatprep.subr.mxu0 0.0
    %2147 = vmatpush1.msra.mxu0 %v54
    %2148 = vmatprep.subr.mxu0 0.0
    %2149 = vmatpush1.msra.mxu0 %v55
    %2150 = vmatprep.subr.mxu0 0.0
    %2151 = vmatpush1.msra.mxu0 0.0
    %2152 = vmatprep.subr.mxu0 0.0
    %2153 = vmatpush1.msra.mxu0 0.0
    %2154 = vmatprep.subr.mxu0 0.0
    %2155 = vmatpush1.msra.mxu0 0.0
    %2156 = vmatprep.subr.mxu0 0.0
    %2157 = vmatpush1.msra.mxu0 0.0
    %2158 = vmatprep.subr.mxu0 0.0
    %2159 = vmatpush1.msra.mxu0 0.0
    %2160 = vmatprep.subr.mxu0 0.0
    %2161 = vmatpush1.msra.mxu0 0.0
    %2162 = vmatprep.subr.mxu0 0.0
    %2163 = vmatpush1.msra.mxu0 0.0
    %2164 = vmatprep.subr.mxu0 0.0
    %2165 = vmatpush1.msra.mxu0 0.0
    %2166 = vmatprep.subr.mxu0 0.0
    %2167 = vmatpush1.msra.mxu0 0.0
    %2168 = vmatprep.subr.mxu0 0.0
    %2169 = vmatpush1.msra.mxu0 0.0
    %2170 = vmatprep.subr.mxu0 0.0
    %2171 = vmatpush1.msra.mxu0 0.0
    %2172 = vmatprep.subr.mxu0 0.0
    %2173 = vmatpush1.msra.mxu0 0.0
    %2174 = vmatprep.subr.mxu0 0.0
    %2175 = vmatpush1.msra.mxu0 0.0
    %2176 = vmatprep.subr.mxu0 0.0
    %2177 = vmatpush1.msra.mxu0 0.0
    %2178 = vmatprep.subr.mxu0 0.0
    %2179 = vmatpush1.msra.mxu0 0.0
    %2180 = vmatprep.subr.mxu0 0.0
    %2181 = vmatpush1.msra.mxu0 0.0
    %2182 = vmatprep.subr.mxu0 0.0
    %2183 = vmatpush1.msra.mxu0 0.0
    %2184 = vmatprep.subr.mxu0 0.0
    %2185 = vmatpush1.msra.mxu0 0.0
    %2186 = vmatprep.subr.mxu0 0.0
    %2187 = vmatpush1.msra.mxu0 0.0
    %2188 = vmatprep.subr.mxu0 0.0
    %2189 = vmatpush1.msra.mxu0 0.0
    %2190 = vmatprep.subr.mxu0 0.0
    %2191 = vmatpush1.msra.mxu0 0.0
    %2192 = vmatprep.subr.mxu0 0.0
    %2193 = vmatpush1.msra.mxu0 0.0
    %2194 = vmatprep.subr.mxu0 0.0
    %2195 = vmatpush1.msra.mxu0 0.0
    %2196 = vmatprep.subr.mxu0 0.0
    %2197 = vmatpush1.msra.mxu0 0.0
    %2198 = vmatprep.subr.mxu0 0.0
    %2199 = vmatpush1.msra.mxu0 0.0
    %2200 = vmatprep.subr.mxu0 0.0
    %2201 = vmatpush1.msra.mxu0 0.0
    %2202 = vmatprep.subr.mxu0 0.0
    %2203 = vmatpush1.msra.mxu0 0.0
    %2204 = vmatprep.subr.mxu0 0.0
    %2205 = vmatpush1.msra.mxu0 0.0
    %2206 = vmatprep.mubr.f32.mxu0 0.0
    %2207 = vmatmul.mubr.f32.gmra.mrb[0].mxu0 %v1968
    %v2208 = vpop.f32.mrb[0].mxu0
    %v2209 = vadd.f32 0.0, %v2208
    %v2210 = vpop.f32.mrb[0].mxu0
    %2211 = vdwg.mxu0
    %2212 = vmatprep.subr.mxu0 0.0
    %2213 = vmatpush1.msra.mxu0 %v48
    %2214 = vmatprep.subr.mxu0 0.0
    %2215 = vmatpush1.msra.mxu0 %v49
    %2216 = vmatprep.subr.mxu0 0.0
    %2217 = vmatpush1.msra.mxu0 %v50
    %2218 = vmatprep.subr.mxu0 0.0
    %2219 = vmatpush1.msra.mxu0 %v51
    %2220 = vmatprep.subr.mxu0 0.0
    %2221 = vmatpush1.msra.mxu0 0.0
    %2222 = vmatprep.subr.mxu0 0.0
    %2223 = vmatpush1.msra.mxu0 0.0
    %2224 = vmatprep.subr.mxu0 0.0
    %2225 = vmatpush1.msra.mxu0 0.0
    %2226 = vmatprep.subr.mxu0 0.0
    %2227 = vmatpush1.msra.mxu0 0.0
    %2228 = vmatprep.subr.mxu0 0.0
    %2229 = vmatpush1.msra.mxu0 0.0
    %2230 = vmatprep.subr.mxu0 0.0
    %2231 = vmatpush1.msra.mxu0 0.0
    %2232 = vmatprep.subr.mxu0 0.0
    %2233 = vmatpush1.msra.mxu0 0.0
    %2234 = vmatprep.subr.mxu0 0.0
    %2235 = vmatpush1.msra.mxu0 0.0
    %2236 = vmatprep.subr.mxu0 0.0
    %2237 = vmatpush1.msra.mxu0 0.0
    %2238 = vmatprep.subr.mxu0 0.0
    %2239 = vmatpush1.msra.mxu0 0.0
    %2240 = vmatprep.subr.mxu0 0.0
    %2241 = vmatpush1.msra.mxu0 0.0
    %2242 = vmatprep.subr.mxu0 0.0
    %2243 = vmatpush1.msra.mxu0 0.0
    %2244 = vmatprep.subr.mxu0 0.0
    %2245 = vmatpush1.msra.mxu0 0.0
    %2246 = vmatprep.subr.mxu0 0.0
    %2247 = vmatpush1.msra.mxu0 0.0
    %2248 = vmatprep.subr.mxu0 0.0
    %2249 = vmatpush1.msra.mxu0 0.0
    %2250 = vmatprep.subr.mxu0 0.0
    %2251 = vmatpush1.msra.mxu0 0.0
    %2252 = vmatprep.subr.mxu0 0.0
    %2253 = vmatpush1.msra.mxu0 0.0
    %2254 = vmatprep.subr.mxu0 0.0
    %2255 = vmatpush1.msra.mxu0 0.0
    %2256 = vmatprep.subr.mxu0 0.0
    %2257 = vmatpush1.msra.mxu0 0.0
    %2258 = vmatprep.subr.mxu0 0.0
    %2259 = vmatpush1.msra.mxu0 0.0
    %2260 = vmatprep.subr.mxu0 0.0
    %2261 = vmatpush1.msra.mxu0 0.0
    %2262 = vmatprep.subr.mxu0 0.0
    %2263 = vmatpush1.msra.mxu0 0.0
    %2264 = vmatprep.subr.mxu0 0.0
    %2265 = vmatpush1.msra.mxu0 0.0
    %2266 = vmatprep.subr.mxu0 0.0
    %2267 = vmatpush1.msra.mxu0 0.0
    %2268 = vmatprep.subr.mxu0 0.0
    %2269 = vmatpush1.msra.mxu0 0.0
    %2270 = vmatprep.subr.mxu0 0.0
    %2271 = vmatpush1.msra.mxu0 0.0
    %2272 = vmatprep.subr.mxu0 0.0
    %2273 = vmatpush1.msra.mxu0 0.0
    %2274 = vmatprep.subr.mxu0 0.0
    %2275 = vmatpush1.msra.mxu0 0.0
    %2276 = vmatprep.mubr.f32.mxu0 0.0
    %2277 = vmatmul.mubr.f32.gmra.mrb[0].mxu0 %v2045
    %v2278 = vpop.f32.mrb[0].mxu0
    %v2279 = vadd.f32 %v2209, %v2278
    %v2280 = vpop.f32.mrb[0].mxu0
    %2281 = vdwg.mxu0
    %v2282 = vadd.f32 %v2279, %v65
    %v2283 = vxor.u32 %v2282, 2147483648
    %v2284 = vmul.f32 %v2283, 1.442695
    %v2285 = vpow.pop %v2284
    %v2286 = vadd.f32 %v2285, 1.0
    %v2287 = vrcp.pop %v2286
    %v2288 = vmul.f32 1.0, %v2287
    %v2289 = vtanh.pop %v2282
    %v2290 = vmul.f32 %v2288, %v1955
    %2292 = vrot.lane.b32.xlu0 %v2289, 32
    %v2293 = vpop.permute.xlu0 %2292
    %v2295 = vmul.f32 %v2288, %v2293
    %2297 = vrot.lane.b32.xlu0 %v2295, 32
    %v2298 = vpop.permute.xlu0 %2297
    %v2300 = vadd.f32 %v2290, %v2298
    %v2301 = vtanh.pop %v2300
    %2303 = vrot.lane.b32.xlu0 %v2301, 32
    %v2304 = vpop.permute.xlu0 %2303
    %v2306 = vmul.f32 %v2288, %v2304
    %2308 = vrot.lane.b32.xlu0 %v2306, 64
    %v2309 = vpop.permute.xlu0 %2308
    %s2311 = scalar_lea.vmem %s11, 20
    %2312 = vst.msk [vmem:[%s2311] sm:$0xf] %vm587, %v2309
    %v2313 = vsel %vm93, %v2309, 0
    %2315 = vmatprep.subr.mxu0 0.0
    %2316 = vmatpush1.msra.mxu0 %v56
    %2317 = vmatprep.subr.mxu0 0.0
    %2318 = vmatpush1.msra.mxu0 %v57
    %2319 = vmatprep.subr.mxu0 0.0
    %2320 = vmatpush1.msra.mxu0 %v58
    %2321 = vmatprep.subr.mxu0 0.0
    %2322 = vmatpush1.msra.mxu0 %v59
    %2323 = vmatprep.subr.mxu0 0.0
    %2324 = vmatpush1.msra.mxu0 0.0
    %2325 = vmatprep.subr.mxu0 0.0
    %2326 = vmatpush1.msra.mxu0 0.0
    %2327 = vmatprep.subr.mxu0 0.0
    %2328 = vmatpush1.msra.mxu0 0.0
    %2329 = vmatprep.subr.mxu0 0.0
    %2330 = vmatpush1.msra.mxu0 0.0
    %2331 = vmatprep.subr.mxu0 0.0
    %2332 = vmatpush1.msra.mxu0 0.0
    %2333 = vmatprep.subr.mxu0 0.0
    %2334 = vmatpush1.msra.mxu0 0.0
    %2335 = vmatprep.subr.mxu0 0.0
    %2336 = vmatpush1.msra.mxu0 0.0
    %2337 = vmatprep.subr.mxu0 0.0
    %2338 = vmatpush1.msra.mxu0 0.0
    %2339 = vmatprep.subr.mxu0 0.0
    %2340 = vmatpush1.msra.mxu0 0.0
    %2341 = vmatprep.subr.mxu0 0.0
    %2342 = vmatpush1.msra.mxu0 0.0
    %2343 = vmatprep.subr.mxu0 0.0
    %2344 = vmatpush1.msra.mxu0 0.0
    %2345 = vmatprep.subr.mxu0 0.0
    %2346 = vmatpush1.msra.mxu0 0.0
    %2347 = vmatprep.subr.mxu0 0.0
    %2348 = vmatpush1.msra.mxu0 0.0
    %2349 = vmatprep.subr.mxu0 0.0
    %2350 = vmatpush1.msra.mxu0 0.0
    %2351 = vmatprep.subr.mxu0 0.0
    %2352 = vmatpush1.msra.mxu0 0.0
    %2353 = vmatprep.subr.mxu0 0.0
    %2354 = vmatpush1.msra.mxu0 0.0
    %2355 = vmatprep.subr.mxu0 0.0
    %2356 = vmatpush1.msra.mxu0 0.0
    %2357 = vmatprep.subr.mxu0 0.0
    %2358 = vmatpush1.msra.mxu0 0.0
    %2359 = vmatprep.subr.mxu0 0.0
    %2360 = vmatpush1.msra.mxu0 0.0
    %2361 = vmatprep.subr.mxu0 0.0
    %2362 = vmatpush1.msra.mxu0 0.0
    %2363 = vmatprep.subr.mxu0 0.0
    %2364 = vmatpush1.msra.mxu0 0.0
    %2365 = vmatprep.subr.mxu0 0.0
    %2366 = vmatpush1.msra.mxu0 0.0
    %2367 = vmatprep.subr.mxu0 0.0
    %2368 = vmatpush1.msra.mxu0 0.0
    %2369 = vmatprep.subr.mxu0 0.0
    %2370 = vmatpush1.msra.mxu0 0.0
    %2371 = vmatprep.subr.mxu0 0.0
    %2372 = vmatpush1.msra.mxu0 0.0
    %2373 = vmatprep.subr.mxu0 0.0
    %2374 = vmatpush1.msra.mxu0 0.0
    %2375 = vmatprep.subr.mxu0 0.0
    %2376 = vmatpush1.msra.mxu0 0.0
    %2377 = vmatprep.subr.mxu0 0.0
    %2378 = vmatpush1.msra.mxu0 0.0
    %2379 = vmatprep.mubr.f32.mxu0 0.0
    %2380 = vmatmul.mubr.f32.gmra.mrb[0].mxu0 %v2313
    %v2381 = vpop.f32.mrb[0].mxu0
    %v2382 = vadd.f32 %v72, %v2381
    %v2383 = vpop.f32.mrb[0].mxu0
    %2384 = vdwg.mxu0
    %s2385 = scalar_lea.vmem %s12, 20
    %2386 = vst [vmem:[%s2385] sm:$0xf] %v2382
    %2388 = vrot.lane.b32.xlu0 %v2141, 64
    %v2389 = vpop.permute.xlu0 %2388
    %v2390 = vsel %vm93, %v2389, 0
    %2392 = vmatprep.subr.mxu0 0.0
    %2393 = vmatpush1.msra.mxu0 %v44
    %2394 = vmatprep.subr.mxu0 0.0
    %2395 = vmatpush1.msra.mxu0 %v45
    %2396 = vmatprep.subr.mxu0 0.0
    %2397 = vmatpush1.msra.mxu0 %v46
    %2398 = vmatprep.subr.mxu0 0.0
    %2399 = vmatpush1.msra.mxu0 %v47
    %2400 = vmatprep.subr.mxu0 0.0
    %2401 = vmatpush1.msra.mxu0 0.0
    %2402 = vmatprep.subr.mxu0 0.0
    %2403 = vmatpush1.msra.mxu0 0.0
    %2404 = vmatprep.subr.mxu0 0.0
    %2405 = vmatpush1.msra.mxu0 0.0
    %2406 = vmatprep.subr.mxu0 0.0
    %2407 = vmatpush1.msra.mxu0 0.0
    %2408 = vmatprep.subr.mxu0 0.0
    %2409 = vmatpush1.msra.mxu0 0.0
    %2410 = vmatprep.subr.mxu0 0.0
    %2411 = vmatpush1.msra.mxu0 0.0
    %2412 = vmatprep.subr.mxu0 0.0
    %2413 = vmatpush1.msra.mxu0 0.0
    %2414 = vmatprep.subr.mxu0 0.0
    %2415 = vmatpush1.msra.mxu0 0.0
    %2416 = vmatprep.subr.mxu0 0.0
    %2417 = vmatpush1.msra.mxu0 0.0
    %2418 = vmatprep.subr.mxu0 0.0
    %2419 = vmatpush1.msra.mxu0 0.0
    %2420 = vmatprep.subr.mxu0 0.0
    %2421 = vmatpush1.msra.mxu0 0.0
    %2422 = vmatprep.subr.mxu0 0.0
    %2423 = vmatpush1.msra.mxu0 0.0
    %2424 = vmatprep.subr.mxu0 0.0
    %2425 = vmatpush1.msra.mxu0 0.0
    %2426 = vmatprep.subr.mxu0 0.0
    %2427 = vmatpush1.msra.mxu0 0.0
    %2428 = vmatprep.subr.mxu0 0.0
    %2429 = vmatpush1.msra.mxu0 0.0
    %2430 = vmatprep.subr.mxu0 0.0
    %2431 = vmatpush1.msra.mxu0 0.0
    %2432 = vmatprep.subr.mxu0 0.0
    %2433 = vmatpush1.msra.mxu0 0.0
    %2434 = vmatprep.subr.mxu0 0.0
    %2435 = vmatpush1.msra.mxu0 0.0
    %2436 = vmatprep.subr.mxu0 0.0
    %2437 = vmatpush1.msra.mxu0 0.0
    %2438 = vmatprep.subr.mxu0 0.0
    %2439 = vmatpush1.msra.mxu0 0.0
    %2440 = vmatprep.subr.mxu0 0.0
    %2441 = vmatpush1.msra.mxu0 0.0
    %2442 = vmatprep.subr.mxu0 0.0
    %2443 = vmatpush1.msra.mxu0 0.0
    %2444 = vmatprep.subr.mxu0 0.0
    %2445 = vmatpush1.msra.mxu0 0.0
    %2446 = vmatprep.subr.mxu0 0.0
    %2447 = vmatpush1.msra.mxu0 0.0
    %2448 = vmatprep.subr.mxu0 0.0
    %2449 = vmatpush1.msra.mxu0 0.0
    %2450 = vmatprep.subr.mxu0 0.0
    %2451 = vmatpush1.msra.mxu0 0.0
    %2452 = vmatprep.subr.mxu0 0.0
    %2453 = vmatpush1.msra.mxu0 0.0
    %2454 = vmatprep.subr.mxu0 0.0
    %2455 = vmatpush1.msra.mxu0 0.0
    %2456 = vmatprep.mubr.f32.mxu0 0.0
    %2457 = vmatmul.mubr.f32.gmra.mrb[0].mxu0 %v2390
    %v2458 = vpop.f32.mrb[0].mxu0
    %v2459 = vadd.f32 0.0, %v2458
    %v2460 = vpop.f32.mrb[0].mxu0
    %2461 = vdwg.mxu0
    %v2462 = vadd.f32 %v198, %v2459
    %v2463 = vxor.u32 %v2462, 2147483648
    %v2464 = vmul.f32 %v2463, 1.442695
    %v2465 = vpow.pop %v2464
    %v2466 = vadd.f32 %v2465, 1.0
    %v2467 = vrcp.pop %v2466
    %v2468 = vmul.f32 1.0, %v2467
    %v2469 = vtanh.pop %v2462
    %v2470 = vmul.f32 %v2468, %v2135
    %2472 = vrot.lane.b32.xlu0 %v2469, 32
    %v2473 = vpop.permute.xlu0 %2472
    %v2475 = vmul.f32 %v2468, %v2473
    %2477 = vrot.lane.b32.xlu0 %v2475, 32
    %v2478 = vpop.permute.xlu0 %2477
    %v2480 = vadd.f32 %v2470, %v2478
    %v2481 = vtanh.pop %v2480
    %2483 = vrot.lane.b32.xlu0 %v2481, 32
    %v2484 = vpop.permute.xlu0 %2483
    %v2486 = vmul.f32 %v2468, %v2484
    %2487 = vmatprep.subr.mxu0 0.0
    %2488 = vmatpush1.msra.mxu0 %v52
    %2489 = vmatprep.subr.mxu0 0.0
    %2490 = vmatpush1.msra.mxu0 %v53
    %2491 = vmatprep.subr.mxu0 0.0
    %2492 = vmatpush1.msra.mxu0 %v54
    %2493 = vmatprep.subr.mxu0 0.0
    %2494 = vmatpush1.msra.mxu0 %v55
    %2495 = vmatprep.subr.mxu0 0.0
    %2496 = vmatpush1.msra.mxu0 0.0
    %2497 = vmatprep.subr.mxu0 0.0
    %2498 = vmatpush1.msra.mxu0 0.0
    %2499 = vmatprep.subr.mxu0 0.0
    %2500 = vmatpush1.msra.mxu0 0.0
    %2501 = vmatprep.subr.mxu0 0.0
    %2502 = vmatpush1.msra.mxu0 0.0
    %2503 = vmatprep.subr.mxu0 0.0
    %2504 = vmatpush1.msra.mxu0 0.0
    %2505 = vmatprep.subr.mxu0 0.0
    %2506 = vmatpush1.msra.mxu0 0.0
    %2507 = vmatprep.subr.mxu0 0.0
    %2508 = vmatpush1.msra.mxu0 0.0
    %2509 = vmatprep.subr.mxu0 0.0
    %2510 = vmatpush1.msra.mxu0 0.0
    %2511 = vmatprep.subr.mxu0 0.0
    %2512 = vmatpush1.msra.mxu0 0.0
    %2513 = vmatprep.subr.mxu0 0.0
    %2514 = vmatpush1.msra.mxu0 0.0
    %2515 = vmatprep.subr.mxu0 0.0
    %2516 = vmatpush1.msra.mxu0 0.0
    %2517 = vmatprep.subr.mxu0 0.0
    %2518 = vmatpush1.msra.mxu0 0.0
    %2519 = vmatprep.subr.mxu0 0.0
    %2520 = vmatpush1.msra.mxu0 0.0
    %2521 = vmatprep.subr.mxu0 0.0
    %2522 = vmatpush1.msra.mxu0 0.0
    %2523 = vmatprep.subr.mxu0 0.0
    %2524 = vmatpush1.msra.mxu0 0.0
    %2525 = vmatprep.subr.mxu0 0.0
    %2526 = vmatpush1.msra.mxu0 0.0
    %2527 = vmatprep.subr.mxu0 0.0
    %2528 = vmatpush1.msra.mxu0 0.0
    %2529 = vmatprep.subr.mxu0 0.0
    %2530 = vmatpush1.msra.mxu0 0.0
    %2531 = vmatprep.subr.mxu0 0.0
    %2532 = vmatpush1.msra.mxu0 0.0
    %2533 = vmatprep.subr.mxu0 0.0
    %2534 = vmatpush1.msra.mxu0 0.0
    %2535 = vmatprep.subr.mxu0 0.0
    %2536 = vmatpush1.msra.mxu0 0.0
    %2537 = vmatprep.subr.mxu0 0.0
    %2538 = vmatpush1.msra.mxu0 0.0
    %2539 = vmatprep.subr.mxu0 0.0
    %2540 = vmatpush1.msra.mxu0 0.0
    %2541 = vmatprep.subr.mxu0 0.0
    %2542 = vmatpush1.msra.mxu0 0.0
    %2543 = vmatprep.subr.mxu0 0.0
    %2544 = vmatpush1.msra.mxu0 0.0
    %2545 = vmatprep.subr.mxu0 0.0
    %2546 = vmatpush1.msra.mxu0 0.0
    %2547 = vmatprep.subr.mxu0 0.0
    %2548 = vmatpush1.msra.mxu0 0.0
    %2549 = vmatprep.subr.mxu0 0.0
    %2550 = vmatpush1.msra.mxu0 0.0
    %2551 = vmatprep.mubr.f32.mxu0 0.0
    %2552 = vmatmul.mubr.f32.gmra.mrb[0].mxu0 %v2313
    %v2553 = vpop.f32.mrb[0].mxu0
    %v2554 = vadd.f32 0.0, %v2553
    %v2555 = vpop.f32.mrb[0].mxu0
    %2556 = vdwg.mxu0
    %2557 = vmatprep.subr.mxu0 0.0
    %2558 = vmatpush1.msra.mxu0 %v48
    %2559 = vmatprep.subr.mxu0 0.0
    %2560 = vmatpush1.msra.mxu0 %v49
    %2561 = vmatprep.subr.mxu0 0.0
    %2562 = vmatpush1.msra.mxu0 %v50
    %2563 = vmatprep.subr.mxu0 0.0
    %2564 = vmatpush1.msra.mxu0 %v51
    %2565 = vmatprep.subr.mxu0 0.0
    %2566 = vmatpush1.msra.mxu0 0.0
    %2567 = vmatprep.subr.mxu0 0.0
    %2568 = vmatpush1.msra.mxu0 0.0
    %2569 = vmatprep.subr.mxu0 0.0
    %2570 = vmatpush1.msra.mxu0 0.0
    %2571 = vmatprep.subr.mxu0 0.0
    %2572 = vmatpush1.msra.mxu0 0.0
    %2573 = vmatprep.subr.mxu0 0.0
    %2574 = vmatpush1.msra.mxu0 0.0
    %2575 = vmatprep.subr.mxu0 0.0
    %2576 = vmatpush1.msra.mxu0 0.0
    %2577 = vmatprep.subr.mxu0 0.0
    %2578 = vmatpush1.msra.mxu0 0.0
    %2579 = vmatprep.subr.mxu0 0.0
    %2580 = vmatpush1.msra.mxu0 0.0
    %2581 = vmatprep.subr.mxu0 0.0
    %2582 = vmatpush1.msra.mxu0 0.0
    %2583 = vmatprep.subr.mxu0 0.0
    %2584 = vmatpush1.msra.mxu0 0.0
    %2585 = vmatprep.subr.mxu0 0.0
    %2586 = vmatpush1.msra.mxu0 0.0
    %2587 = vmatprep.subr.mxu0 0.0
    %2588 = vmatpush1.msra.mxu0 0.0
    %2589 = vmatprep.subr.mxu0 0.0
    %2590 = vmatpush1.msra.mxu0 0.0
    %2591 = vmatprep.subr.mxu0 0.0
    %2592 = vmatpush1.msra.mxu0 0.0
    %2593 = vmatprep.subr.mxu0 0.0
    %2594 = vmatpush1.msra.mxu0 0.0
    %2595 = vmatprep.subr.mxu0 0.0
    %2596 = vmatpush1.msra.mxu0 0.0
    %2597 = vmatprep.subr.mxu0 0.0
    %2598 = vmatpush1.msra.mxu0 0.0
    %2599 = vmatprep.subr.mxu0 0.0
    %2600 = vmatpush1.msra.mxu0 0.0
    %2601 = vmatprep.subr.mxu0 0.0
    %2602 = vmatpush1.msra.mxu0 0.0
    %2603 = vmatprep.subr.mxu0 0.0
    %2604 = vmatpush1.msra.mxu0 0.0
    %2605 = vmatprep.subr.mxu0 0.0
    %2606 = vmatpush1.msra.mxu0 0.0
    %2607 = vmatprep.subr.mxu0 0.0
    %2608 = vmatpush1.msra.mxu0 0.0
    %2609 = vmatprep.subr.mxu0 0.0
    %2610 = vmatpush1.msra.mxu0 0.0
    %2611 = vmatprep.subr.mxu0 0.0
    %2612 = vmatpush1.msra.mxu0 0.0
    %2613 = vmatprep.subr.mxu0 0.0
    %2614 = vmatpush1.msra.mxu0 0.0
    %2615 = vmatprep.subr.mxu0 0.0
    %2616 = vmatpush1.msra.mxu0 0.0
    %2617 = vmatprep.subr.mxu0 0.0
    %2618 = vmatpush1.msra.mxu0 0.0
    %2619 = vmatprep.subr.mxu0 0.0
    %2620 = vmatpush1.msra.mxu0 0.0
    %2621 = vmatprep.mubr.f32.mxu0 0.0
    %2622 = vmatmul.mubr.f32.gmra.mrb[0].mxu0 %v2390
    %v2623 = vpop.f32.mrb[0].mxu0
    %v2624 = vadd.f32 %v2554, %v2623
    %v2625 = vpop.f32.mrb[0].mxu0
    %2626 = vdwg.mxu0
    %v2627 = vadd.f32 %v2624, %v65
    %v2628 = vxor.u32 %v2627, 2147483648
    %v2629 = vmul.f32 %v2628, 1.442695
    %v2630 = vpow.pop %v2629
    %v2631 = vadd.f32 %v2630, 1.0
    %v2632 = vrcp.pop %v2631
    %v2633 = vmul.f32 1.0, %v2632
    %v2634 = vtanh.pop %v2627
    %v2635 = vmul.f32 %v2633, %v2300
    %2637 = vrot.lane.b32.xlu0 %v2634, 32
    %v2638 = vpop.permute.xlu0 %2637
    %v2640 = vmul.f32 %v2633, %v2638
    %2642 = vrot.lane.b32.xlu0 %v2640, 32
    %v2643 = vpop.permute.xlu0 %2642
    %v2645 = vadd.f32 %v2635, %v2643
    %v2646 = vtanh.pop %v2645
    %2648 = vrot.lane.b32.xlu0 %v2646, 32
    %v2649 = vpop.permute.xlu0 %2648
    %v2651 = vmul.f32 %v2633, %v2649
    %2653 = vrot.lane.b32.xlu0 %v2651, 64
    %v2654 = vpop.permute.xlu0 %2653
    %s2656 = scalar_lea.vmem %s11, 24
    %2657 = vst.msk [vmem:[%s2656] sm:$0xf] %vm587, %v2654
    %v2658 = vsel %vm93, %v2654, 0
    %2660 = vmatprep.subr.mxu0 0.0
    %2661 = vmatpush1.msra.mxu0 %v56
    %2662 = vmatprep.subr.mxu0 0.0
    %2663 = vmatpush1.msra.mxu0 %v57
    %2664 = vmatprep.subr.mxu0 0.0
    %2665 = vmatpush1.msra.mxu0 %v58
    %2666 = vmatprep.subr.mxu0 0.0
    %2667 = vmatpush1.msra.mxu0 %v59
    %2668 = vmatprep.subr.mxu0 0.0
    %2669 = vmatpush1.msra.mxu0 0.0
    %2670 = vmatprep.subr.mxu0 0.0
    %2671 = vmatpush1.msra.mxu0 0.0
    %2672 = vmatprep.subr.mxu0 0.0
    %2673 = vmatpush1.msra.mxu0 0.0
    %2674 = vmatprep.subr.mxu0 0.0
    %2675 = vmatpush1.msra.mxu0 0.0
    %2676 = vmatprep.subr.mxu0 0.0
    %2677 = vmatpush1.msra.mxu0 0.0
    %2678 = vmatprep.subr.mxu0 0.0
    %2679 = vmatpush1.msra.mxu0 0.0
    %2680 = vmatprep.subr.mxu0 0.0
    %2681 = vmatpush1.msra.mxu0 0.0
    %2682 = vmatprep.subr.mxu0 0.0
    %2683 = vmatpush1.msra.mxu0 0.0
    %2684 = vmatprep.subr.mxu0 0.0
    %2685 = vmatpush1.msra.mxu0 0.0
    %2686 = vmatprep.subr.mxu0 0.0
    %2687 = vmatpush1.msra.mxu0 0.0
    %2688 = vmatprep.subr.mxu0 0.0
    %2689 = vmatpush1.msra.mxu0 0.0
    %2690 = vmatprep.subr.mxu0 0.0
    %2691 = vmatpush1.msra.mxu0 0.0
    %2692 = vmatprep.subr.mxu0 0.0
    %2693 = vmatpush1.msra.mxu0 0.0
    %2694 = vmatprep.subr.mxu0 0.0
    %2695 = vmatpush1.msra.mxu0 0.0
    %2696 = vmatprep.subr.mxu0 0.0
    %2697 = vmatpush1.msra.mxu0 0.0
    %2698 = vmatprep.subr.mxu0 0.0
    %2699 = vmatpush1.msra.mxu0 0.0
    %2700 = vmatprep.subr.mxu0 0.0
    %2701 = vmatpush1.msra.mxu0 0.0
    %2702 = vmatprep.subr.mxu0 0.0
    %2703 = vmatpush1.msra.mxu0 0.0
    %2704 = vmatprep.subr.mxu0 0.0
    %2705 = vmatpush1.msra.mxu0 0.0
    %2706 = vmatprep.subr.mxu0 0.0
    %2707 = vmatpush1.msra.mxu0 0.0
    %2708 = vmatprep.subr.mxu0 0.0
    %2709 = vmatpush1.msra.mxu0 0.0
    %2710 = vmatprep.subr.mxu0 0.0
    %2711 = vmatpush1.msra.mxu0 0.0
    %2712 = vmatprep.subr.mxu0 0.0
    %2713 = vmatpush1.msra.mxu0 0.0
    %2714 = vmatprep.subr.mxu0 0.0
    %2715 = vmatpush1.msra.mxu0 0.0
    %2716 = vmatprep.subr.mxu0 0.0
    %2717 = vmatpush1.msra.mxu0 0.0
    %2718 = vmatprep.subr.mxu0 0.0
    %2719 = vmatpush1.msra.mxu0 0.0
    %2720 = vmatprep.subr.mxu0 0.0
    %2721 = vmatpush1.msra.mxu0 0.0
    %2722 = vmatprep.subr.mxu0 0.0
    %2723 = vmatpush1.msra.mxu0 0.0
    %2724 = vmatprep.mubr.f32.mxu0 0.0
    %2725 = vmatmul.mubr.f32.gmra.mrb[0].mxu0 %v2658
    %v2726 = vpop.f32.mrb[0].mxu0
    %v2727 = vadd.f32 %v72, %v2726
    %v2728 = vpop.f32.mrb[0].mxu0
    %2729 = vdwg.mxu0
    %s2730 = scalar_lea.vmem %s12, 24
    %2731 = vst [vmem:[%s2730] sm:$0xf] %v2727
    %2732 = vmatprep.subr.mxu0 0.0
    %2733 = vmatpush1.msra.mxu0 %v52
    %2734 = vmatprep.subr.mxu0 0.0
    %2735 = vmatpush1.msra.mxu0 %v53
    %2736 = vmatprep.subr.mxu0 0.0
    %2737 = vmatpush1.msra.mxu0 %v54
    %2738 = vmatprep.subr.mxu0 0.0
    %2739 = vmatpush1.msra.mxu0 %v55
    %2740 = vmatprep.subr.mxu0 0.0
    %2741 = vmatpush1.msra.mxu0 0.0
    %2742 = vmatprep.subr.mxu0 0.0
    %2743 = vmatpush1.msra.mxu0 0.0
    %2744 = vmatprep.subr.mxu0 0.0
    %2745 = vmatpush1.msra.mxu0 0.0
    %2746 = vmatprep.subr.mxu0 0.0
    %2747 = vmatpush1.msra.mxu0 0.0
    %2748 = vmatprep.subr.mxu0 0.0
    %2749 = vmatpush1.msra.mxu0 0.0
    %2750 = vmatprep.subr.mxu0 0.0
    %2751 = vmatpush1.msra.mxu0 0.0
    %2752 = vmatprep.subr.mxu0 0.0
    %2753 = vmatpush1.msra.mxu0 0.0
    %2754 = vmatprep.subr.mxu0 0.0
    %2755 = vmatpush1.msra.mxu0 0.0
    %2756 = vmatprep.subr.mxu0 0.0
    %2757 = vmatpush1.msra.mxu0 0.0
    %2758 = vmatprep.subr.mxu0 0.0
    %2759 = vmatpush1.msra.mxu0 0.0
    %2760 = vmatprep.subr.mxu0 0.0
    %2761 = vmatpush1.msra.mxu0 0.0
    %2762 = vmatprep.subr.mxu0 0.0
    %2763 = vmatpush1.msra.mxu0 0.0
    %2764 = vmatprep.subr.mxu0 0.0
    %2765 = vmatpush1.msra.mxu0 0.0
    %2766 = vmatprep.subr.mxu0 0.0
    %2767 = vmatpush1.msra.mxu0 0.0
    %2768 = vmatprep.subr.mxu0 0.0
    %2769 = vmatpush1.msra.mxu0 0.0
    %2770 = vmatprep.subr.mxu0 0.0
    %2771 = vmatpush1.msra.mxu0 0.0
    %2772 = vmatprep.subr.mxu0 0.0
    %2773 = vmatpush1.msra.mxu0 0.0
    %2774 = vmatprep.subr.mxu0 0.0
    %2775 = vmatpush1.msra.mxu0 0.0
    %2776 = vmatprep.subr.mxu0 0.0
    %2777 = vmatpush1.msra.mxu0 0.0
    %2778 = vmatprep.subr.mxu0 0.0
    %2779 = vmatpush1.msra.mxu0 0.0
    %2780 = vmatprep.subr.mxu0 0.0
    %2781 = vmatpush1.msra.mxu0 0.0
    %2782 = vmatprep.subr.mxu0 0.0
    %2783 = vmatpush1.msra.mxu0 0.0
    %2784 = vmatprep.subr.mxu0 0.0
    %2785 = vmatpush1.msra.mxu0 0.0
    %2786 = vmatprep.subr.mxu0 0.0
    %2787 = vmatpush1.msra.mxu0 0.0
    %2788 = vmatprep.subr.mxu0 0.0
    %2789 = vmatpush1.msra.mxu0 0.0
    %2790 = vmatprep.subr.mxu0 0.0
    %2791 = vmatpush1.msra.mxu0 0.0
    %2792 = vmatprep.subr.mxu0 0.0
    %2793 = vmatpush1.msra.mxu0 0.0
    %2794 = vmatprep.subr.mxu0 0.0
    %2795 = vmatpush1.msra.mxu0 0.0
    %2796 = vmatprep.mubr.f32.mxu0 0.0
    %2797 = vmatmul.mubr.f32.gmra.mrb[0].mxu0 %v2658
    %v2798 = vpop.f32.mrb[0].mxu0
    %v2799 = vadd.f32 0.0, %v2798
    %v2800 = vpop.f32.mrb[0].mxu0
    %2801 = vdwg.mxu0
    %2803 = vrot.lane.b32.xlu0 %v2486, 64
    %v2804 = vpop.permute.xlu0 %2803
    %v2805 = vsel %vm93, %v2804, 0
    %2807 = vmatprep.subr.mxu0 0.0
    %2808 = vmatpush1.msra.mxu0 %v48
    %2809 = vmatprep.subr.mxu0 0.0
    %2810 = vmatpush1.msra.mxu0 %v49
    %2811 = vmatprep.subr.mxu0 0.0
    %2812 = vmatpush1.msra.mxu0 %v50
    %2813 = vmatprep.subr.mxu0 0.0
    %2814 = vmatpush1.msra.mxu0 %v51
    %2815 = vmatprep.subr.mxu0 0.0
    %2816 = vmatpush1.msra.mxu0 0.0
    %2817 = vmatprep.subr.mxu0 0.0
    %2818 = vmatpush1.msra.mxu0 0.0
    %2819 = vmatprep.subr.mxu0 0.0
    %2820 = vmatpush1.msra.mxu0 0.0
    %2821 = vmatprep.subr.mxu0 0.0
    %2822 = vmatpush1.msra.mxu0 0.0
    %2823 = vmatprep.subr.mxu0 0.0
    %2824 = vmatpush1.msra.mxu0 0.0
    %2825 = vmatprep.subr.mxu0 0.0
    %2826 = vmatpush1.msra.mxu0 0.0
    %2827 = vmatprep.subr.mxu0 0.0
    %2828 = vmatpush1.msra.mxu0 0.0
    %2829 = vmatprep.subr.mxu0 0.0
    %2830 = vmatpush1.msra.mxu0 0.0
    %2831 = vmatprep.subr.mxu0 0.0
    %2832 = vmatpush1.msra.mxu0 0.0
    %2833 = vmatprep.subr.mxu0 0.0
    %2834 = vmatpush1.msra.mxu0 0.0
    %2835 = vmatprep.subr.mxu0 0.0
    %2836 = vmatpush1.msra.mxu0 0.0
    %2837 = vmatprep.subr.mxu0 0.0
    %2838 = vmatpush1.msra.mxu0 0.0
    %2839 = vmatprep.subr.mxu0 0.0
    %2840 = vmatpush1.msra.mxu0 0.0
    %2841 = vmatprep.subr.mxu0 0.0
    %2842 = vmatpush1.msra.mxu0 0.0
    %2843 = vmatprep.subr.mxu0 0.0
    %2844 = vmatpush1.msra.mxu0 0.0
    %2845 = vmatprep.subr.mxu0 0.0
    %2846 = vmatpush1.msra.mxu0 0.0
    %2847 = vmatprep.subr.mxu0 0.0
    %2848 = vmatpush1.msra.mxu0 0.0
    %2849 = vmatprep.subr.mxu0 0.0
    %2850 = vmatpush1.msra.mxu0 0.0
    %2851 = vmatprep.subr.mxu0 0.0
    %2852 = vmatpush1.msra.mxu0 0.0
    %2853 = vmatprep.subr.mxu0 0.0
    %2854 = vmatpush1.msra.mxu0 0.0
    %2855 = vmatprep.subr.mxu0 0.0
    %2856 = vmatpush1.msra.mxu0 0.0
    %2857 = vmatprep.subr.mxu0 0.0
    %2858 = vmatpush1.msra.mxu0 0.0
    %2859 = vmatprep.subr.mxu0 0.0
    %2860 = vmatpush1.msra.mxu0 0.0
    %2861 = vmatprep.subr.mxu0 0.0
    %2862 = vmatpush1.msra.mxu0 0.0
    %2863 = vmatprep.subr.mxu0 0.0
    %2864 = vmatpush1.msra.mxu0 0.0
    %2865 = vmatprep.subr.mxu0 0.0
    %2866 = vmatpush1.msra.mxu0 0.0
    %2867 = vmatprep.subr.mxu0 0.0
    %2868 = vmatpush1.msra.mxu0 0.0
    %2869 = vmatprep.subr.mxu0 0.0
    %2870 = vmatpush1.msra.mxu0 0.0
    %2871 = vmatprep.mubr.f32.mxu0 0.0
    %2872 = vmatmul.mubr.f32.gmra.mrb[0].mxu0 %v2805
    %v2873 = vpop.f32.mrb[0].mxu0
    %v2874 = vadd.f32 %v2799, %v2873
    %v2875 = vpop.f32.mrb[0].mxu0
    %2876 = vdwg.mxu0
    %v2877 = vadd.f32 %v2874, %v65
    %v2878 = vxor.u32 %v2877, 2147483648
    %v2879 = vmul.f32 %v2878, 1.442695
    %v2880 = vpow.pop %v2879
    %v2881 = vadd.f32 %v2880, 1.0
    %v2882 = vrcp.pop %v2881
    %v2883 = vmul.f32 1.0, %v2882
    %v2884 = vtanh.pop %v2877
    %v2885 = vmul.f32 %v2883, %v2645
    %2887 = vrot.lane.b32.xlu0 %v2884, 32
    %v2888 = vpop.permute.xlu0 %2887
    %v2890 = vmul.f32 %v2883, %v2888
    %2892 = vrot.lane.b32.xlu0 %v2890, 32
    %v2893 = vpop.permute.xlu0 %2892
    %v2895 = vadd.f32 %v2885, %v2893
    %v2896 = vtanh.pop %v2895
    %2898 = vrot.lane.b32.xlu0 %v2896, 32
    %v2899 = vpop.permute.xlu0 %2898
    %v2901 = vmul.f32 %v2883, %v2899
    %2903 = vrot.lane.b32.xlu0 %v2901, 64
    %v2904 = vpop.permute.xlu0 %2903
    %s2906 = scalar_lea.vmem %s11, 28
    %2907 = vst.msk [vmem:[%s2906] sm:$0xf] %vm587, %v2904
    %v2908 = vsel %vm93, %v2904, 0
    %2910 = vmatprep.subr.mxu0 0.0
    %2911 = vmatpush1.msra.mxu0 %v56
    %2912 = vmatprep.subr.mxu0 0.0
    %2913 = vmatpush1.msra.mxu0 %v57
    %2914 = vmatprep.subr.mxu0 0.0
    %2915 = vmatpush1.msra.mxu0 %v58
    %2916 = vmatprep.subr.mxu0 0.0
    %2917 = vmatpush1.msra.mxu0 %v59
    %2918 = vmatprep.subr.mxu0 0.0
    %2919 = vmatpush1.msra.mxu0 0.0
    %2920 = vmatprep.subr.mxu0 0.0
    %2921 = vmatpush1.msra.mxu0 0.0
    %2922 = vmatprep.subr.mxu0 0.0
    %2923 = vmatpush1.msra.mxu0 0.0
    %2924 = vmatprep.subr.mxu0 0.0
    %2925 = vmatpush1.msra.mxu0 0.0
    %2926 = vmatprep.subr.mxu0 0.0
    %2927 = vmatpush1.msra.mxu0 0.0
    %2928 = vmatprep.subr.mxu0 0.0
    %2929 = vmatpush1.msra.mxu0 0.0
    %2930 = vmatprep.subr.mxu0 0.0
    %2931 = vmatpush1.msra.mxu0 0.0
    %2932 = vmatprep.subr.mxu0 0.0
    %2933 = vmatpush1.msra.mxu0 0.0
    %2934 = vmatprep.subr.mxu0 0.0
    %2935 = vmatpush1.msra.mxu0 0.0
    %2936 = vmatprep.subr.mxu0 0.0
    %2937 = vmatpush1.msra.mxu0 0.0
    %2938 = vmatprep.subr.mxu0 0.0
    %2939 = vmatpush1.msra.mxu0 0.0
    %2940 = vmatprep.subr.mxu0 0.0
    %2941 = vmatpush1.msra.mxu0 0.0
    %2942 = vmatprep.subr.mxu0 0.0
    %2943 = vmatpush1.msra.mxu0 0.0
    %2944 = vmatprep.subr.mxu0 0.0
    %2945 = vmatpush1.msra.mxu0 0.0
    %2946 = vmatprep.subr.mxu0 0.0
    %2947 = vmatpush1.msra.mxu0 0.0
    %2948 = vmatprep.subr.mxu0 0.0
    %2949 = vmatpush1.msra.mxu0 0.0
    %2950 = vmatprep.subr.mxu0 0.0
    %2951 = vmatpush1.msra.mxu0 0.0
    %2952 = vmatprep.subr.mxu0 0.0
    %2953 = vmatpush1.msra.mxu0 0.0
    %2954 = vmatprep.subr.mxu0 0.0
    %2955 = vmatpush1.msra.mxu0 0.0
    %2956 = vmatprep.subr.mxu0 0.0
    %2957 = vmatpush1.msra.mxu0 0.0
    %2958 = vmatprep.subr.mxu0 0.0
    %2959 = vmatpush1.msra.mxu0 0.0
    %2960 = vmatprep.subr.mxu0 0.0
    %2961 = vmatpush1.msra.mxu0 0.0
    %2962 = vmatprep.subr.mxu0 0.0
    %2963 = vmatpush1.msra.mxu0 0.0
    %2964 = vmatprep.subr.mxu0 0.0
    %2965 = vmatpush1.msra.mxu0 0.0
    %2966 = vmatprep.subr.mxu0 0.0
    %2967 = vmatpush1.msra.mxu0 0.0
    %2968 = vmatprep.subr.mxu0 0.0
    %2969 = vmatpush1.msra.mxu0 0.0
    %2970 = vmatprep.subr.mxu0 0.0
    %2971 = vmatpush1.msra.mxu0 0.0
    %2972 = vmatprep.subr.mxu0 0.0
    %2973 = vmatpush1.msra.mxu0 0.0
    %2974 = vmatprep.mubr.f32.mxu0 0.0
    %2975 = vmatmul.mubr.f32.gmra.mrb[0].mxu0 %v2908
    %v2976 = vpop.f32.mrb[0].mxu0
    %v2977 = vadd.f32 %v72, %v2976
    %v2978 = vpop.f32.mrb[0].mxu0
    %2979 = vdwg.mxu0
    %s2980 = scalar_lea.vmem %s12, 28
    %2981 = vst [vmem:[%s2980] sm:$0xf] %v2977
    %2983 = vst.msk [vmem:[#allocation2] sm:$0xf] %vm587, %v2804
    %s2984 = scalar_lea.vmem [#allocation2], 4
    %2985 = vst.msk [vmem:[%s2984] sm:$0xf] %vm587, %v2904
    %2987 = vrot.lane.b32.xlu0 %v2480, 96
    %v2988 = vpop.permute.xlu0 %2987
    %2990 = vst.msk [vmem:[#allocation4] sm:$0xf] %vm587, %v2988
    %2992 = vrot.lane.b32.xlu0 %v2895, 96
    %v2993 = vpop.permute.xlu0 %2992
    %s2995 = scalar_lea.vmem [#allocation4], 4
    %2996 = vst.msk [vmem:[%s2995] sm:$0xf] %vm587, %v2993
    %v2997 = vld [vmem:[%s12] sm:$0xf]
    %v2998 = vld [vmem:[%s12 + $0x4] sm:$0xf]
    %v2999 = vld [vmem:[%s12 + $0x8] sm:$0xf]
    %v3000 = vld [vmem:[%s12 + $0xc] sm:$0xf]
    %v3001 = vld [vmem:[%s12 + $0x10] sm:$0xf]
    %v3002 = vld [vmem:[%s12 + $0x14] sm:$0xf]
    %v3003 = vld [vmem:[%s12 + $0x18] sm:$0xf]
    %v3004 = vld [vmem:[%s12 + $0x1c] sm:$0xf]
    %vm3005 = vcmask 1043456
    %v3006 = vsel %vm3005, %v2997, -inf
    %v3007 = vsel %vm3005, %v2998, -inf
    %v3008 = vsel %vm3005, %v2999, -inf
    %v3009 = vsel %vm3005, %v3000, -inf
    %v3010 = vsel %vm3005, %v3001, -inf
    %v3011 = vmax.f32 %v3006, %v3010
    %v3012 = vsel %vm3005, %v3002, -inf
    %v3013 = vmax.f32 %v3007, %v3012
    %v3014 = vsel %vm3005, %v3003, -inf
    %v3015 = vmax.f32 %v3008, %v3014
    %v3016 = vsel %vm3005, %v3004, -inf
    %v3017 = vmax.f32 %v3009, %v3016
    %v3018 = vmax.f32 %v3011, %v3013
    %v3019 = vmax.f32 %v3015, %v3017
    %v3020 = vmax.f32 %v3018, %v3019
    %v3021 = vsub.f32 %v2997, %v3020
    %v3022 = vsub.f32 %v2998, %v3020
    %v3023 = vsub.f32 %v2999, %v3020
    %v3024 = vsub.f32 %v3000, %v3020
    %v3025 = vsub.f32 %v3001, %v3020
    %v3026 = vsub.f32 %v3002, %v3020
    %v3027 = vsub.f32 %v3003, %v3020
    %v3028 = vsub.f32 %v3004, %v3020
    %v3029 = vmul.f32 %v3021, 1.442695
    %v3030 = vpow.pop %v3029
    %v3031 = vmul.f32 %v3022, 1.442695
    %v3032 = vpow.pop %v3031
    %v3033 = vmul.f32 %v3023, 1.442695
    %v3034 = vpow.pop %v3033
    %v3035 = vmul.f32 %v3024, 1.442695
    %v3036 = vpow.pop %v3035
    %v3037 = vmul.f32 %v3025, 1.442695
    %v3038 = vpow.pop %v3037
    %v3039 = vmul.f32 %v3026, 1.442695
    %v3040 = vpow.pop %v3039
    %v3041 = vmul.f32 %v3027, 1.442695
    %v3042 = vpow.pop %v3041
    %v3043 = vmul.f32 %v3028, 1.442695
    %v3044 = vpow.pop %v3043
    %v3045 = vsel %vm3005, %v3030, 0.0
    %v3046 = vsel %vm3005, %v3032, 0.0
    %v3047 = vadd.f32 %v3045, %v3046
    %v3048 = vsel %vm3005, %v3034, 0.0
    %v3049 = vadd.f32 %v3047, %v3048
    %v3050 = vsel %vm3005, %v3036, 0.0
    %v3051 = vadd.f32 %v3049, %v3050
    %v3052 = vsel %vm3005, %v3038, 0.0
    %v3053 = vadd.f32 %v3051, %v3052
    %v3054 = vsel %vm3005, %v3040, 0.0
    %v3055 = vadd.f32 %v3053, %v3054
    %v3056 = vsel %vm3005, %v3042, 0.0
    %v3057 = vadd.f32 %v3055, %v3056
    %v3058 = vsel %vm3005, %v3044, 0.0
    %v3059 = vadd.f32 %v3057, %v3058
    %v3060 = vlog2.pop %v3059
    %v3061 = vmul.f32 %v3060, 0.6931472
    %v3062 = vsub.f32 %v3021, %v3061
    %v3063 = vsub.f32 %v3022, %v3061
    %v3064 = vsub.f32 %v3023, %v3061
    %v3065 = vsub.f32 %v3024, %v3061
    %v3066 = vsub.f32 %v3025, %v3061
    %v3067 = vsub.f32 %v3026, %v3061
    %v3068 = vsub.f32 %v3027, %v3061
    %v3069 = vsub.f32 %v3028, %v3061
    %3070 = vst [vmem:[%s12] sm:$0xf] %v3062
    %3071 = vst [vmem:[%s12 + $0x4] sm:$0xf] %v3063
    %3072 = vst [vmem:[%s12 + $0x8] sm:$0xf] %v3064
    %3073 = vst [vmem:[%s12 + $0xc] sm:$0xf] %v3065
    %3074 = vst [vmem:[%s12 + $0x10] sm:$0xf] %v3066
    %3075 = vst [vmem:[%s12 + $0x14] sm:$0xf] %v3067
    %3076 = vst [vmem:[%s12 + $0x18] sm:$0xf] %v3068
    %3077 = vst [vmem:[%s12 + $0x1c] sm:$0xf] %v3069
    // Predicated region
    $region46: #{decoder_rnn_forward.1} parent=1 // pred_check
      _
    $region47: #{decoder_rnn_forward.1} parent=1 // pred_check_branch
      %3079 = sbr.rel (0) target = $region49
    $region48: #{decoder_rnn_forward.1} parent=1 // pred_region
      _
    $region49: #{decoder_rnn_forward.1} parent=1 // pred_fallthru
      _
    // Predicated region
    $region50: #{decoder_rnn_forward.1} parent=1 // pred_check
      _
    $region51: #{decoder_rnn_forward.1} parent=1 // pred_check_branch
      %3081 = sbr.rel (0) target = $region53
    $region52: #{decoder_rnn_forward.1} parent=1 // pred_region
      _
    $region53: #{decoder_rnn_forward.1} parent=1 // pred_fallthru
      _
    // Predicated region
    $region54: #{decoder_rnn_forward.1} parent=1 // pred_check
      _
    $region55: #{decoder_rnn_forward.1} parent=1 // pred_check_branch
      %3083 = sbr.rel (0) target = $region57
    $region56: #{decoder_rnn_forward.1} parent=1 // pred_region
      %s3085 = ssub.s32 128, 128
      %3086 = vsyncadd [#allocation3], %s3085
      %s3087 = sshll.u32 [#allocation2], 4
      %s3088 = int_to_ptr.vmem [resolvable:$true] %s3087
      %3093 = dma.vmem_to_hbm [thread:$0]  %s3088, 128, %s13, [#allocation3], 64, 64, 4
    $region57: #{decoder_rnn_forward.1} parent=1 // pred_fallthru
      _
    // Predicated region
    $region58: #{decoder_rnn_forward.1} parent=1 // pred_check
      _
    $region59: #{decoder_rnn_forward.1} parent=1 // pred_check_branch
      %3095 = sbr.rel (0) target = $region61
    $region60: #{decoder_rnn_forward.1} parent=1 // pred_region
      %s3097 = ssub.s32 128, 128
      %3098 = vsyncadd [#allocation5], %s3097
      %s3099 = sshll.u32 [#allocation4], 4
      %s3100 = int_to_ptr.vmem [resolvable:$true] %s3099
      %3105 = dma.vmem_to_hbm [thread:$0]  %s3100, 128, %s14, [#allocation5], 64, 64, 4
    $region61: #{decoder_rnn_forward.1} parent=1 // pred_fallthru
      _
    // Predicated region
    $region62: #{decoder_rnn_forward.1} parent=1 // pred_check
      _
    $region63: #{decoder_rnn_forward.1} parent=1 // pred_check_branch
      %3107 = sbr.rel (0) target = $region65
    $region64: #{decoder_rnn_forward.1} parent=1 // pred_region
      _
    $region65: #{decoder_rnn_forward.1} parent=1 // pred_fallthru
      _
    // Predicated region
    $region66: #{decoder_rnn_forward.1} parent=1 // pred_check
      _
    $region67: #{decoder_rnn_forward.1} parent=1 // pred_check_branch
      %3109 = sbr.rel (0) target = $region69
    $region68: #{decoder_rnn_forward.1} parent=1 // pred_region
      _
    $region69: #{decoder_rnn_forward.1} parent=1 // pred_fallthru
      _
    // Predicated region
    $region70: #{decoder_rnn_forward.1} parent=1 // pred_check
      _
    $region71: #{decoder_rnn_forward.1} parent=1 // pred_check_branch
      %3111 = sbr.rel (0) target = $region73
    $region72: #{decoder_rnn_forward.1} parent=1 // pred_region
      %3112 = dma.done [#allocation3], 128
    $region73: #{decoder_rnn_forward.1} parent=1 // pred_fallthru
      _
    // Predicated region
    $region74: #{decoder_rnn_forward.1} parent=1 // pred_check
      _
    $region75: #{decoder_rnn_forward.1} parent=1 // pred_check_branch
      %3114 = sbr.rel (0) target = $region77
    $region76: #{decoder_rnn_forward.1} parent=1 // pred_region
      %3115 = dma.done [#allocation5], 128
    $region77: #{decoder_rnn_forward.1} parent=1 // pred_fallthru
      _
    %3116 = vsyncpa [#allocation3], 1
    %3117 = vsyncpa [#allocation5], 1

</llo_original>
